<compile_context>
chip_gen: v5e
topology: v5e:2x2
jax: 0.10.0
libtpu: 0.0.40
codegen_flags: <defaults>
</compile_context>

<pallas_src>
import functools

import jax
import jax.numpy as jnp
from jax.experimental import pallas as pl
from jax.experimental.pallas import tpu as pltpu

HIDDEN = 32   # channels
K = 5         # conv kernel size
PAD = 2       # conv padding
LANE = 128    # TPU lane width


def _resblock_kernel(x_ref, w1_ref, b1_ref, w2_ref, b2_ref, o_ref, hpad_ref,
                     *, nb, l_pad, l_true):
    # x_ref, o_ref : (NB, C, L_pad)      NB batch rows per grid step
    # w*_ref       : (K, C, C)  bf16     w[k] = weights for tap k
    # b*_ref       : (C, 1)     f32
    # hpad_ref     : (C, NB*(L_pad+2*PAD)) bf16 scratch; NB per-row slots,
    #                each slot = [PAD halo | L_pad data | PAD halo]
    C = x_ref.shape[1]
    S = l_pad + 2 * PAD          # slot width
    W = nb * S                   # total scratch width
    WOUT = W - 2 * PAD           # conv output width over the whole buffer

    zpad = jnp.zeros((C, PAD), jnp.bfloat16)
    zhalo = jnp.zeros((C, 2 * PAD), jnp.bfloat16)

    # Zero only the halo columns once; data columns are fully overwritten below.
    hpad_ref[:, :PAD] = zpad
    hpad_ref[:, W - PAD:] = zpad
    for r in range(nb - 1):
        lo = r * S + PAD + l_pad       # right halo of slot r + left halo of r+1
        hpad_ref[:, lo:lo + 2 * PAD] = zhalo

    # Stage relu(x) rows into their slots (single (C, L_pad) bf16 cast per row).
    # nn.ReLU(True) mutates the input in place, so the residual also uses relu(x).
    for r in range(nb):
        lo = r * S + PAD
        hpad_ref[:, lo:lo + l_pad] = jnp.maximum(x_ref[r], 0.0).astype(jnp.bfloat16)

    def conv(w_ref, b_ref):
        # K accumulating contraction-C dots straight from lane-shifted slices
        # of hpad (no (K*C, W) im2col materialization / concat round trip).
        acc = jnp.dot(w_ref[0], hpad_ref[:, 0:WOUT],
                      preferred_element_type=jnp.float32)
        for k in range(1, K):
            acc = acc + jnp.dot(w_ref[k], hpad_ref[:, k:k + WOUT],
                                preferred_element_type=jnp.float32)
        return acc + b_ref[...]          # (C, 1) bias broadcast over lanes

    h = conv(w1_ref, b1_ref)             # (C, WOUT) f32

    # ReLU + restage the valid columns for conv2.  Halos (and the columns
    # beyond the true length within each slot) keep their zeros, so conv2 sees
    # the correct zero padding of a length-l_true signal.
    for r in range(nb):
        src = r * S
        dst = r * S + PAD
        hpad_ref[:, dst:dst + l_true] = jnp.maximum(
            h[:, src:src + l_true], 0.0).astype(jnp.bfloat16)

    h = conv(w2_ref, b2_ref)             # (C, WOUT) f32

    # Fused residual scale-add; f32 accumulation, lane-dense per-row stores.
    for r in range(nb):
        src = r * S
        res = jnp.maximum(x_ref[r], 0.0).astype(jnp.float32)
        o_ref[r] = (res + 0.3 * h[:, src:src + l_pad]).astype(o_ref.dtype)


def resblock_forward(x_ncl, w1, b1, w2, b2, *, rows_per_step=4):
    """x_ncl: (N, C, L) like PyTorch; w*: (C_out, C_in, K); b*: (C_out,).

    Output has the same dtype as x_ncl (pass bf16 activations to halve HBM
    traffic; the residual add is still accumulated in f32 inside the kernel).
    """
    N, C, L = x_ncl.shape

    l_pad = ((L + LANE - 1) // LANE) * LANE            # lane-dense L
    nb = max(1, min(rows_per_step, N, max(1, 4096 // l_pad)))
    n_pad = ((N + nb - 1) // nb) * nb

    xp = x_ncl
    if (n_pad, l_pad) != (N, L):
        xp = jnp.pad(x_ncl, ((0, n_pad - N), (0, 0), (0, l_pad - L)))

    def pack_w(w):   # (Co, Ci, K) -> (K, Co, Ci) bf16, w[k] = tap-k matrix
        return jnp.transpose(w, (2, 0, 1)).astype(jnp.bfloat16)

    w1p, w2p = pack_w(w1), pack_w(w2)
    b1r = b1.reshape(C, 1).astype(jnp.float32)
    b2r = b2.reshape(C, 1).astype(jnp.float32)

    S = l_pad + 2 * PAD
    kernel = functools.partial(_resblock_kernel, nb=nb, l_pad=l_pad, l_true=L)

    out = pl.pallas_call(
        kernel,
        out_shape=jax.ShapeDtypeStruct((n_pad, C, l_pad), x_ncl.dtype),
        grid_spec=pltpu.PrefetchScalarGridSpec(
            num_scalar_prefetch=0,
            grid=(n_pad // nb,),
            in_specs=[
                pl.BlockSpec((nb, C, l_pad), lambda i: (i, 0, 0)),   # x (NCL)
                pl.BlockSpec((K, C, C), lambda i: (0, 0, 0)),        # w1 packed
                pl.BlockSpec((C, 1), lambda i: (0, 0)),              # b1
                pl.BlockSpec((K, C, C), lambda i: (0, 0, 0)),        # w2 packed
                pl.BlockSpec((C, 1), lambda i: (0, 0)),              # b2
            ],
            out_specs=pl.BlockSpec((nb, C, l_pad), lambda i: (i, 0, 0)),
            scratch_shapes=[pltpu.VMEM((C, nb * S), jnp.bfloat16)],
        ),
        compiler_params=pltpu.CompilerParams(
            dimension_semantics=("parallel",)),
    )(xp, w1p, b1r, w2p, b2r)

    if (n_pad, l_pad) != (N, L):
        out = out[:N, :, :L]
    return out


def _ref_forward(x_ncl, w1, b1, w2, b2):
    """Pure-JAX f32 reference matching the PyTorch forward (incl. inplace ReLU)."""
    x_ncl = x_ncl.astype(jnp.float32)
    L = x_ncl.shape[2]

    def conv1d(h, w, b):  # h: (N,C,L), w: (Co,Ci,K), b: (Co,)
        hp = jnp.pad(h, ((0, 0), (0, 0), (PAD, PAD)))
        out = jnp.zeros_like(h)
        for k in range(K):
            out = out + jnp.einsum('ncl,oc->nol', hp[:, :, k:k + L], w[:, :, k])
        return out + b[None, :, None]

    r = jnp.maximum(x_ncl, 0.0)
    h = conv1d(r, w1, b1)
    h = conv1d(jnp.maximum(h, 0.0), w2, b2)
    return r + 0.3 * h


if __name__ == "__main__":
    key = jax.random.PRNGKey(0)
    kx, k1, k2, k3, k4, kx2 = jax.random.split(key, 6)
    C = HIDDEN

    # Deterministic synthetic parameters (shapes from nn.Conv1d(hidden, hidden, 5)).
    w1 = jax.random.normal(k1, (C, C, K), jnp.float32) * 0.1
    b1 = jax.random.normal(k2, (C,), jnp.float32) * 0.1
    w2 = jax.random.normal(k3, (C, C, K), jnp.float32) * 0.1
    b2 = jax.random.normal(k4, (C,), jnp.float32) * 0.1

    # Test 1: lane-dense shape (L multiple of 128), f32 in / f32 out.
    N, L = 4, 256
    x = jax.random.normal(kx, (N, C, L), jnp.float32)
    out = jax.block_until_ready(resblock_forward(x, w1, b1, w2, b2))
    ref = _ref_forward(x, w1, b1, w2, b2)
    assert out.shape == (N, C, L) and out.dtype == jnp.float32
    # bf16 MXU inputs (f32 accumulate) => slightly relaxed tolerance vs f32 ref.
    assert jnp.allclose(out, ref, atol=3e-2, rtol=3e-2), float(
        jnp.max(jnp.abs(out - ref)))

    # Test 2: unaligned L and N (exercises wrapper pad/slice), bf16 in / bf16 out.
    N2, L2 = 3, 100
    x2 = (jax.random.normal(kx2, (N2, C, L2), jnp.float32)).astype(jnp.bfloat16)
    out2 = jax.block_until_ready(resblock_forward(x2, w1, b1, w2, b2))
    ref2 = _ref_forward(x2, w1, b1, w2, b2)
    assert out2.shape == (N2, C, L2) and out2.dtype == jnp.bfloat16
    assert jnp.allclose(out2.astype(jnp.float32), ref2, atol=1e-1, rtol=1e-1), float(
        jnp.max(jnp.abs(out2.astype(jnp.float32) - ref2)))

    print("KERNEL_OK")
</pallas_src>

<mosaic_0001>
module attributes {stable_mosaic.version = 11 : i64} {
  func.func @_resblock_kernel(%arg0: i32, %arg1: memref<4x32x256xf32, #tpu.memory_space<vmem>>, %arg2: memref<5x32x32xbf16, #tpu.memory_space<vmem>>, %arg3: memref<32x1xf32, #tpu.memory_space<vmem>>, %arg4: memref<5x32x32xbf16, #tpu.memory_space<vmem>>, %arg5: memref<32x1xf32, #tpu.memory_space<vmem>>, %arg6: memref<4x32x256xf32, #tpu.memory_space<vmem>>, %arg7: memref<32x1040xbf16, #tpu.memory_space<vmem>>) attributes {dimension_semantics = [#tpu.dimension_semantics<parallel>], iteration_bounds = array<i64: 1>, scalar_prefetch = 0 : i64, scratch_operands = 1 : i64, tpu.core_type = #tpu.core_type<tc>, window_params = [{transform_indices = @transform_0, window_bounds = array<i64: 4, 32, 256>}, {pipeline_mode = #tpu.pipeline_mode<synchronous>, transform_indices = @transform_1, window_bounds = array<i64: 5, 32, 32>}, {pipeline_mode = #tpu.pipeline_mode<synchronous>, transform_indices = @transform_2, window_bounds = array<i64: 32, 1>}, {pipeline_mode = #tpu.pipeline_mode<synchronous>, transform_indices = @transform_3, window_bounds = array<i64: 5, 32, 32>}, {pipeline_mode = #tpu.pipeline_mode<synchronous>, transform_indices = @transform_4, window_bounds = array<i64: 32, 1>}, {transform_indices = @transform_5, window_bounds = array<i64: 4, 32, 256>}]} {
    %cst = arith.constant 0.000000e+00 : bf16
    %0 = vector.broadcast %cst : bf16 to vector<32x2xbf16>
    %cst_0 = arith.constant 0.000000e+00 : bf16
    %1 = vector.broadcast %cst_0 : bf16 to vector<32x4xbf16>
    %c0 = arith.constant 0 : index
    %c0_1 = arith.constant 0 : index
    %2 = vector.load %arg7[%c0, %c0_1] : memref<32x1040xbf16, #tpu.memory_space<vmem>>, vector<32x2xbf16>
    tpu.vector_store %arg7[%c0, %c0_1], %0 {strides = array<i32>} : memref<32x1040xbf16, #tpu.memory_space<vmem>>, vector<32x2xbf16>,
    %c0_2 = arith.constant 0 : index
    %c1038 = arith.constant 1038 : index
    %3 = vector.load %arg7[%c0_2, %c1038] : memref<32x1040xbf16, #tpu.memory_space<vmem>>, vector<32x2xbf16>
    tpu.vector_store %arg7[%c0_2, %c1038], %0 {strides = array<i32>} : memref<32x1040xbf16, #tpu.memory_space<vmem>>, vector<32x2xbf16>,
    %c0_3 = arith.constant 0 : index
    %c258 = arith.constant 258 : index
    %4 = vector.load %arg7[%c0_3, %c258] : memref<32x1040xbf16, #tpu.memory_space<vmem>>, vector<32x4xbf16>
    tpu.vector_store %arg7[%c0_3, %c258], %1 {strides = array<i32>} : memref<32x1040xbf16, #tpu.memory_space<vmem>>, vector<32x4xbf16>,
    %c0_4 = arith.constant 0 : index
    %c518 = arith.constant 518 : index
    %5 = vector.load %arg7[%c0_4, %c518] : memref<32x1040xbf16, #tpu.memory_space<vmem>>, vector<32x4xbf16>
    tpu.vector_store %arg7[%c0_4, %c518], %1 {strides = array<i32>} : memref<32x1040xbf16, #tpu.memory_space<vmem>>, vector<32x4xbf16>,
    %c0_5 = arith.constant 0 : index
    %c778 = arith.constant 778 : index
    %6 = vector.load %arg7[%c0_5, %c778] : memref<32x1040xbf16, #tpu.memory_space<vmem>>, vector<32x4xbf16>
    tpu.vector_store %arg7[%c0_5, %c778], %1 {strides = array<i32>} : memref<32x1040xbf16, #tpu.memory_space<vmem>>, vector<32x4xbf16>,
    %c0_6 = arith.constant 0 : index
    %c0_7 = arith.constant 0 : index
    %c0_8 = arith.constant 0 : index
    %7 = vector.load %arg1[%c0_6, %c0_7, %c0_8] : memref<4x32x256xf32, #tpu.memory_space<vmem>>, vector<1x32x256xf32>
    %8 = vector.shape_cast %7 : vector<1x32x256xf32> to vector<32x256xf32>
    %cst_9 = arith.constant 0.000000e+00 : f32
    %9 = vector.broadcast %cst_9 : f32 to vector<32x256xf32>
    %10 = arith.maximumf %8, %9 : vector<32x256xf32>
    %11 = arith.truncf %10 : vector<32x256xf32> to vector<32x256xbf16>
    %c0_10 = arith.constant 0 : index
    %c2 = arith.constant 2 : index
    %12 = vector.load %arg7[%c0_10, %c2] : memref<32x1040xbf16, #tpu.memory_space<vmem>>, vector<32x256xbf16>
    tpu.vector_store %arg7[%c0_10, %c2], %11 {strides = array<i32>} : memref<32x1040xbf16, #tpu.memory_space<vmem>>, vector<32x256xbf16>,
    %c1 = arith.constant 1 : index
    %c0_11 = arith.constant 0 : index
    %c0_12 = arith.constant 0 : index
    %13 = vector.load %arg1[%c1, %c0_11, %c0_12] : memref<4x32x256xf32, #tpu.memory_space<vmem>>, vector<1x32x256xf32>
    %14 = vector.shape_cast %13 : vector<1x32x256xf32> to vector<32x256xf32>
    %cst_13 = arith.constant 0.000000e+00 : f32
    %15 = vector.broadcast %cst_13 : f32 to vector<32x256xf32>
    %16 = arith.maximumf %14, %15 : vector<32x256xf32>
    %17 = arith.truncf %16 : vector<32x256xf32> to vector<32x256xbf16>
    %c0_14 = arith.constant 0 : index
    %c262 = arith.constant 262 : index
    %18 = vector.load %arg7[%c0_14, %c262] : memref<32x1040xbf16, #tpu.memory_space<vmem>>, vector<32x256xbf16>
    tpu.vector_store %arg7[%c0_14, %c262], %17 {strides = array<i32>} : memref<32x1040xbf16, #tpu.memory_space<vmem>>, vector<32x256xbf16>,
    %c2_15 = arith.constant 2 : index
    %c0_16 = arith.constant 0 : index
    %c0_17 = arith.constant 0 : index
    %19 = vector.load %arg1[%c2_15, %c0_16, %c0_17] : memref<4x32x256xf32, #tpu.memory_space<vmem>>, vector<1x32x256xf32>
    %20 = vector.shape_cast %19 : vector<1x32x256xf32> to vector<32x256xf32>
    %cst_18 = arith.constant 0.000000e+00 : f32
    %21 = vector.broadcast %cst_18 : f32 to vector<32x256xf32>
    %22 = arith.maximumf %20, %21 : vector<32x256xf32>
    %23 = arith.truncf %22 : vector<32x256xf32> to vector<32x256xbf16>
    %c0_19 = arith.constant 0 : index
    %c522 = arith.constant 522 : index
    %24 = vector.load %arg7[%c0_19, %c522] : memref<32x1040xbf16, #tpu.memory_space<vmem>>, vector<32x256xbf16>
    tpu.vector_store %arg7[%c0_19, %c522], %23 {strides = array<i32>} : memref<32x1040xbf16, #tpu.memory_space<vmem>>, vector<32x256xbf16>,
    %c3 = arith.constant 3 : index
    %c0_20 = arith.constant 0 : index
    %c0_21 = arith.constant 0 : index
    %25 = vector.load %arg1[%c3, %c0_20, %c0_21] : memref<4x32x256xf32, #tpu.memory_space<vmem>>, vector<1x32x256xf32>
    %26 = vector.shape_cast %25 : vector<1x32x256xf32> to vector<32x256xf32>
    %cst_22 = arith.constant 0.000000e+00 : f32
    %27 = vector.broadcast %cst_22 : f32 to vector<32x256xf32>
    %28 = arith.maximumf %26, %27 : vector<32x256xf32>
    %29 = arith.truncf %28 : vector<32x256xf32> to vector<32x256xbf16>
    %c0_23 = arith.constant 0 : index
    %c782 = arith.constant 782 : index
    %30 = vector.load %arg7[%c0_23, %c782] : memref<32x1040xbf16, #tpu.memory_space<vmem>>, vector<32x256xbf16>
    tpu.vector_store %arg7[%c0_23, %c782], %29 {strides = array<i32>} : memref<32x1040xbf16, #tpu.memory_space<vmem>>, vector<32x256xbf16>,
    %c0_24 = arith.constant 0 : index
    %c0_25 = arith.constant 0 : index
    %c0_26 = arith.constant 0 : index
    %31 = vector.load %arg2[%c0_24, %c0_25, %c0_26] : memref<5x32x32xbf16, #tpu.memory_space<vmem>>, vector<1x32x32xbf16>
    %32 = vector.shape_cast %31 : vector<1x32x32xbf16> to vector<32x32xbf16>
    %c0_27 = arith.constant 0 : index
    %c0_28 = arith.constant 0 : index
    %33 = vector.load %arg7[%c0_27, %c0_28] : memref<32x1040xbf16, #tpu.memory_space<vmem>>, vector<32x1036xbf16>
    %cst_29 = arith.constant dense<0.000000e+00> : vector<32x1036xf32>
    %34 = tpu.matmul %32, %33, %cst_29 {dimension_numbers = #tpu.dot_dimension_numbers<[1], [0], [0], [1], [0, 0, 1, 1], [], []>} : vector<32x32xbf16>, vector<32x1036xbf16>, vector<32x1036xf32> -> vector<32x1036xf32>
    %c1_30 = arith.constant 1 : index
    %c0_31 = arith.constant 0 : index
    %c0_32 = arith.constant 0 : index
    %35 = vector.load %arg2[%c1_30, %c0_31, %c0_32] : memref<5x32x32xbf16, #tpu.memory_space<vmem>>, vector<1x32x32xbf16>
    %36 = vector.shape_cast %35 : vector<1x32x32xbf16> to vector<32x32xbf16>
    %c0_33 = arith.constant 0 : index
    %c1_34 = arith.constant 1 : index
    %37 = vector.load %arg7[%c0_33, %c1_34] : memref<32x1040xbf16, #tpu.memory_space<vmem>>, vector<32x1036xbf16>
    %cst_35 = arith.constant dense<0.000000e+00> : vector<32x1036xf32>
    %38 = tpu.matmul %36, %37, %cst_35 {dimension_numbers = #tpu.dot_dimension_numbers<[1], [0], [0], [1], [0, 0, 1, 1], [], []>} : vector<32x32xbf16>, vector<32x1036xbf16>, vector<32x1036xf32> -> vector<32x1036xf32>
    %39 = arith.addf %34, %38 : vector<32x1036xf32>
    %c2_36 = arith.constant 2 : index
    %c0_37 = arith.constant 0 : index
    %c0_38 = arith.constant 0 : index
    %40 = vector.load %arg2[%c2_36, %c0_37, %c0_38] : memref<5x32x32xbf16, #tpu.memory_space<vmem>>, vector<1x32x32xbf16>
    %41 = vector.shape_cast %40 : vector<1x32x32xbf16> to vector<32x32xbf16>
    %c0_39 = arith.constant 0 : index
    %c2_40 = arith.constant 2 : index
    %42 = vector.load %arg7[%c0_39, %c2_40] : memref<32x1040xbf16, #tpu.memory_space<vmem>>, vector<32x1036xbf16>
    %cst_41 = arith.constant dense<0.000000e+00> : vector<32x1036xf32>
    %43 = tpu.matmul %41, %42, %cst_41 {dimension_numbers = #tpu.dot_dimension_numbers<[1], [0], [0], [1], [0, 0, 1, 1], [], []>} : vector<32x32xbf16>, vector<32x1036xbf16>, vector<32x1036xf32> -> vector<32x1036xf32>
    %44 = arith.addf %39, %43 : vector<32x1036xf32>
    %c3_42 = arith.constant 3 : index
    %c0_43 = arith.constant 0 : index
    %c0_44 = arith.constant 0 : index
    %45 = vector.load %arg2[%c3_42, %c0_43, %c0_44] : memref<5x32x32xbf16, #tpu.memory_space<vmem>>, vector<1x32x32xbf16>
    %46 = vector.shape_cast %45 : vector<1x32x32xbf16> to vector<32x32xbf16>
    %c0_45 = arith.constant 0 : index
    %c3_46 = arith.constant 3 : index
    %47 = vector.load %arg7[%c0_45, %c3_46] : memref<32x1040xbf16, #tpu.memory_space<vmem>>, vector<32x1036xbf16>
    %cst_47 = arith.constant dense<0.000000e+00> : vector<32x1036xf32>
    %48 = tpu.matmul %46, %47, %cst_47 {dimension_numbers = #tpu.dot_dimension_numbers<[1], [0], [0], [1], [0, 0, 1, 1], [], []>} : vector<32x32xbf16>, vector<32x1036xbf16>, vector<32x1036xf32> -> vector<32x1036xf32>
    %49 = arith.addf %44, %48 : vector<32x1036xf32>
    %c4 = arith.constant 4 : index
    %c0_48 = arith.constant 0 : index
    %c0_49 = arith.constant 0 : index
    %50 = vector.load %arg2[%c4, %c0_48, %c0_49] : memref<5x32x32xbf16, #tpu.memory_space<vmem>>, vector<1x32x32xbf16>
    %51 = vector.shape_cast %50 : vector<1x32x32xbf16> to vector<32x32xbf16>
    %c0_50 = arith.constant 0 : index
    %c4_51 = arith.constant 4 : index
    %52 = vector.load %arg7[%c0_50, %c4_51] : memref<32x1040xbf16, #tpu.memory_space<vmem>>, vector<32x1036xbf16>
    %cst_52 = arith.constant dense<0.000000e+00> : vector<32x1036xf32>
    %53 = tpu.matmul %51, %52, %cst_52 {dimension_numbers = #tpu.dot_dimension_numbers<[1], [0], [0], [1], [0, 0, 1, 1], [], []>} : vector<32x32xbf16>, vector<32x1036xbf16>, vector<32x1036xf32> -> vector<32x1036xf32>
    %54 = arith.addf %49, %53 : vector<32x1036xf32>
    %c0_53 = arith.constant 0 : index
    %c0_54 = arith.constant 0 : index
    %55 = vector.load %arg3[%c0_53, %c0_54] : memref<32x1xf32, #tpu.memory_space<vmem>>, vector<32x1xf32>
    %56 = vector.broadcast %55 : vector<32x1xf32> to vector<32x1036xf32>
    %57 = arith.addf %54, %56 : vector<32x1036xf32>
    %58 = vector.extract_strided_slice %57 {offsets = [0, 0], sizes = [32, 256], strides = [1, 1]} : vector<32x1036xf32> to vector<32x256xf32>
    %cst_55 = arith.constant 0.000000e+00 : f32
    %59 = vector.broadcast %cst_55 : f32 to vector<32x256xf32>
    %60 = arith.maximumf %58, %59 : vector<32x256xf32>
    %61 = arith.truncf %60 : vector<32x256xf32> to vector<32x256xbf16>
    %c0_56 = arith.constant 0 : index
    %c2_57 = arith.constant 2 : index
    %62 = vector.load %arg7[%c0_56, %c2_57] : memref<32x1040xbf16, #tpu.memory_space<vmem>>, vector<32x256xbf16>
    tpu.vector_store %arg7[%c0_56, %c2_57], %61 {strides = array<i32>} : memref<32x1040xbf16, #tpu.memory_space<vmem>>, vector<32x256xbf16>,
    %63 = vector.extract_strided_slice %57 {offsets = [0, 260], sizes = [32, 256], strides = [1, 1]} : vector<32x1036xf32> to vector<32x256xf32>
    %cst_58 = arith.constant 0.000000e+00 : f32
    %64 = vector.broadcast %cst_58 : f32 to vector<32x256xf32>
    %65 = arith.maximumf %63, %64 : vector<32x256xf32>
    %66 = arith.truncf %65 : vector<32x256xf32> to vector<32x256xbf16>
    %c0_59 = arith.constant 0 : index
    %c262_60 = arith.constant 262 : index
    %67 = vector.load %arg7[%c0_59, %c262_60] : memref<32x1040xbf16, #tpu.memory_space<vmem>>, vector<32x256xbf16>
    tpu.vector_store %arg7[%c0_59, %c262_60], %66 {strides = array<i32>} : memref<32x1040xbf16, #tpu.memory_space<vmem>>, vector<32x256xbf16>,
    %68 = vector.extract_strided_slice %57 {offsets = [0, 520], sizes = [32, 256], strides = [1, 1]} : vector<32x1036xf32> to vector<32x256xf32>
    %cst_61 = arith.constant 0.000000e+00 : f32
    %69 = vector.broadcast %cst_61 : f32 to vector<32x256xf32>
    %70 = arith.maximumf %68, %69 : vector<32x256xf32>
    %71 = arith.truncf %70 : vector<32x256xf32> to vector<32x256xbf16>
    %c0_62 = arith.constant 0 : index
    %c522_63 = arith.constant 522 : index
    %72 = vector.load %arg7[%c0_62, %c522_63] : memref<32x1040xbf16, #tpu.memory_space<vmem>>, vector<32x256xbf16>
    tpu.vector_store %arg7[%c0_62, %c522_63], %71 {strides = array<i32>} : memref<32x1040xbf16, #tpu.memory_space<vmem>>, vector<32x256xbf16>,
    %73 = vector.extract_strided_slice %57 {offsets = [0, 780], sizes = [32, 256], strides = [1, 1]} : vector<32x1036xf32> to vector<32x256xf32>
    %cst_64 = arith.constant 0.000000e+00 : f32
    %74 = vector.broadcast %cst_64 : f32 to vector<32x256xf32>
    %75 = arith.maximumf %73, %74 : vector<32x256xf32>
    %76 = arith.truncf %75 : vector<32x256xf32> to vector<32x256xbf16>
    %c0_65 = arith.constant 0 : index
    %c782_66 = arith.constant 782 : index
    %77 = vector.load %arg7[%c0_65, %c782_66] : memref<32x1040xbf16, #tpu.memory_space<vmem>>, vector<32x256xbf16>
    tpu.vector_store %arg7[%c0_65, %c782_66], %76 {strides = array<i32>} : memref<32x1040xbf16, #tpu.memory_space<vmem>>, vector<32x256xbf16>,
    %c0_67 = arith.constant 0 : index
    %c0_68 = arith.constant 0 : index
    %c0_69 = arith.constant 0 : index
    %78 = vector.load %arg4[%c0_67, %c0_68, %c0_69] : memref<5x32x32xbf16, #tpu.memory_space<vmem>>, vector<1x32x32xbf16>
    %79 = vector.shape_cast %78 : vector<1x32x32xbf16> to vector<32x32xbf16>
    %c0_70 = arith.constant 0 : index
    %c0_71 = arith.constant 0 : index
    %80 = vector.load %arg7[%c0_70, %c0_71] : memref<32x1040xbf16, #tpu.memory_space<vmem>>, vector<32x1036xbf16>
    %cst_72 = arith.constant dense<0.000000e+00> : vector<32x1036xf32>
    %81 = tpu.matmul %79, %80, %cst_72 {dimension_numbers = #tpu.dot_dimension_numbers<[1], [0], [0], [1], [0, 0, 1, 1], [], []>} : vector<32x32xbf16>, vector<32x1036xbf16>, vector<32x1036xf32> -> vector<32x1036xf32>
    %c1_73 = arith.constant 1 : index
    %c0_74 = arith.constant 0 : index
    %c0_75 = arith.constant 0 : index
    %82 = vector.load %arg4[%c1_73, %c0_74, %c0_75] : memref<5x32x32xbf16, #tpu.memory_space<vmem>>, vector<1x32x32xbf16>
    %83 = vector.shape_cast %82 : vector<1x32x32xbf16> to vector<32x32xbf16>
    %c0_76 = arith.constant 0 : index
    %c1_77 = arith.constant 1 : index
    %84 = vector.load %arg7[%c0_76, %c1_77] : memref<32x1040xbf16, #tpu.memory_space<vmem>>, vector<32x1036xbf16>
    %cst_78 = arith.constant dense<0.000000e+00> : vector<32x1036xf32>
    %85 = tpu.matmul %83, %84, %cst_78 {dimension_numbers = #tpu.dot_dimension_numbers<[1], [0], [0], [1], [0, 0, 1, 1], [], []>} : vector<32x32xbf16>, vector<32x1036xbf16>, vector<32x1036xf32> -> vector<32x1036xf32>
    %86 = arith.addf %81, %85 : vector<32x1036xf32>
    %c2_79 = arith.constant 2 : index
    %c0_80 = arith.constant 0 : index
    %c0_81 = arith.constant 0 : index
    %87 = vector.load %arg4[%c2_79, %c0_80, %c0_81] : memref<5x32x32xbf16, #tpu.memory_space<vmem>>, vector<1x32x32xbf16>
    %88 = vector.shape_cast %87 : vector<1x32x32xbf16> to vector<32x32xbf16>
    %c0_82 = arith.constant 0 : index
    %c2_83 = arith.constant 2 : index
    %89 = vector.load %arg7[%c0_82, %c2_83] : memref<32x1040xbf16, #tpu.memory_space<vmem>>, vector<32x1036xbf16>
    %cst_84 = arith.constant dense<0.000000e+00> : vector<32x1036xf32>
    %90 = tpu.matmul %88, %89, %cst_84 {dimension_numbers = #tpu.dot_dimension_numbers<[1], [0], [0], [1], [0, 0, 1, 1], [], []>} : vector<32x32xbf16>, vector<32x1036xbf16>, vector<32x1036xf32> -> vector<32x1036xf32>
    %91 = arith.addf %86, %90 : vector<32x1036xf32>
    %c3_85 = arith.constant 3 : index
    %c0_86 = arith.constant 0 : index
    %c0_87 = arith.constant 0 : index
    %92 = vector.load %arg4[%c3_85, %c0_86, %c0_87] : memref<5x32x32xbf16, #tpu.memory_space<vmem>>, vector<1x32x32xbf16>
    %93 = vector.shape_cast %92 : vector<1x32x32xbf16> to vector<32x32xbf16>
    %c0_88 = arith.constant 0 : index
    %c3_89 = arith.constant 3 : index
    %94 = vector.load %arg7[%c0_88, %c3_89] : memref<32x1040xbf16, #tpu.memory_space<vmem>>, vector<32x1036xbf16>
    %cst_90 = arith.constant dense<0.000000e+00> : vector<32x1036xf32>
    %95 = tpu.matmul %93, %94, %cst_90 {dimension_numbers = #tpu.dot_dimension_numbers<[1], [0], [0], [1], [0, 0, 1, 1], [], []>} : vector<32x32xbf16>, vector<32x1036xbf16>, vector<32x1036xf32> -> vector<32x1036xf32>
    %96 = arith.addf %91, %95 : vector<32x1036xf32>
    %c4_91 = arith.constant 4 : index
    %c0_92 = arith.constant 0 : index
    %c0_93 = arith.constant 0 : index
    %97 = vector.load %arg4[%c4_91, %c0_92, %c0_93] : memref<5x32x32xbf16, #tpu.memory_space<vmem>>, vector<1x32x32xbf16>
    %98 = vector.shape_cast %97 : vector<1x32x32xbf16> to vector<32x32xbf16>
    %c0_94 = arith.constant 0 : index
    %c4_95 = arith.constant 4 : index
    %99 = vector.load %arg7[%c0_94, %c4_95] : memref<32x1040xbf16, #tpu.memory_space<vmem>>, vector<32x1036xbf16>
    %cst_96 = arith.constant dense<0.000000e+00> : vector<32x1036xf32>
    %100 = tpu.matmul %98, %99, %cst_96 {dimension_numbers = #tpu.dot_dimension_numbers<[1], [0], [0], [1], [0, 0, 1, 1], [], []>} : vector<32x32xbf16>, vector<32x1036xbf16>, vector<32x1036xf32> -> vector<32x1036xf32>
    %101 = arith.addf %96, %100 : vector<32x1036xf32>
    %c0_97 = arith.constant 0 : index
    %c0_98 = arith.constant 0 : index
    %102 = vector.load %arg5[%c0_97, %c0_98] : memref<32x1xf32, #tpu.memory_space<vmem>>, vector<32x1xf32>
    %103 = vector.broadcast %102 : vector<32x1xf32> to vector<32x1036xf32>
    %104 = arith.addf %101, %103 : vector<32x1036xf32>
    %c0_99 = arith.constant 0 : index
    %c0_100 = arith.constant 0 : index
    %c0_101 = arith.constant 0 : index
    %105 = vector.load %arg1[%c0_99, %c0_100, %c0_101] : memref<4x32x256xf32, #tpu.memory_space<vmem>>, vector<1x32x256xf32>
    %106 = vector.shape_cast %105 : vector<1x32x256xf32> to vector<32x256xf32>
    %cst_102 = arith.constant 0.000000e+00 : f32
    %107 = vector.broadcast %cst_102 : f32 to vector<32x256xf32>
    %108 = arith.maximumf %106, %107 : vector<32x256xf32>
    %109 = vector.extract_strided_slice %104 {offsets = [0, 0], sizes = [32, 256], strides = [1, 1]} : vector<32x1036xf32> to vector<32x256xf32>
    %cst_103 = arith.constant 3.000000e-01 : f32
    %110 = vector.broadcast %cst_103 : f32 to vector<32x256xf32>
    %111 = arith.mulf %110, %109 : vector<32x256xf32>
    %112 = arith.addf %108, %111 : vector<32x256xf32>
    %c0_104 = arith.constant 0 : index
    %c0_105 = arith.constant 0 : index
    %c0_106 = arith.constant 0 : index
    %113 = vector.load %arg6[%c0_104, %c0_105, %c0_106] : memref<4x32x256xf32, #tpu.memory_space<vmem>>, vector<1x32x256xf32>
    %114 = vector.shape_cast %113 : vector<1x32x256xf32> to vector<32x256xf32>
    %115 = vector.shape_cast %112 : vector<32x256xf32> to vector<1x32x256xf32>
    tpu.vector_store %arg6[%c0_104, %c0_105, %c0_106], %115 {strides = array<i32>} : memref<4x32x256xf32, #tpu.memory_space<vmem>>, vector<1x32x256xf32>,
    %c1_107 = arith.constant 1 : index
    %c0_108 = arith.constant 0 : index
    %c0_109 = arith.constant 0 : index
    %116 = vector.load %arg1[%c1_107, %c0_108, %c0_109] : memref<4x32x256xf32, #tpu.memory_space<vmem>>, vector<1x32x256xf32>
    %117 = vector.shape_cast %116 : vector<1x32x256xf32> to vector<32x256xf32>
    %cst_110 = arith.constant 0.000000e+00 : f32
    %118 = vector.broadcast %cst_110 : f32 to vector<32x256xf32>
    %119 = arith.maximumf %117, %118 : vector<32x256xf32>
    %120 = vector.extract_strided_slice %104 {offsets = [0, 260], sizes = [32, 256], strides = [1, 1]} : vector<32x1036xf32> to vector<32x256xf32>
    %cst_111 = arith.constant 3.000000e-01 : f32
    %121 = vector.broadcast %cst_111 : f32 to vector<32x256xf32>
    %122 = arith.mulf %121, %120 : vector<32x256xf32>
    %123 = arith.addf %119, %122 : vector<32x256xf32>
    %c1_112 = arith.constant 1 : index
    %c0_113 = arith.constant 0 : index
    %c0_114 = arith.constant 0 : index
    %124 = vector.load %arg6[%c1_112, %c0_113, %c0_114] : memref<4x32x256xf32, #tpu.memory_space<vmem>>, vector<1x32x256xf32>
    %125 = vector.shape_cast %124 : vector<1x32x256xf32> to vector<32x256xf32>
    %126 = vector.shape_cast %123 : vector<32x256xf32> to vector<1x32x256xf32>
    tpu.vector_store %arg6[%c1_112, %c0_113, %c0_114], %126 {strides = array<i32>} : memref<4x32x256xf32, #tpu.memory_space<vmem>>, vector<1x32x256xf32>,
    %c2_115 = arith.constant 2 : index
    %c0_116 = arith.constant 0 : index
    %c0_117 = arith.constant 0 : index
    %127 = vector.load %arg1[%c2_115, %c0_116, %c0_117] : memref<4x32x256xf32, #tpu.memory_space<vmem>>, vector<1x32x256xf32>
    %128 = vector.shape_cast %127 : vector<1x32x256xf32> to vector<32x256xf32>
    %cst_118 = arith.constant 0.000000e+00 : f32
    %129 = vector.broadcast %cst_118 : f32 to vector<32x256xf32>
    %130 = arith.maximumf %128, %129 : vector<32x256xf32>
    %131 = vector.extract_strided_slice %104 {offsets = [0, 520], sizes = [32, 256], strides = [1, 1]} : vector<32x1036xf32> to vector<32x256xf32>
    %cst_119 = arith.constant 3.000000e-01 : f32
    %132 = vector.broadcast %cst_119 : f32 to vector<32x256xf32>
    %133 = arith.mulf %132, %131 : vector<32x256xf32>
    %134 = arith.addf %130, %133 : vector<32x256xf32>
    %c2_120 = arith.constant 2 : index
    %c0_121 = arith.constant 0 : index
    %c0_122 = arith.constant 0 : index
    %135 = vector.load %arg6[%c2_120, %c0_121, %c0_122] : memref<4x32x256xf32, #tpu.memory_space<vmem>>, vector<1x32x256xf32>
    %136 = vector.shape_cast %135 : vector<1x32x256xf32> to vector<32x256xf32>
    %137 = vector.shape_cast %134 : vector<32x256xf32> to vector<1x32x256xf32>
    tpu.vector_store %arg6[%c2_120, %c0_121, %c0_122], %137 {strides = array<i32>} : memref<4x32x256xf32, #tpu.memory_space<vmem>>, vector<1x32x256xf32>,
    %c3_123 = arith.constant 3 : index
    %c0_124 = arith.constant 0 : index
    %c0_125 = arith.constant 0 : index
    %138 = vector.load %arg1[%c3_123, %c0_124, %c0_125] : memref<4x32x256xf32, #tpu.memory_space<vmem>>, vector<1x32x256xf32>
    %139 = vector.shape_cast %138 : vector<1x32x256xf32> to vector<32x256xf32>
    %cst_126 = arith.constant 0.000000e+00 : f32
    %140 = vector.broadcast %cst_126 : f32 to vector<32x256xf32>
    %141 = arith.maximumf %139, %140 : vector<32x256xf32>
    %142 = vector.extract_strided_slice %104 {offsets = [0, 780], sizes = [32, 256], strides = [1, 1]} : vector<32x1036xf32> to vector<32x256xf32>
    %cst_127 = arith.constant 3.000000e-01 : f32
    %143 = vector.broadcast %cst_127 : f32 to vector<32x256xf32>
    %144 = arith.mulf %143, %142 : vector<32x256xf32>
    %145 = arith.addf %141, %144 : vector<32x256xf32>
    %c3_128 = arith.constant 3 : index
    %c0_129 = arith.constant 0 : index
    %c0_130 = arith.constant 0 : index
    %146 = vector.load %arg6[%c3_128, %c0_129, %c0_130] : memref<4x32x256xf32, #tpu.memory_space<vmem>>, vector<1x32x256xf32>
    %147 = vector.shape_cast %146 : vector<1x32x256xf32> to vector<32x256xf32>
    %148 = vector.shape_cast %145 : vector<32x256xf32> to vector<1x32x256xf32>
    tpu.vector_store %arg6[%c3_128, %c0_129, %c0_130], %148 {strides = array<i32>} : memref<4x32x256xf32, #tpu.memory_space<vmem>>, vector<1x32x256xf32>,
    return
  }
  func.func @transform_0(%arg0: i32) -> (i32, i32, i32) {
    %c0_i32 = arith.constant 0 : i32
    %c0_i32_0 = arith.constant 0 : i32
    %c0_i32_1 = arith.constant 0 : i32
    return %arg0, %c0_i32, %c0_i32_0 : i32, i32, i32
  }
  func.func @transform_1(%arg0: i32) -> (i32, i32, i32) {
    %c0_i32 = arith.constant 0 : i32
    %c0_i32_0 = arith.constant 0 : i32
    %c0_i32_1 = arith.constant 0 : i32
    %c0_i32_2 = arith.constant 0 : i32
    return %c0_i32, %c0_i32_0, %c0_i32_1 : i32, i32, i32
  }
  func.func @transform_2(%arg0: i32) -> (i32, i32) {
    %c0_i32 = arith.constant 0 : i32
    %c0_i32_0 = arith.constant 0 : i32
    %c0_i32_1 = arith.constant 0 : i32
    return %c0_i32, %c0_i32_0 : i32, i32
  }
  func.func @transform_3(%arg0: i32) -> (i32, i32, i32) {
    %c0_i32 = arith.constant 0 : i32
    %c0_i32_0 = arith.constant 0 : i32
    %c0_i32_1 = arith.constant 0 : i32
    %c0_i32_2 = arith.constant 0 : i32
    return %c0_i32, %c0_i32_0, %c0_i32_1 : i32, i32, i32
  }
  func.func @transform_4(%arg0: i32) -> (i32, i32) {
    %c0_i32 = arith.constant 0 : i32
    %c0_i32_0 = arith.constant 0 : i32
    %c0_i32_1 = arith.constant 0 : i32
    return %c0_i32, %c0_i32_0 : i32, i32
  }
  func.func @transform_5(%arg0: i32) -> (i32, i32, i32) {
    %c0_i32 = arith.constant 0 : i32
    %c0_i32_0 = arith.constant 0 : i32
    %c0_i32_1 = arith.constant 0 : i32
    return %arg0, %c0_i32, %c0_i32_0 : i32, i32, i32
  }
}

</mosaic_0001>

<llo_original>
// kernel: tpu_custom_call.1
$region0: #{tpu_custom_call.1}
  #allocation0 [shape = 'u32[]', space=smem, size = 0x4, offset = 0x4, fixed_abs, tag = 'smem constant byte address 0x4 - core index']
  #allocation1 [shape = 'u32[72,128]{1,0:T(1,128)}', space=vmem, size = 0x9000, scoped, tag = 'internal scratch']
  #allocation2 [shape = 'bf16[32,1040]{1,0:T(8,128)(2,1)}', space=vmem, size = 0x12000, scoped, tag = 'scratch operand']
  %s0 = inlined_call_operand.hbm [shape: f32[4,32,256], index: 0, kind: input, shape index: {}]
  %s1 = inlined_call_operand.hbm [shape: bf16[5,32,32], index: 1, kind: input, shape index: {}]
  %s2 = inlined_call_operand.vmem [shape: f32[32,1], index: 2, kind: input, shape index: {}]
  %s3 = inlined_call_operand.hbm [shape: bf16[5,32,32], index: 3, kind: input, shape index: {}]
  %s4 = inlined_call_operand.vmem [shape: f32[32,1], index: 4, kind: input, shape index: {}]
  %s5 = inlined_call_operand.hbm [shape: f32[4,32,256], index: 5, kind: output, shape index: {}]
  %s6 = sld [smem:[#allocation0]]
  $region42: #{tpu_custom_call.1} parent=0
    _
  %s8 = ssub.s32 1, %s6
  %s9 = scalar_select 0, %s8, %s6
  $region1: #{tpu_custom_call.1} parent=0
    #allocation3 [shape = 'u8[131072]{0}', space=vmem, size = 0x20000, scoped, tag = 'input window, operand 0, single buffered']
    #allocation4 [shape = 's32[1]{0}', space=sflag, size = 0x4, scoped, tag = 'scoped memory for tpu_custom_call.1']
    #allocation5 [shape = 's32[1]{0}', space=sflag, size = 0x4, scoped, tag = 'scoped memory for tpu_custom_call.1']
    #allocation6 [shape = 'u8[40960]{0}', space=vmem, size = 0xa000, scoped, tag = 'input window, operand 1, single buffered']
    #allocation7 [shape = 's32[1]{0}', space=sflag, size = 0x4, scoped, tag = 'scoped memory for tpu_custom_call.1']
    #allocation8 [shape = 'u8[40960]{0}', space=vmem, size = 0xa000, scoped, tag = 'input window, operand 3, single buffered']
    #allocation9 [shape = 'u8[131072]{0}', space=vmem, size = 0x20000, scoped, tag = 'output window, operand 0, single buffered']
    %10 = vsyncpa [#allocation4], 0
    %11 = vsyncpa [#allocation7], 0
    %12 = vsyncpa [#allocation5], 0
    // Predicated region
    $region2: #{tpu_custom_call.1} parent=1 // pred_check
      _
    $region3: #{tpu_custom_call.1} parent=1 // pred_check_branch
      %14 = sbr.rel (0) target = $region5
    $region4: #{tpu_custom_call.1} parent=1 // pred_region
      %16 = vsyncadd [#allocation4], 0
      %s17 = sshll.u32 %s0, 4
      %s18 = int_to_ptr.hbm [resolvable:$true] %s17
      %s19 = sshll.u32 [#allocation3], 4
      %s20 = int_to_ptr.vmem [resolvable:$true] %s19
      %25 = dma.hbm_to_vmem [thread:$0]  %s18, 4096, %s20, [#allocation4], 256, 256, 16
    $region5: #{tpu_custom_call.1} parent=1 // pred_fallthru
      _
    // Predicated region
    $region6: #{tpu_custom_call.1} parent=1 // pred_check
      _
    $region7: #{tpu_custom_call.1} parent=1 // pred_check_branch
      %27 = sbr.rel (0) target = $region9
    $region8: #{tpu_custom_call.1} parent=1 // pred_region
      %29 = vsyncadd [#allocation7], 0
      %s30 = sshll.u32 %s1, 4
      %s31 = int_to_ptr.hbm [resolvable:$true] %s30
      %s32 = sshll.u32 [#allocation6], 4
      %s33 = int_to_ptr.vmem [resolvable:$true] %s32
      %38 = dma.hbm_to_vmem [thread:$0]  %s31, 1280, %s33, [#allocation7], 64, 64, 4
    $region9: #{tpu_custom_call.1} parent=1 // pred_fallthru
      _
    // Predicated region
    $region10: #{tpu_custom_call.1} parent=1 // pred_check
      _
    $region11: #{tpu_custom_call.1} parent=1 // pred_check_branch
      %40 = sbr.rel (0) target = $region13
    $region12: #{tpu_custom_call.1} parent=1 // pred_region
      _
    $region13: #{tpu_custom_call.1} parent=1 // pred_fallthru
      _
    // Predicated region
    $region14: #{tpu_custom_call.1} parent=1 // pred_check
      _
    $region15: #{tpu_custom_call.1} parent=1 // pred_check_branch
      %42 = sbr.rel (0) target = $region17
    $region16: #{tpu_custom_call.1} parent=1 // pred_region
      %44 = vsyncadd [#allocation7], 0
      %s45 = sshll.u32 %s3, 4
      %s46 = int_to_ptr.hbm [resolvable:$true] %s45
      %s47 = sshll.u32 [#allocation8], 4
      %s48 = int_to_ptr.vmem [resolvable:$true] %s47
      %53 = dma.hbm_to_vmem [thread:$0]  %s46, 1280, %s48, [#allocation7], 64, 64, 4
    $region17: #{tpu_custom_call.1} parent=1 // pred_fallthru
      _
    // Predicated region
    $region18: #{tpu_custom_call.1} parent=1 // pred_check
      _
    $region19: #{tpu_custom_call.1} parent=1 // pred_check_branch
      %55 = sbr.rel (0) target = $region21
    $region20: #{tpu_custom_call.1} parent=1 // pred_region
      _
    $region21: #{tpu_custom_call.1} parent=1 // pred_fallthru
      _
    // Predicated region
    $region22: #{tpu_custom_call.1} parent=1 // pred_check
      _
    $region23: #{tpu_custom_call.1} parent=1 // pred_check_branch
      %57 = sbr.rel (0) target = $region25
    $region24: #{tpu_custom_call.1} parent=1 // pred_region
      %59 = dma.done [#allocation4], 4096
    $region25: #{tpu_custom_call.1} parent=1 // pred_fallthru
      _
    // Predicated region
    $region26: #{tpu_custom_call.1} parent=1 // pred_check
      _
    $region27: #{tpu_custom_call.1} parent=1 // pred_check_branch
      %61 = sbr.rel (0) target = $region29
    $region28: #{tpu_custom_call.1} parent=1 // pred_region
      %63 = dma.done [#allocation7], 1280
    $region29: #{tpu_custom_call.1} parent=1 // pred_fallthru
      _
    // Predicated region
    $region30: #{tpu_custom_call.1} parent=1 // pred_check
      _
    $region31: #{tpu_custom_call.1} parent=1 // pred_check_branch
      %65 = sbr.rel (0) target = $region33
    $region32: #{tpu_custom_call.1} parent=1 // pred_region
      %67 = dma.done [#allocation7], 1280
    $region33: #{tpu_custom_call.1} parent=1 // pred_fallthru
      _
    %vm69 = vcmask 11264
    %70 = vst.msk [vmem:[#allocation2] sm:$0xf] %vm69, 0
    %71 = vst.msk [vmem:[#allocation2 + $0x24] sm:$0xf] %vm69, 0
    %72 = vst.msk [vmem:[#allocation2 + $0x48] sm:$0xf] %vm69, 0
    %73 = vst.msk [vmem:[#allocation2 + $0x6c] sm:$0xf] %vm69, 0
    %vm74 = vcmask 126064
    %75 = vst.msk [vmem:[#allocation2 + $0x20] sm:$0xf] %vm74, 0
    %76 = vst.msk [vmem:[#allocation2 + $0x44] sm:$0xf] %vm74, 0
    %77 = vst.msk [vmem:[#allocation2 + $0x68] sm:$0xf] %vm74, 0
    %78 = vst.msk [vmem:[#allocation2 + $0x8c] sm:$0xf] %vm74, 0
    %vm79 = vcmask 44048
    %80 = vst.msk [vmem:[#allocation2 + $0x8] sm:$0xf] %vm79, 0
    %81 = vst.msk [vmem:[#allocation2 + $0x2c] sm:$0xf] %vm79, 0
    %82 = vst.msk [vmem:[#allocation2 + $0x50] sm:$0xf] %vm79, 0
    %83 = vst.msk [vmem:[#allocation2 + $0x74] sm:$0xf] %vm79, 0
    %vm84 = vcmask 76848
    %85 = vst.msk [vmem:[#allocation2 + $0x10] sm:$0xf] %vm84, 0
    %86 = vst.msk [vmem:[#allocation2 + $0x34] sm:$0xf] %vm84, 0
    %87 = vst.msk [vmem:[#allocation2 + $0x58] sm:$0xf] %vm84, 0
    %88 = vst.msk [vmem:[#allocation2 + $0x7c] sm:$0xf] %vm84, 0
    %vm89 = vcmask 109648
    %90 = vst.msk [vmem:[#allocation2 + $0x18] sm:$0xf] %vm89, 0
    %91 = vst.msk [vmem:[#allocation2 + $0x3c] sm:$0xf] %vm89, 0
    %92 = vst.msk [vmem:[#allocation2 + $0x60] sm:$0xf] %vm89, 0
    %93 = vst.msk [vmem:[#allocation2 + $0x84] sm:$0xf] %vm89, 0
    %v94 = vld [vmem:[#allocation3] sm:$0xff]
    %v95 = vld [vmem:[#allocation3 + $0x8] sm:$0xff]
    %v96 = vld [vmem:[#allocation3 + $0x10] sm:$0xff]
    %v97 = vld [vmem:[#allocation3 + $0x18] sm:$0xff]
    %v98 = vld [vmem:[#allocation3 + $0x20] sm:$0xff]
    %v99 = vld [vmem:[#allocation3 + $0x28] sm:$0xff]
    %v100 = vld [vmem:[#allocation3 + $0x30] sm:$0xff]
    %v101 = vld [vmem:[#allocation3 + $0x38] sm:$0xff]
    %v102 = vmax.f32 %v94, 0.0
    %v103 = vmax.f32 %v95, 0.0
    %v104 = vmax.f32 %v96, 0.0
    %v105 = vmax.f32 %v97, 0.0
    %v106 = vmax.f32 %v98, 0.0
    %v107 = vmax.f32 %v99, 0.0
    %v108 = vmax.f32 %v100, 0.0
    %v109 = vmax.f32 %v101, 0.0
    %v110 = vpack.c.bf16 %v103, %v102
    %v111 = vpack.c.bf16 %v105, %v104
    %v112 = vpack.c.bf16 %v107, %v106
    %v113 = vpack.c.bf16 %v109, %v108
    %118 = vrot.lane.b32.xlu0 %v110, 2
    %v119 = vpop.permute.xlu0 %118
    %120 = vrot.lane.b32.xlu0 %v111, 2
    %v121 = vpop.permute.xlu0 %120
    %122 = vrot.lane.b32.xlu0 %v112, 2
    %v123 = vpop.permute.xlu0 %122
    %124 = vrot.lane.b32.xlu0 %v113, 2
    %v125 = vpop.permute.xlu0 %124
    %v126 = vrot.slane %v119, 4
    %v127 = vrot.slane %v121, 4
    %v128 = vrot.slane %v123, 4
    %v129 = vrot.slane %v125, 4
    %vm130 = vcmask 15360
    %v131 = vsel %vm130, %v126, %v119
    %v132 = vsel %vm130, %v127, %v121
    %v133 = vsel %vm130, %v128, %v123
    %v134 = vsel %vm130, %v129, %v125
    %vm143 = vcmask 1043472
    %vm144 = vcmask 1047556
    %vm145 = vmor %vm144, %vm143
    %146 = vst.msk [vmem:[#allocation2] sm:$0xff] %vm145, %v131
    %147 = vst.msk [vmem:[#allocation2 + $0x8] sm:$0xf] %vm69, %v126
    %148 = vst.msk [vmem:[#allocation2 + $0x24] sm:$0xff] %vm145, %v132
    %149 = vst.msk [vmem:[#allocation2 + $0x2c] sm:$0xf] %vm69, %v127
    %150 = vst.msk [vmem:[#allocation2 + $0x48] sm:$0xff] %vm145, %v133
    %151 = vst.msk [vmem:[#allocation2 + $0x50] sm:$0xf] %vm69, %v128
    %152 = vst.msk [vmem:[#allocation2 + $0x6c] sm:$0xff] %vm145, %v134
    %153 = vst.msk [vmem:[#allocation2 + $0x74] sm:$0xf] %vm69, %v129
    %s154 = scalar_lea.vmem [#allocation3], 64
    %v155 = vld [vmem:[%s154] sm:$0xff]
    %v156 = vld [vmem:[%s154 + $0x8] sm:$0xff]
    %v157 = vld [vmem:[%s154 + $0x10] sm:$0xff]
    %v158 = vld [vmem:[%s154 + $0x18] sm:$0xff]
    %v159 = vld [vmem:[%s154 + $0x20] sm:$0xff]
    %v160 = vld [vmem:[%s154 + $0x28] sm:$0xff]
    %v161 = vld [vmem:[%s154 + $0x30] sm:$0xff]
    %v162 = vld [vmem:[%s154 + $0x38] sm:$0xff]
    %v163 = vmax.f32 %v155, 0.0
    %v164 = vmax.f32 %v156, 0.0
    %v165 = vmax.f32 %v157, 0.0
    %v166 = vmax.f32 %v158, 0.0
    %v167 = vmax.f32 %v159, 0.0
    %v168 = vmax.f32 %v160, 0.0
    %v169 = vmax.f32 %v161, 0.0
    %v170 = vmax.f32 %v162, 0.0
    %v171 = vpack.c.bf16 %v164, %v163
    %v172 = vpack.c.bf16 %v166, %v165
    %v173 = vpack.c.bf16 %v168, %v167
    %v174 = vpack.c.bf16 %v170, %v169
    %179 = vrot.lane.b32.xlu0 %v171, 6
    %v180 = vpop.permute.xlu0 %179
    %181 = vrot.lane.b32.xlu0 %v172, 6
    %v182 = vpop.permute.xlu0 %181
    %183 = vrot.lane.b32.xlu0 %v173, 6
    %v184 = vpop.permute.xlu0 %183
    %185 = vrot.lane.b32.xlu0 %v174, 6
    %v186 = vpop.permute.xlu0 %185
    %v187 = vrot.slane %v180, 4
    %v188 = vrot.slane %v182, 4
    %v189 = vrot.slane %v184, 4
    %v190 = vrot.slane %v186, 4
    %vm191 = vcmask 48128
    %v192 = vsel %vm191, %v187, %v180
    %v193 = vsel %vm191, %v188, %v182
    %v194 = vsel %vm191, %v189, %v184
    %v195 = vsel %vm191, %v190, %v186
    %vm204 = vcmask 1043504
    %vm205 = vmor %vm144, %vm204
    %206 = vst.msk [vmem:[#allocation2 + $0x8] sm:$0xff] %vm205, %v192
    %vm207 = vcmask 44032
    %208 = vst.msk [vmem:[#allocation2 + $0x10] sm:$0xf] %vm207, %v187
    %209 = vst.msk [vmem:[#allocation2 + $0x2c] sm:$0xff] %vm205, %v193
    %210 = vst.msk [vmem:[#allocation2 + $0x34] sm:$0xf] %vm207, %v188
    %211 = vst.msk [vmem:[#allocation2 + $0x50] sm:$0xff] %vm205, %v194
    %212 = vst.msk [vmem:[#allocation2 + $0x58] sm:$0xf] %vm207, %v189
    %213 = vst.msk [vmem:[#allocation2 + $0x74] sm:$0xff] %vm205, %v195
    %214 = vst.msk [vmem:[#allocation2 + $0x7c] sm:$0xf] %vm207, %v190
    %s215 = scalar_lea.vmem [#allocation3], 128
    %v216 = vld [vmem:[%s215] sm:$0xff]
    %v217 = vld [vmem:[%s215 + $0x8] sm:$0xff]
    %v218 = vld [vmem:[%s215 + $0x10] sm:$0xff]
    %v219 = vld [vmem:[%s215 + $0x18] sm:$0xff]
    %v220 = vld [vmem:[%s215 + $0x20] sm:$0xff]
    %v221 = vld [vmem:[%s215 + $0x28] sm:$0xff]
    %v222 = vld [vmem:[%s215 + $0x30] sm:$0xff]
    %v223 = vld [vmem:[%s215 + $0x38] sm:$0xff]
    %v224 = vmax.f32 %v216, 0.0
    %v225 = vmax.f32 %v217, 0.0
    %v226 = vmax.f32 %v218, 0.0
    %v227 = vmax.f32 %v219, 0.0
    %v228 = vmax.f32 %v220, 0.0
    %v229 = vmax.f32 %v221, 0.0
    %v230 = vmax.f32 %v222, 0.0
    %v231 = vmax.f32 %v223, 0.0
    %v232 = vpack.c.bf16 %v225, %v224
    %v233 = vpack.c.bf16 %v227, %v226
    %v234 = vpack.c.bf16 %v229, %v228
    %v235 = vpack.c.bf16 %v231, %v230
    %240 = vrot.lane.b32.xlu0 %v232, 10
    %v241 = vpop.permute.xlu0 %240
    %242 = vrot.lane.b32.xlu0 %v233, 10
    %v243 = vpop.permute.xlu0 %242
    %244 = vrot.lane.b32.xlu0 %v234, 10
    %v245 = vpop.permute.xlu0 %244
    %246 = vrot.lane.b32.xlu0 %v235, 10
    %v247 = vpop.permute.xlu0 %246
    %v248 = vrot.slane %v241, 4
    %v249 = vrot.slane %v243, 4
    %v250 = vrot.slane %v245, 4
    %v251 = vrot.slane %v247, 4
    %vm252 = vcmask 80896
    %v253 = vsel %vm252, %v248, %v241
    %v254 = vsel %vm252, %v249, %v243
    %v255 = vsel %vm252, %v250, %v245
    %v256 = vsel %vm252, %v251, %v247
    %vm265 = vcmask 1043536
    %vm266 = vmor %vm144, %vm265
    %267 = vst.msk [vmem:[#allocation2 + $0x10] sm:$0xff] %vm266, %v253
    %vm268 = vcmask 76800
    %269 = vst.msk [vmem:[#allocation2 + $0x18] sm:$0xf] %vm268, %v248
    %270 = vst.msk [vmem:[#allocation2 + $0x34] sm:$0xff] %vm266, %v254
    %271 = vst.msk [vmem:[#allocation2 + $0x3c] sm:$0xf] %vm268, %v249
    %272 = vst.msk [vmem:[#allocation2 + $0x58] sm:$0xff] %vm266, %v255
    %273 = vst.msk [vmem:[#allocation2 + $0x60] sm:$0xf] %vm268, %v250
    %274 = vst.msk [vmem:[#allocation2 + $0x7c] sm:$0xff] %vm266, %v256
    %275 = vst.msk [vmem:[#allocation2 + $0x84] sm:$0xf] %vm268, %v251
    %s276 = scalar_lea.vmem [#allocation3], 192
    %v277 = vld [vmem:[%s276] sm:$0xff]
    %v278 = vld [vmem:[%s276 + $0x8] sm:$0xff]
    %v279 = vld [vmem:[%s276 + $0x10] sm:$0xff]
    %v280 = vld [vmem:[%s276 + $0x18] sm:$0xff]
    %v281 = vld [vmem:[%s276 + $0x20] sm:$0xff]
    %v282 = vld [vmem:[%s276 + $0x28] sm:$0xff]
    %v283 = vld [vmem:[%s276 + $0x30] sm:$0xff]
    %v284 = vld [vmem:[%s276 + $0x38] sm:$0xff]
    %v285 = vmax.f32 %v277, 0.0
    %v286 = vmax.f32 %v278, 0.0
    %v287 = vmax.f32 %v279, 0.0
    %v288 = vmax.f32 %v280, 0.0
    %v289 = vmax.f32 %v281, 0.0
    %v290 = vmax.f32 %v282, 0.0
    %v291 = vmax.f32 %v283, 0.0
    %v292 = vmax.f32 %v284, 0.0
    %v293 = vpack.c.bf16 %v286, %v285
    %v294 = vpack.c.bf16 %v288, %v287
    %v295 = vpack.c.bf16 %v290, %v289
    %v296 = vpack.c.bf16 %v292, %v291
    %301 = vrot.lane.b32.xlu0 %v293, 14
    %v302 = vpop.permute.xlu0 %301
    %303 = vrot.lane.b32.xlu0 %v294, 14
    %v304 = vpop.permute.xlu0 %303
    %305 = vrot.lane.b32.xlu0 %v295, 14
    %v306 = vpop.permute.xlu0 %305
    %307 = vrot.lane.b32.xlu0 %v296, 14
    %v308 = vpop.permute.xlu0 %307
    %v309 = vrot.slane %v302, 4
    %v310 = vrot.slane %v304, 4
    %v311 = vrot.slane %v306, 4
    %v312 = vrot.slane %v308, 4
    %vm313 = vcmask 113664
    %v314 = vsel %vm313, %v309, %v302
    %v315 = vsel %vm313, %v310, %v304
    %v316 = vsel %vm313, %v311, %v306
    %v317 = vsel %vm313, %v312, %v308
    %vm326 = vcmask 1043568
    %vm327 = vmor %vm144, %vm326
    %328 = vst.msk [vmem:[#allocation2 + $0x18] sm:$0xff] %vm327, %v314
    %vm329 = vcmask 109568
    %330 = vst.msk [vmem:[#allocation2 + $0x20] sm:$0xf] %vm329, %v309
    %331 = vst.msk [vmem:[#allocation2 + $0x3c] sm:$0xff] %vm327, %v315
    %332 = vst.msk [vmem:[#allocation2 + $0x44] sm:$0xf] %vm329, %v310
    %333 = vst.msk [vmem:[#allocation2 + $0x60] sm:$0xff] %vm327, %v316
    %334 = vst.msk [vmem:[#allocation2 + $0x68] sm:$0xf] %vm329, %v311
    %335 = vst.msk [vmem:[#allocation2 + $0x84] sm:$0xff] %vm327, %v317
    %336 = vst.msk [vmem:[#allocation2 + $0x8c] sm:$0xf] %vm329, %v312
    %v337 = vld [vmem:[#allocation6] sm:$0xf]
    %v338 = vld [vmem:[#allocation6 + $0x4] sm:$0xf]
    %v339 = vld [vmem:[#allocation6 + $0x8] sm:$0xf]
    %v340 = vld [vmem:[#allocation6 + $0xc] sm:$0xf]
    %v341 = vld [vmem:[#allocation2] sm:$0xff]
    %v342 = vld [vmem:[#allocation2 + $0x8] sm:$0xff]
    %v343 = vld [vmem:[#allocation2 + $0x10] sm:$0xff]
    %v344 = vld [vmem:[#allocation2 + $0x18] sm:$0xff]
    %v345 = vld [vmem:[#allocation2 + $0x20] sm:$0xf]
    %v346 = vld [vmem:[#allocation2 + $0x24] sm:$0xff]
    %v347 = vld [vmem:[#allocation2 + $0x2c] sm:$0xff]
    %v348 = vld [vmem:[#allocation2 + $0x34] sm:$0xff]
    %v349 = vld [vmem:[#allocation2 + $0x3c] sm:$0xff]
    %v350 = vld [vmem:[#allocation2 + $0x44] sm:$0xf]
    %v351 = vld [vmem:[#allocation2 + $0x48] sm:$0xff]
    %v352 = vld [vmem:[#allocation2 + $0x50] sm:$0xff]
    %v353 = vld [vmem:[#allocation2 + $0x58] sm:$0xff]
    %v354 = vld [vmem:[#allocation2 + $0x60] sm:$0xff]
    %v355 = vld [vmem:[#allocation2 + $0x68] sm:$0xf]
    %v356 = vld [vmem:[#allocation2 + $0x6c] sm:$0xff]
    %v357 = vld [vmem:[#allocation2 + $0x74] sm:$0xff]
    %v358 = vld [vmem:[#allocation2 + $0x7c] sm:$0xff]
    %v359 = vld [vmem:[#allocation2 + $0x84] sm:$0xff]
    %v360 = vld [vmem:[#allocation2 + $0x8c] sm:$0xf]
    %s361 = scalar_lea.vmem [#allocation6], 16
    %v362 = vld [vmem:[%s361] sm:$0xf]
    %v363 = vld [vmem:[%s361 + $0x4] sm:$0xf]
    %v364 = vld [vmem:[%s361 + $0x8] sm:$0xf]
    %v365 = vld [vmem:[%s361 + $0xc] sm:$0xf]
    %v370 = vunpack.c.l.b16 %v362
    %v371 = vunpack.c.l.b16 %v363
    %v372 = vunpack.c.l.b16 %v364
    %v373 = vunpack.c.l.b16 %v365
    %v374 = vpack.c.b16 %v371, %v370
    %v375 = vpack.c.b16 %v373, %v372
    %v396 = vunpack.c.l.b16 %v341
    %v397 = vunpack.c.h.b16 %v341
    %v398 = vunpack.c.l.b16 %v342
    %v399 = vunpack.c.h.b16 %v342
    %v400 = vunpack.c.l.b16 %v343
    %v401 = vunpack.c.h.b16 %v343
    %v402 = vunpack.c.l.b16 %v344
    %v403 = vunpack.c.h.b16 %v344
    %v404 = vunpack.c.l.b16 %v345
    %v405 = vunpack.c.l.b16 %v346
    %v406 = vunpack.c.h.b16 %v346
    %v407 = vunpack.c.l.b16 %v347
    %v408 = vunpack.c.h.b16 %v347
    %v409 = vunpack.c.l.b16 %v348
    %v410 = vunpack.c.h.b16 %v348
    %v411 = vunpack.c.l.b16 %v349
    %v412 = vunpack.c.h.b16 %v349
    %v413 = vunpack.c.l.b16 %v350
    %v414 = vunpack.c.l.b16 %v351
    %v415 = vunpack.c.h.b16 %v351
    %v416 = vunpack.c.l.b16 %v352
    %v417 = vunpack.c.h.b16 %v352
    %v418 = vunpack.c.l.b16 %v353
    %v419 = vunpack.c.h.b16 %v353
    %v420 = vunpack.c.l.b16 %v354
    %v421 = vunpack.c.h.b16 %v354
    %v422 = vunpack.c.l.b16 %v355
    %v423 = vunpack.c.l.b16 %v356
    %v424 = vunpack.c.h.b16 %v356
    %v425 = vunpack.c.l.b16 %v357
    %v426 = vunpack.c.h.b16 %v357
    %v427 = vunpack.c.l.b16 %v358
    %v428 = vunpack.c.h.b16 %v358
    %v429 = vunpack.c.l.b16 %v359
    %v430 = vunpack.c.h.b16 %v359
    %v431 = vunpack.c.l.b16 %v360
    %v432 = vpack.c.b16 %v405, %v396
    %v433 = vpack.c.b16 %v406, %v397
    %v434 = vpack.c.b16 %v407, %v398
    %v435 = vpack.c.b16 %v408, %v399
    %v436 = vpack.c.b16 %v409, %v400
    %v437 = vpack.c.b16 %v410, %v401
    %v438 = vpack.c.b16 %v411, %v402
    %v439 = vpack.c.b16 %v412, %v403
    %v440 = vpack.c.b16 %v413, %v404
    %v441 = vpack.c.b16 %v423, %v414
    %v442 = vpack.c.b16 %v424, %v415
    %v443 = vpack.c.b16 %v425, %v416
    %v444 = vpack.c.b16 %v426, %v417
    %v445 = vpack.c.b16 %v427, %v418
    %v446 = vpack.c.b16 %v428, %v419
    %v447 = vpack.c.b16 %v429, %v420
    %v448 = vpack.c.b16 %v430, %v421
    %v449 = vpack.c.b16 %v431, %v422
    %450 = vrot.lane.b32.xlu0 %v432, 127
    %v451 = vpop.permute.xlu0 %450
    %452 = vrot.lane.b32.xlu0 %v433, 127
    %v453 = vpop.permute.xlu0 %452
    %454 = vrot.lane.b32.xlu0 %v434, 127
    %v455 = vpop.permute.xlu0 %454
    %456 = vrot.lane.b32.xlu0 %v435, 127
    %v457 = vpop.permute.xlu0 %456
    %458 = vrot.lane.b32.xlu0 %v436, 127
    %v459 = vpop.permute.xlu0 %458
    %460 = vrot.lane.b32.xlu0 %v437, 127
    %v461 = vpop.permute.xlu0 %460
    %462 = vrot.lane.b32.xlu0 %v438, 127
    %v463 = vpop.permute.xlu0 %462
    %464 = vrot.lane.b32.xlu0 %v439, 127
    %v465 = vpop.permute.xlu0 %464
    %466 = vrot.lane.b32.xlu0 %v440, 127
    %v467 = vpop.permute.xlu0 %466
    %468 = vrot.lane.b32.xlu0 %v441, 127
    %v469 = vpop.permute.xlu0 %468
    %470 = vrot.lane.b32.xlu0 %v442, 127
    %v471 = vpop.permute.xlu0 %470
    %472 = vrot.lane.b32.xlu0 %v443, 127
    %v473 = vpop.permute.xlu0 %472
    %474 = vrot.lane.b32.xlu0 %v444, 127
    %v475 = vpop.permute.xlu0 %474
    %476 = vrot.lane.b32.xlu0 %v445, 127
    %v477 = vpop.permute.xlu0 %476
    %478 = vrot.lane.b32.xlu0 %v446, 127
    %v479 = vpop.permute.xlu0 %478
    %480 = vrot.lane.b32.xlu0 %v447, 127
    %v481 = vpop.permute.xlu0 %480
    %482 = vrot.lane.b32.xlu0 %v448, 127
    %v483 = vpop.permute.xlu0 %482
    %484 = vrot.lane.b32.xlu0 %v449, 127
    %v485 = vpop.permute.xlu0 %484
    %vm486 = vcmask 1039360
    %v487 = vsel %vm486, %v451, %v453
    %v488 = vsel %vm486, %v453, %v455
    %v489 = vsel %vm486, %v455, %v457
    %v490 = vsel %vm486, %v457, %v459
    %v491 = vsel %vm486, %v459, %v461
    %v492 = vsel %vm486, %v461, %v463
    %v493 = vsel %vm486, %v463, %v465
    %v494 = vsel %vm486, %v465, %v467
    %v495 = vsel %vm486, %v469, %v471
    %v496 = vsel %vm486, %v471, %v473
    %v497 = vsel %vm486, %v473, %v475
    %v498 = vsel %vm486, %v475, %v477
    %v499 = vsel %vm486, %v477, %v479
    %v500 = vsel %vm486, %v479, %v481
    %v501 = vsel %vm486, %v481, %v483
    %v502 = vsel %vm486, %v483, %v485
    %vm521 = vcmask 261120
    %v523 = vsel %vm521, %v374, 0
    %v526 = vsel %vm521, %v375, 0
    %528 = vmatpush.bf16.msra.mxu0 0
    %529 = vmatpush.bf16.msra.mxu0 0
    %530 = vmatpush.bf16.msra.mxu0 0
    %531 = vmatpush.bf16.msra.mxu0 0
    %532 = vmatpush.bf16.msra.mxu0 0
    %533 = vmatpush.bf16.msra.mxu0 0
    %534 = vmatpush.bf16.msra.mxu0 %v495
    %535 = vmatpush.bf16.msra.mxu0 %v487
    %536 = vmatmul.bf16.gmra.mxu0 %v523
    %v537 = vpop.f32.mrf.mxu0
    %v538 = vadd.f32 0.0, %v537
    %v539 = vpop.f32.mrf.mxu0
    %v540 = vadd.f32 0.0, %v539
    %541 = vmatmul.bf16.gmra.mxu0 %v526
    %v542 = vpop.f32.mrf.mxu0
    %v543 = vadd.f32 0.0, %v542
    %v544 = vpop.f32.mrf.mxu0
    %v545 = vadd.f32 0.0, %v544
    %546 = vdwg.mxu0
    %547 = vmatpush.bf16.msra.mxu0 0
    %548 = vmatpush.bf16.msra.mxu0 0
    %549 = vmatpush.bf16.msra.mxu0 0
    %550 = vmatpush.bf16.msra.mxu0 0
    %551 = vmatpush.bf16.msra.mxu0 0
    %552 = vmatpush.bf16.msra.mxu0 0
    %553 = vmatpush.bf16.msra.mxu0 %v496
    %554 = vmatpush.bf16.msra.mxu0 %v488
    %555 = vmatmul.bf16.gmra.mxu0 %v523
    %v556 = vpop.f32.mrf.mxu0
    %v557 = vadd.f32 0.0, %v556
    %v558 = vpop.f32.mrf.mxu0
    %v559 = vadd.f32 0.0, %v558
    %560 = vmatmul.bf16.gmra.mxu0 %v526
    %v561 = vpop.f32.mrf.mxu0
    %v562 = vadd.f32 0.0, %v561
    %v563 = vpop.f32.mrf.mxu0
    %v564 = vadd.f32 0.0, %v563
    %565 = vdwg.mxu0
    %566 = vmatpush.bf16.msra.mxu0 0
    %567 = vmatpush.bf16.msra.mxu0 0
    %568 = vmatpush.bf16.msra.mxu0 0
    %569 = vmatpush.bf16.msra.mxu0 0
    %570 = vmatpush.bf16.msra.mxu0 0
    %571 = vmatpush.bf16.msra.mxu0 0
    %572 = vmatpush.bf16.msra.mxu0 %v497
    %573 = vmatpush.bf16.msra.mxu0 %v489
    %574 = vmatmul.bf16.gmra.mxu0 %v523
    %v575 = vpop.f32.mrf.mxu0
    %v576 = vadd.f32 0.0, %v575
    %v577 = vpop.f32.mrf.mxu0
    %v578 = vadd.f32 0.0, %v577
    %579 = vmatmul.bf16.gmra.mxu0 %v526
    %v580 = vpop.f32.mrf.mxu0
    %v581 = vadd.f32 0.0, %v580
    %v582 = vpop.f32.mrf.mxu0
    %v583 = vadd.f32 0.0, %v582
    %584 = vdwg.mxu0
    %585 = vmatpush.bf16.msra.mxu0 0
    %586 = vmatpush.bf16.msra.mxu0 0
    %587 = vmatpush.bf16.msra.mxu0 0
    %588 = vmatpush.bf16.msra.mxu0 0
    %589 = vmatpush.bf16.msra.mxu0 0
    %590 = vmatpush.bf16.msra.mxu0 0
    %591 = vmatpush.bf16.msra.mxu0 %v498
    %592 = vmatpush.bf16.msra.mxu0 %v490
    %593 = vmatmul.bf16.gmra.mxu0 %v523
    %v594 = vpop.f32.mrf.mxu0
    %v595 = vadd.f32 0.0, %v594
    %v596 = vpop.f32.mrf.mxu0
    %v597 = vadd.f32 0.0, %v596
    %598 = vmatmul.bf16.gmra.mxu0 %v526
    %v599 = vpop.f32.mrf.mxu0
    %v600 = vadd.f32 0.0, %v599
    %v601 = vpop.f32.mrf.mxu0
    %v602 = vadd.f32 0.0, %v601
    %603 = vdwg.mxu0
    %604 = vmatpush.bf16.msra.mxu0 0
    %605 = vmatpush.bf16.msra.mxu0 0
    %606 = vmatpush.bf16.msra.mxu0 0
    %607 = vmatpush.bf16.msra.mxu0 0
    %608 = vmatpush.bf16.msra.mxu0 0
    %609 = vmatpush.bf16.msra.mxu0 0
    %610 = vmatpush.bf16.msra.mxu0 %v499
    %611 = vmatpush.bf16.msra.mxu0 %v491
    %612 = vmatmul.bf16.gmra.mxu0 %v523
    %v613 = vpop.f32.mrf.mxu0
    %v614 = vadd.f32 0.0, %v613
    %v615 = vpop.f32.mrf.mxu0
    %v616 = vadd.f32 0.0, %v615
    %617 = vmatmul.bf16.gmra.mxu0 %v526
    %v618 = vpop.f32.mrf.mxu0
    %v619 = vadd.f32 0.0, %v618
    %v620 = vpop.f32.mrf.mxu0
    %v621 = vadd.f32 0.0, %v620
    %622 = vdwg.mxu0
    %623 = vmatpush.bf16.msra.mxu0 0
    %624 = vmatpush.bf16.msra.mxu0 0
    %625 = vmatpush.bf16.msra.mxu0 0
    %626 = vmatpush.bf16.msra.mxu0 0
    %627 = vmatpush.bf16.msra.mxu0 0
    %628 = vmatpush.bf16.msra.mxu0 0
    %629 = vmatpush.bf16.msra.mxu0 %v500
    %630 = vmatpush.bf16.msra.mxu0 %v492
    %631 = vmatmul.bf16.gmra.mxu0 %v523
    %v632 = vpop.f32.mrf.mxu0
    %v633 = vadd.f32 0.0, %v632
    %v634 = vpop.f32.mrf.mxu0
    %v635 = vadd.f32 0.0, %v634
    %636 = vmatmul.bf16.gmra.mxu0 %v526
    %v637 = vpop.f32.mrf.mxu0
    %v638 = vadd.f32 0.0, %v637
    %v639 = vpop.f32.mrf.mxu0
    %v640 = vadd.f32 0.0, %v639
    %641 = vdwg.mxu0
    %642 = vmatpush.bf16.msra.mxu0 0
    %643 = vmatpush.bf16.msra.mxu0 0
    %644 = vmatpush.bf16.msra.mxu0 0
    %645 = vmatpush.bf16.msra.mxu0 0
    %646 = vmatpush.bf16.msra.mxu0 0
    %647 = vmatpush.bf16.msra.mxu0 0
    %648 = vmatpush.bf16.msra.mxu0 %v501
    %649 = vmatpush.bf16.msra.mxu0 %v493
    %650 = vmatmul.bf16.gmra.mxu0 %v523
    %v651 = vpop.f32.mrf.mxu0
    %v652 = vadd.f32 0.0, %v651
    %v653 = vpop.f32.mrf.mxu0
    %v654 = vadd.f32 0.0, %v653
    %655 = vmatmul.bf16.gmra.mxu0 %v526
    %v656 = vpop.f32.mrf.mxu0
    %v657 = vadd.f32 0.0, %v656
    %v658 = vpop.f32.mrf.mxu0
    %v659 = vadd.f32 0.0, %v658
    %660 = vdwg.mxu0
    %661 = vmatpush.bf16.msra.mxu0 0
    %662 = vmatpush.bf16.msra.mxu0 0
    %663 = vmatpush.bf16.msra.mxu0 0
    %664 = vmatpush.bf16.msra.mxu0 0
    %665 = vmatpush.bf16.msra.mxu0 0
    %666 = vmatpush.bf16.msra.mxu0 0
    %667 = vmatpush.bf16.msra.mxu0 %v502
    %668 = vmatpush.bf16.msra.mxu0 %v494
    %669 = vmatmul.bf16.gmra.mxu0 %v523
    %v670 = vpop.f32.mrf.mxu0
    %v671 = vadd.f32 0.0, %v670
    %v672 = vpop.f32.mrf.mxu0
    %v673 = vadd.f32 0.0, %v672
    %674 = vmatmul.bf16.gmra.mxu0 %v526
    %v675 = vpop.f32.mrf.mxu0
    %v676 = vadd.f32 0.0, %v675
    %v677 = vpop.f32.mrf.mxu0
    %v678 = vadd.f32 0.0, %v677
    %679 = vdwg.mxu0
    %680 = vmatpush.bf16.msra.mxu0 0
    %681 = vmatpush.bf16.msra.mxu0 0
    %682 = vmatpush.bf16.msra.mxu0 0
    %683 = vmatpush.bf16.msra.mxu0 0
    %684 = vmatpush.bf16.msra.mxu0 0
    %685 = vmatpush.bf16.msra.mxu0 0
    %686 = vmatpush.bf16.msra.mxu0 %v485
    %687 = vmatpush.bf16.msra.mxu0 %v467
    %688 = vmatmul.bf16.gmra.mxu0 %v523
    %v689 = vpop.f32.mrf.mxu0
    %v690 = vadd.f32 0.0, %v689
    %v691 = vpop.f32.mrf.mxu0
    %v692 = vadd.f32 0.0, %v691
    %693 = vmatmul.bf16.gmra.mxu0 %v526
    %v694 = vpop.f32.mrf.mxu0
    %v695 = vadd.f32 0.0, %v694
    %v696 = vpop.f32.mrf.mxu0
    %v697 = vadd.f32 0.0, %v696
    %698 = vdwg.mxu0
    %v703 = vunpack.c.l.b16 %v337
    %v704 = vunpack.c.l.b16 %v338
    %v705 = vunpack.c.l.b16 %v339
    %v706 = vunpack.c.l.b16 %v340
    %v707 = vpack.c.b16 %v704, %v703
    %v708 = vpack.c.b16 %v706, %v705
    %v728 = vsel %vm521, %v707, 0
    %v731 = vsel %vm521, %v708, 0
    %733 = vmatpush.bf16.msra.mxu0 0
    %734 = vmatpush.bf16.msra.mxu0 0
    %735 = vmatpush.bf16.msra.mxu0 0
    %736 = vmatpush.bf16.msra.mxu0 0
    %737 = vmatpush.bf16.msra.mxu0 0
    %738 = vmatpush.bf16.msra.mxu0 0
    %739 = vmatpush.bf16.msra.mxu0 %v441
    %740 = vmatpush.bf16.msra.mxu0 %v432
    %741 = vmatmul.bf16.gmra.mxu0 %v728
    %v742 = vpop.f32.mrf.mxu0
    %v743 = vadd.f32 %v538, %v742
    %v744 = vpop.f32.mrf.mxu0
    %v745 = vadd.f32 %v540, %v744
    %746 = vmatmul.bf16.gmra.mxu0 %v731
    %v747 = vpop.f32.mrf.mxu0
    %v748 = vadd.f32 %v543, %v747
    %v749 = vpop.f32.mrf.mxu0
    %v750 = vadd.f32 %v545, %v749
    %751 = vdwg.mxu0
    %752 = vmatpush.bf16.msra.mxu0 0
    %753 = vmatpush.bf16.msra.mxu0 0
    %754 = vmatpush.bf16.msra.mxu0 0
    %755 = vmatpush.bf16.msra.mxu0 0
    %756 = vmatpush.bf16.msra.mxu0 0
    %757 = vmatpush.bf16.msra.mxu0 0
    %758 = vmatpush.bf16.msra.mxu0 %v442
    %759 = vmatpush.bf16.msra.mxu0 %v433
    %760 = vmatmul.bf16.gmra.mxu0 %v728
    %v761 = vpop.f32.mrf.mxu0
    %v762 = vadd.f32 %v557, %v761
    %v763 = vpop.f32.mrf.mxu0
    %v764 = vadd.f32 %v559, %v763
    %765 = vmatmul.bf16.gmra.mxu0 %v731
    %v766 = vpop.f32.mrf.mxu0
    %v767 = vadd.f32 %v562, %v766
    %v768 = vpop.f32.mrf.mxu0
    %v769 = vadd.f32 %v564, %v768
    %770 = vdwg.mxu0
    %771 = vmatpush.bf16.msra.mxu0 0
    %772 = vmatpush.bf16.msra.mxu0 0
    %773 = vmatpush.bf16.msra.mxu0 0
    %774 = vmatpush.bf16.msra.mxu0 0
    %775 = vmatpush.bf16.msra.mxu0 0
    %776 = vmatpush.bf16.msra.mxu0 0
    %777 = vmatpush.bf16.msra.mxu0 %v443
    %778 = vmatpush.bf16.msra.mxu0 %v434
    %779 = vmatmul.bf16.gmra.mxu0 %v728
    %v780 = vpop.f32.mrf.mxu0
    %v781 = vadd.f32 %v576, %v780
    %v782 = vpop.f32.mrf.mxu0
    %v783 = vadd.f32 %v578, %v782
    %784 = vmatmul.bf16.gmra.mxu0 %v731
    %v785 = vpop.f32.mrf.mxu0
    %v786 = vadd.f32 %v581, %v785
    %v787 = vpop.f32.mrf.mxu0
    %v788 = vadd.f32 %v583, %v787
    %789 = vdwg.mxu0
    %790 = vmatpush.bf16.msra.mxu0 0
    %791 = vmatpush.bf16.msra.mxu0 0
    %792 = vmatpush.bf16.msra.mxu0 0
    %793 = vmatpush.bf16.msra.mxu0 0
    %794 = vmatpush.bf16.msra.mxu0 0
    %795 = vmatpush.bf16.msra.mxu0 0
    %796 = vmatpush.bf16.msra.mxu0 %v444
    %797 = vmatpush.bf16.msra.mxu0 %v435
    %798 = vmatmul.bf16.gmra.mxu0 %v728
    %v799 = vpop.f32.mrf.mxu0
    %v800 = vadd.f32 %v595, %v799
    %v801 = vpop.f32.mrf.mxu0
    %v802 = vadd.f32 %v597, %v801
    %803 = vmatmul.bf16.gmra.mxu0 %v731
    %v804 = vpop.f32.mrf.mxu0
    %v805 = vadd.f32 %v600, %v804
    %v806 = vpop.f32.mrf.mxu0
    %v807 = vadd.f32 %v602, %v806
    %808 = vdwg.mxu0
    %809 = vmatpush.bf16.msra.mxu0 0
    %810 = vmatpush.bf16.msra.mxu0 0
    %811 = vmatpush.bf16.msra.mxu0 0
    %812 = vmatpush.bf16.msra.mxu0 0
    %813 = vmatpush.bf16.msra.mxu0 0
    %814 = vmatpush.bf16.msra.mxu0 0
    %815 = vmatpush.bf16.msra.mxu0 %v445
    %816 = vmatpush.bf16.msra.mxu0 %v436
    %817 = vmatmul.bf16.gmra.mxu0 %v728
    %v818 = vpop.f32.mrf.mxu0
    %v819 = vadd.f32 %v614, %v818
    %v820 = vpop.f32.mrf.mxu0
    %v821 = vadd.f32 %v616, %v820
    %822 = vmatmul.bf16.gmra.mxu0 %v731
    %v823 = vpop.f32.mrf.mxu0
    %v824 = vadd.f32 %v619, %v823
    %v825 = vpop.f32.mrf.mxu0
    %v826 = vadd.f32 %v621, %v825
    %827 = vdwg.mxu0
    %828 = vmatpush.bf16.msra.mxu0 0
    %829 = vmatpush.bf16.msra.mxu0 0
    %830 = vmatpush.bf16.msra.mxu0 0
    %831 = vmatpush.bf16.msra.mxu0 0
    %832 = vmatpush.bf16.msra.mxu0 0
    %833 = vmatpush.bf16.msra.mxu0 0
    %834 = vmatpush.bf16.msra.mxu0 %v446
    %835 = vmatpush.bf16.msra.mxu0 %v437
    %836 = vmatmul.bf16.gmra.mxu0 %v728
    %v837 = vpop.f32.mrf.mxu0
    %v838 = vadd.f32 %v633, %v837
    %v839 = vpop.f32.mrf.mxu0
    %v840 = vadd.f32 %v635, %v839
    %841 = vmatmul.bf16.gmra.mxu0 %v731
    %v842 = vpop.f32.mrf.mxu0
    %v843 = vadd.f32 %v638, %v842
    %v844 = vpop.f32.mrf.mxu0
    %v845 = vadd.f32 %v640, %v844
    %846 = vdwg.mxu0
    %847 = vmatpush.bf16.msra.mxu0 0
    %848 = vmatpush.bf16.msra.mxu0 0
    %849 = vmatpush.bf16.msra.mxu0 0
    %850 = vmatpush.bf16.msra.mxu0 0
    %851 = vmatpush.bf16.msra.mxu0 0
    %852 = vmatpush.bf16.msra.mxu0 0
    %853 = vmatpush.bf16.msra.mxu0 %v447
    %854 = vmatpush.bf16.msra.mxu0 %v438
    %855 = vmatmul.bf16.gmra.mxu0 %v728
    %v856 = vpop.f32.mrf.mxu0
    %v857 = vadd.f32 %v652, %v856
    %v858 = vpop.f32.mrf.mxu0
    %v859 = vadd.f32 %v654, %v858
    %860 = vmatmul.bf16.gmra.mxu0 %v731
    %v861 = vpop.f32.mrf.mxu0
    %v862 = vadd.f32 %v657, %v861
    %v863 = vpop.f32.mrf.mxu0
    %v864 = vadd.f32 %v659, %v863
    %865 = vdwg.mxu0
    %866 = vmatpush.bf16.msra.mxu0 0
    %867 = vmatpush.bf16.msra.mxu0 0
    %868 = vmatpush.bf16.msra.mxu0 0
    %869 = vmatpush.bf16.msra.mxu0 0
    %870 = vmatpush.bf16.msra.mxu0 0
    %871 = vmatpush.bf16.msra.mxu0 0
    %872 = vmatpush.bf16.msra.mxu0 %v448
    %873 = vmatpush.bf16.msra.mxu0 %v439
    %874 = vmatmul.bf16.gmra.mxu0 %v728
    %v875 = vpop.f32.mrf.mxu0
    %v876 = vadd.f32 %v671, %v875
    %v877 = vpop.f32.mrf.mxu0
    %v878 = vadd.f32 %v673, %v877
    %879 = vmatmul.bf16.gmra.mxu0 %v731
    %v880 = vpop.f32.mrf.mxu0
    %v881 = vadd.f32 %v676, %v880
    %v882 = vpop.f32.mrf.mxu0
    %v883 = vadd.f32 %v678, %v882
    %884 = vdwg.mxu0
    %885 = vmatpush.bf16.msra.mxu0 0
    %886 = vmatpush.bf16.msra.mxu0 0
    %887 = vmatpush.bf16.msra.mxu0 0
    %888 = vmatpush.bf16.msra.mxu0 0
    %889 = vmatpush.bf16.msra.mxu0 0
    %890 = vmatpush.bf16.msra.mxu0 0
    %891 = vmatpush.bf16.msra.mxu0 %v449
    %892 = vmatpush.bf16.msra.mxu0 %v440
    %893 = vmatmul.bf16.gmra.mxu0 %v728
    %v894 = vpop.f32.mrf.mxu0
    %v895 = vadd.f32 %v690, %v894
    %v896 = vpop.f32.mrf.mxu0
    %v897 = vadd.f32 %v692, %v896
    %898 = vmatmul.bf16.gmra.mxu0 %v731
    %v899 = vpop.f32.mrf.mxu0
    %v900 = vadd.f32 %v695, %v899
    %v901 = vpop.f32.mrf.mxu0
    %v902 = vadd.f32 %v697, %v901
    %903 = vdwg.mxu0
    %s904 = scalar_lea.vmem [#allocation6], 32
    %v905 = vld [vmem:[%s904] sm:$0xf]
    %v906 = vld [vmem:[%s904 + $0x4] sm:$0xf]
    %v907 = vld [vmem:[%s904 + $0x8] sm:$0xf]
    %v908 = vld [vmem:[%s904 + $0xc] sm:$0xf]
    %v913 = vunpack.c.l.b16 %v905
    %v914 = vunpack.c.l.b16 %v906
    %v915 = vunpack.c.l.b16 %v907
    %v916 = vunpack.c.l.b16 %v908
    %v917 = vpack.c.b16 %v914, %v913
    %v918 = vpack.c.b16 %v916, %v915
    %919 = vrot.lane.b32.xlu0 %v432, 126
    %v920 = vpop.permute.xlu0 %919
    %921 = vrot.lane.b32.xlu0 %v433, 126
    %v922 = vpop.permute.xlu0 %921
    %923 = vrot.lane.b32.xlu0 %v434, 126
    %v924 = vpop.permute.xlu0 %923
    %925 = vrot.lane.b32.xlu0 %v435, 126
    %v926 = vpop.permute.xlu0 %925
    %927 = vrot.lane.b32.xlu0 %v436, 126
    %v928 = vpop.permute.xlu0 %927
    %929 = vrot.lane.b32.xlu0 %v437, 126
    %v930 = vpop.permute.xlu0 %929
    %931 = vrot.lane.b32.xlu0 %v438, 126
    %v932 = vpop.permute.xlu0 %931
    %933 = vrot.lane.b32.xlu0 %v439, 126
    %v934 = vpop.permute.xlu0 %933
    %935 = vrot.lane.b32.xlu0 %v440, 126
    %v936 = vpop.permute.xlu0 %935
    %937 = vrot.lane.b32.xlu0 %v441, 126
    %v938 = vpop.permute.xlu0 %937
    %939 = vrot.lane.b32.xlu0 %v442, 126
    %v940 = vpop.permute.xlu0 %939
    %941 = vrot.lane.b32.xlu0 %v443, 126
    %v942 = vpop.permute.xlu0 %941
    %943 = vrot.lane.b32.xlu0 %v444, 126
    %v944 = vpop.permute.xlu0 %943
    %945 = vrot.lane.b32.xlu0 %v445, 126
    %v946 = vpop.permute.xlu0 %945
    %947 = vrot.lane.b32.xlu0 %v446, 126
    %v948 = vpop.permute.xlu0 %947
    %949 = vrot.lane.b32.xlu0 %v447, 126
    %v950 = vpop.permute.xlu0 %949
    %951 = vrot.lane.b32.xlu0 %v448, 126
    %v952 = vpop.permute.xlu0 %951
    %953 = vrot.lane.b32.xlu0 %v449, 126
    %v954 = vpop.permute.xlu0 %953
    %vm955 = vcmask 1031168
    %v956 = vsel %vm955, %v920, %v922
    %v957 = vsel %vm955, %v922, %v924
    %v958 = vsel %vm955, %v924, %v926
    %v959 = vsel %vm955, %v926, %v928
    %v960 = vsel %vm955, %v928, %v930
    %v961 = vsel %vm955, %v930, %v932
    %v962 = vsel %vm955, %v932, %v934
    %v963 = vsel %vm955, %v934, %v936
    %v964 = vsel %vm955, %v938, %v940
    %v965 = vsel %vm955, %v940, %v942
    %v966 = vsel %vm955, %v942, %v944
    %v967 = vsel %vm955, %v944, %v946
    %v968 = vsel %vm955, %v946, %v948
    %v969 = vsel %vm955, %v948, %v950
    %v970 = vsel %vm955, %v950, %v952
    %v971 = vsel %vm955, %v952, %v954
    %v991 = vsel %vm521, %v917, 0
    %v994 = vsel %vm521, %v918, 0
    %996 = vmatpush.bf16.msra.mxu0 0
    %997 = vmatpush.bf16.msra.mxu0 0
    %998 = vmatpush.bf16.msra.mxu0 0
    %999 = vmatpush.bf16.msra.mxu0 0
    %1000 = vmatpush.bf16.msra.mxu0 0
    %1001 = vmatpush.bf16.msra.mxu0 0
    %1002 = vmatpush.bf16.msra.mxu0 %v964
    %1003 = vmatpush.bf16.msra.mxu0 %v956
    %1004 = vmatmul.bf16.gmra.mxu0 %v991
    %v1005 = vpop.f32.mrf.mxu0
    %v1006 = vadd.f32 0.0, %v1005
    %v1007 = vpop.f32.mrf.mxu0
    %v1008 = vadd.f32 0.0, %v1007
    %1009 = vmatmul.bf16.gmra.mxu0 %v994
    %v1010 = vpop.f32.mrf.mxu0
    %v1011 = vadd.f32 0.0, %v1010
    %v1012 = vpop.f32.mrf.mxu0
    %v1013 = vadd.f32 0.0, %v1012
    %1014 = vdwg.mxu0
    %1015 = vmatpush.bf16.msra.mxu0 0
    %1016 = vmatpush.bf16.msra.mxu0 0
    %1017 = vmatpush.bf16.msra.mxu0 0
    %1018 = vmatpush.bf16.msra.mxu0 0
    %1019 = vmatpush.bf16.msra.mxu0 0
    %1020 = vmatpush.bf16.msra.mxu0 0
    %1021 = vmatpush.bf16.msra.mxu0 %v965
    %1022 = vmatpush.bf16.msra.mxu0 %v957
    %1023 = vmatmul.bf16.gmra.mxu0 %v991
    %v1024 = vpop.f32.mrf.mxu0
    %v1025 = vadd.f32 0.0, %v1024
    %v1026 = vpop.f32.mrf.mxu0
    %v1027 = vadd.f32 0.0, %v1026
    %1028 = vmatmul.bf16.gmra.mxu0 %v994
    %v1029 = vpop.f32.mrf.mxu0
    %v1030 = vadd.f32 0.0, %v1029
    %v1031 = vpop.f32.mrf.mxu0
    %v1032 = vadd.f32 0.0, %v1031
    %1033 = vdwg.mxu0
    %1034 = vmatpush.bf16.msra.mxu0 0
    %1035 = vmatpush.bf16.msra.mxu0 0
    %1036 = vmatpush.bf16.msra.mxu0 0
    %1037 = vmatpush.bf16.msra.mxu0 0
    %1038 = vmatpush.bf16.msra.mxu0 0
    %1039 = vmatpush.bf16.msra.mxu0 0
    %1040 = vmatpush.bf16.msra.mxu0 %v966
    %1041 = vmatpush.bf16.msra.mxu0 %v958
    %1042 = vmatmul.bf16.gmra.mxu0 %v991
    %v1043 = vpop.f32.mrf.mxu0
    %v1044 = vadd.f32 0.0, %v1043
    %v1045 = vpop.f32.mrf.mxu0
    %v1046 = vadd.f32 0.0, %v1045
    %1047 = vmatmul.bf16.gmra.mxu0 %v994
    %v1048 = vpop.f32.mrf.mxu0
    %v1049 = vadd.f32 0.0, %v1048
    %v1050 = vpop.f32.mrf.mxu0
    %v1051 = vadd.f32 0.0, %v1050
    %1052 = vdwg.mxu0
    %1053 = vmatpush.bf16.msra.mxu0 0
    %1054 = vmatpush.bf16.msra.mxu0 0
    %1055 = vmatpush.bf16.msra.mxu0 0
    %1056 = vmatpush.bf16.msra.mxu0 0
    %1057 = vmatpush.bf16.msra.mxu0 0
    %1058 = vmatpush.bf16.msra.mxu0 0
    %1059 = vmatpush.bf16.msra.mxu0 %v967
    %1060 = vmatpush.bf16.msra.mxu0 %v959
    %1061 = vmatmul.bf16.gmra.mxu0 %v991
    %v1062 = vpop.f32.mrf.mxu0
    %v1063 = vadd.f32 0.0, %v1062
    %v1064 = vpop.f32.mrf.mxu0
    %v1065 = vadd.f32 0.0, %v1064
    %1066 = vmatmul.bf16.gmra.mxu0 %v994
    %v1067 = vpop.f32.mrf.mxu0
    %v1068 = vadd.f32 0.0, %v1067
    %v1069 = vpop.f32.mrf.mxu0
    %v1070 = vadd.f32 0.0, %v1069
    %1071 = vdwg.mxu0
    %1072 = vmatpush.bf16.msra.mxu0 0
    %1073 = vmatpush.bf16.msra.mxu0 0
    %1074 = vmatpush.bf16.msra.mxu0 0
    %1075 = vmatpush.bf16.msra.mxu0 0
    %1076 = vmatpush.bf16.msra.mxu0 0
    %1077 = vmatpush.bf16.msra.mxu0 0
    %1078 = vmatpush.bf16.msra.mxu0 %v968
    %1079 = vmatpush.bf16.msra.mxu0 %v960
    %1080 = vmatmul.bf16.gmra.mxu0 %v991
    %v1081 = vpop.f32.mrf.mxu0
    %v1082 = vadd.f32 0.0, %v1081
    %v1083 = vpop.f32.mrf.mxu0
    %v1084 = vadd.f32 0.0, %v1083
    %1085 = vmatmul.bf16.gmra.mxu0 %v994
    %v1086 = vpop.f32.mrf.mxu0
    %v1087 = vadd.f32 0.0, %v1086
    %v1088 = vpop.f32.mrf.mxu0
    %v1089 = vadd.f32 0.0, %v1088
    %1090 = vdwg.mxu0
    %1091 = vmatpush.bf16.msra.mxu0 0
    %1092 = vmatpush.bf16.msra.mxu0 0
    %1093 = vmatpush.bf16.msra.mxu0 0
    %1094 = vmatpush.bf16.msra.mxu0 0
    %1095 = vmatpush.bf16.msra.mxu0 0
    %1096 = vmatpush.bf16.msra.mxu0 0
    %1097 = vmatpush.bf16.msra.mxu0 %v969
    %1098 = vmatpush.bf16.msra.mxu0 %v961
    %1099 = vmatmul.bf16.gmra.mxu0 %v991
    %v1100 = vpop.f32.mrf.mxu0
    %v1101 = vadd.f32 0.0, %v1100
    %v1102 = vpop.f32.mrf.mxu0
    %v1103 = vadd.f32 0.0, %v1102
    %1104 = vmatmul.bf16.gmra.mxu0 %v994
    %v1105 = vpop.f32.mrf.mxu0
    %v1106 = vadd.f32 0.0, %v1105
    %v1107 = vpop.f32.mrf.mxu0
    %v1108 = vadd.f32 0.0, %v1107
    %1109 = vdwg.mxu0
    %1110 = vmatpush.bf16.msra.mxu0 0
    %1111 = vmatpush.bf16.msra.mxu0 0
    %1112 = vmatpush.bf16.msra.mxu0 0
    %1113 = vmatpush.bf16.msra.mxu0 0
    %1114 = vmatpush.bf16.msra.mxu0 0
    %1115 = vmatpush.bf16.msra.mxu0 0
    %1116 = vmatpush.bf16.msra.mxu0 %v970
    %1117 = vmatpush.bf16.msra.mxu0 %v962
    %1118 = vmatmul.bf16.gmra.mxu0 %v991
    %v1119 = vpop.f32.mrf.mxu0
    %v1120 = vadd.f32 0.0, %v1119
    %v1121 = vpop.f32.mrf.mxu0
    %v1122 = vadd.f32 0.0, %v1121
    %1123 = vmatmul.bf16.gmra.mxu0 %v994
    %v1124 = vpop.f32.mrf.mxu0
    %v1125 = vadd.f32 0.0, %v1124
    %v1126 = vpop.f32.mrf.mxu0
    %v1127 = vadd.f32 0.0, %v1126
    %1128 = vdwg.mxu0
    %1129 = vmatpush.bf16.msra.mxu0 0
    %1130 = vmatpush.bf16.msra.mxu0 0
    %1131 = vmatpush.bf16.msra.mxu0 0
    %1132 = vmatpush.bf16.msra.mxu0 0
    %1133 = vmatpush.bf16.msra.mxu0 0
    %1134 = vmatpush.bf16.msra.mxu0 0
    %1135 = vmatpush.bf16.msra.mxu0 %v971
    %1136 = vmatpush.bf16.msra.mxu0 %v963
    %1137 = vmatmul.bf16.gmra.mxu0 %v991
    %v1138 = vpop.f32.mrf.mxu0
    %v1139 = vadd.f32 0.0, %v1138
    %v1140 = vpop.f32.mrf.mxu0
    %v1141 = vadd.f32 0.0, %v1140
    %1142 = vmatmul.bf16.gmra.mxu0 %v994
    %v1143 = vpop.f32.mrf.mxu0
    %v1144 = vadd.f32 0.0, %v1143
    %v1145 = vpop.f32.mrf.mxu0
    %v1146 = vadd.f32 0.0, %v1145
    %1147 = vdwg.mxu0
    %1148 = vmatpush.bf16.msra.mxu0 0
    %1149 = vmatpush.bf16.msra.mxu0 0
    %1150 = vmatpush.bf16.msra.mxu0 0
    %1151 = vmatpush.bf16.msra.mxu0 0
    %1152 = vmatpush.bf16.msra.mxu0 0
    %1153 = vmatpush.bf16.msra.mxu0 0
    %1154 = vmatpush.bf16.msra.mxu0 %v954
    %1155 = vmatpush.bf16.msra.mxu0 %v936
    %1156 = vmatmul.bf16.gmra.mxu0 %v991
    %v1157 = vpop.f32.mrf.mxu0
    %v1158 = vadd.f32 0.0, %v1157
    %v1159 = vpop.f32.mrf.mxu0
    %v1160 = vadd.f32 0.0, %v1159
    %1161 = vmatmul.bf16.gmra.mxu0 %v994
    %v1162 = vpop.f32.mrf.mxu0
    %v1163 = vadd.f32 0.0, %v1162
    %v1164 = vpop.f32.mrf.mxu0
    %v1165 = vadd.f32 0.0, %v1164
    %1166 = vdwg.mxu0
    %v1167 = vadd.f32 %v743, %v1006
    %v1168 = vadd.f32 %v762, %v1025
    %v1169 = vadd.f32 %v781, %v1044
    %v1170 = vadd.f32 %v800, %v1063
    %v1171 = vadd.f32 %v819, %v1082
    %v1172 = vadd.f32 %v838, %v1101
    %v1173 = vadd.f32 %v857, %v1120
    %v1174 = vadd.f32 %v876, %v1139
    %v1175 = vadd.f32 %v895, %v1158
    %v1176 = vadd.f32 %v745, %v1008
    %v1177 = vadd.f32 %v764, %v1027
    %v1178 = vadd.f32 %v783, %v1046
    %v1179 = vadd.f32 %v802, %v1065
    %v1180 = vadd.f32 %v821, %v1084
    %v1181 = vadd.f32 %v840, %v1103
    %v1182 = vadd.f32 %v859, %v1122
    %v1183 = vadd.f32 %v878, %v1141
    %v1184 = vadd.f32 %v897, %v1160
    %v1185 = vadd.f32 %v748, %v1011
    %v1186 = vadd.f32 %v767, %v1030
    %v1187 = vadd.f32 %v786, %v1049
    %v1188 = vadd.f32 %v805, %v1068
    %v1189 = vadd.f32 %v824, %v1087
    %v1190 = vadd.f32 %v843, %v1106
    %v1191 = vadd.f32 %v862, %v1125
    %v1192 = vadd.f32 %v881, %v1144
    %v1193 = vadd.f32 %v900, %v1163
    %v1194 = vadd.f32 %v750, %v1013
    %v1195 = vadd.f32 %v769, %v1032
    %v1196 = vadd.f32 %v788, %v1051
    %v1197 = vadd.f32 %v807, %v1070
    %v1198 = vadd.f32 %v826, %v1089
    %v1199 = vadd.f32 %v845, %v1108
    %v1200 = vadd.f32 %v864, %v1127
    %v1201 = vadd.f32 %v883, %v1146
    %v1202 = vadd.f32 %v902, %v1165
    %s1203 = scalar_lea.vmem [#allocation6], 48
    %v1204 = vld [vmem:[%s1203] sm:$0xf]
    %v1205 = vld [vmem:[%s1203 + $0x4] sm:$0xf]
    %v1206 = vld [vmem:[%s1203 + $0x8] sm:$0xf]
    %v1207 = vld [vmem:[%s1203 + $0xc] sm:$0xf]
    %v1212 = vunpack.c.l.b16 %v1204
    %v1213 = vunpack.c.l.b16 %v1205
    %v1214 = vunpack.c.l.b16 %v1206
    %v1215 = vunpack.c.l.b16 %v1207
    %v1216 = vpack.c.b16 %v1213, %v1212
    %v1217 = vpack.c.b16 %v1215, %v1214
    %1218 = vrot.lane.b32.xlu0 %v432, 125
    %v1219 = vpop.permute.xlu0 %1218
    %1220 = vrot.lane.b32.xlu0 %v433, 125
    %v1221 = vpop.permute.xlu0 %1220
    %1222 = vrot.lane.b32.xlu0 %v434, 125
    %v1223 = vpop.permute.xlu0 %1222
    %1224 = vrot.lane.b32.xlu0 %v435, 125
    %v1225 = vpop.permute.xlu0 %1224
    %1226 = vrot.lane.b32.xlu0 %v436, 125
    %v1227 = vpop.permute.xlu0 %1226
    %1228 = vrot.lane.b32.xlu0 %v437, 125
    %v1229 = vpop.permute.xlu0 %1228
    %1230 = vrot.lane.b32.xlu0 %v438, 125
    %v1231 = vpop.permute.xlu0 %1230
    %1232 = vrot.lane.b32.xlu0 %v439, 125
    %v1233 = vpop.permute.xlu0 %1232
    %1234 = vrot.lane.b32.xlu0 %v440, 125
    %v1235 = vpop.permute.xlu0 %1234
    %1236 = vrot.lane.b32.xlu0 %v441, 125
    %v1237 = vpop.permute.xlu0 %1236
    %1238 = vrot.lane.b32.xlu0 %v442, 125
    %v1239 = vpop.permute.xlu0 %1238
    %1240 = vrot.lane.b32.xlu0 %v443, 125
    %v1241 = vpop.permute.xlu0 %1240
    %1242 = vrot.lane.b32.xlu0 %v444, 125
    %v1243 = vpop.permute.xlu0 %1242
    %1244 = vrot.lane.b32.xlu0 %v445, 125
    %v1245 = vpop.permute.xlu0 %1244
    %1246 = vrot.lane.b32.xlu0 %v446, 125
    %v1247 = vpop.permute.xlu0 %1246
    %1248 = vrot.lane.b32.xlu0 %v447, 125
    %v1249 = vpop.permute.xlu0 %1248
    %1250 = vrot.lane.b32.xlu0 %v448, 125
    %v1251 = vpop.permute.xlu0 %1250
    %1252 = vrot.lane.b32.xlu0 %v449, 125
    %v1253 = vpop.permute.xlu0 %1252
    %vm1254 = vcmask 1022976
    %v1255 = vsel %vm1254, %v1219, %v1221
    %v1256 = vsel %vm1254, %v1221, %v1223
    %v1257 = vsel %vm1254, %v1223, %v1225
    %v1258 = vsel %vm1254, %v1225, %v1227
    %v1259 = vsel %vm1254, %v1227, %v1229
    %v1260 = vsel %vm1254, %v1229, %v1231
    %v1261 = vsel %vm1254, %v1231, %v1233
    %v1262 = vsel %vm1254, %v1233, %v1235
    %v1263 = vsel %vm1254, %v1237, %v1239
    %v1264 = vsel %vm1254, %v1239, %v1241
    %v1265 = vsel %vm1254, %v1241, %v1243
    %v1266 = vsel %vm1254, %v1243, %v1245
    %v1267 = vsel %vm1254, %v1245, %v1247
    %v1268 = vsel %vm1254, %v1247, %v1249
    %v1269 = vsel %vm1254, %v1249, %v1251
    %v1270 = vsel %vm1254, %v1251, %v1253
    %v1290 = vsel %vm521, %v1216, 0
    %v1293 = vsel %vm521, %v1217, 0
    %1295 = vmatpush.bf16.msra.mxu0 0
    %1296 = vmatpush.bf16.msra.mxu0 0
    %1297 = vmatpush.bf16.msra.mxu0 0
    %1298 = vmatpush.bf16.msra.mxu0 0
    %1299 = vmatpush.bf16.msra.mxu0 0
    %1300 = vmatpush.bf16.msra.mxu0 0
    %1301 = vmatpush.bf16.msra.mxu0 %v1263
    %1302 = vmatpush.bf16.msra.mxu0 %v1255
    %1303 = vmatmul.bf16.gmra.mxu0 %v1290
    %v1304 = vpop.f32.mrf.mxu0
    %v1305 = vadd.f32 0.0, %v1304
    %v1306 = vpop.f32.mrf.mxu0
    %v1307 = vadd.f32 0.0, %v1306
    %1308 = vmatmul.bf16.gmra.mxu0 %v1293
    %v1309 = vpop.f32.mrf.mxu0
    %v1310 = vadd.f32 0.0, %v1309
    %v1311 = vpop.f32.mrf.mxu0
    %v1312 = vadd.f32 0.0, %v1311
    %1313 = vdwg.mxu0
    %1314 = vmatpush.bf16.msra.mxu0 0
    %1315 = vmatpush.bf16.msra.mxu0 0
    %1316 = vmatpush.bf16.msra.mxu0 0
    %1317 = vmatpush.bf16.msra.mxu0 0
    %1318 = vmatpush.bf16.msra.mxu0 0
    %1319 = vmatpush.bf16.msra.mxu0 0
    %1320 = vmatpush.bf16.msra.mxu0 %v1264
    %1321 = vmatpush.bf16.msra.mxu0 %v1256
    %1322 = vmatmul.bf16.gmra.mxu0 %v1290
    %v1323 = vpop.f32.mrf.mxu0
    %v1324 = vadd.f32 0.0, %v1323
    %v1325 = vpop.f32.mrf.mxu0
    %v1326 = vadd.f32 0.0, %v1325
    %1327 = vmatmul.bf16.gmra.mxu0 %v1293
    %v1328 = vpop.f32.mrf.mxu0
    %v1329 = vadd.f32 0.0, %v1328
    %v1330 = vpop.f32.mrf.mxu0
    %v1331 = vadd.f32 0.0, %v1330
    %1332 = vdwg.mxu0
    %1333 = vmatpush.bf16.msra.mxu0 0
    %1334 = vmatpush.bf16.msra.mxu0 0
    %1335 = vmatpush.bf16.msra.mxu0 0
    %1336 = vmatpush.bf16.msra.mxu0 0
    %1337 = vmatpush.bf16.msra.mxu0 0
    %1338 = vmatpush.bf16.msra.mxu0 0
    %1339 = vmatpush.bf16.msra.mxu0 %v1265
    %1340 = vmatpush.bf16.msra.mxu0 %v1257
    %1341 = vmatmul.bf16.gmra.mxu0 %v1290
    %v1342 = vpop.f32.mrf.mxu0
    %v1343 = vadd.f32 0.0, %v1342
    %v1344 = vpop.f32.mrf.mxu0
    %v1345 = vadd.f32 0.0, %v1344
    %1346 = vmatmul.bf16.gmra.mxu0 %v1293
    %v1347 = vpop.f32.mrf.mxu0
    %v1348 = vadd.f32 0.0, %v1347
    %v1349 = vpop.f32.mrf.mxu0
    %v1350 = vadd.f32 0.0, %v1349
    %1351 = vdwg.mxu0
    %1352 = vmatpush.bf16.msra.mxu0 0
    %1353 = vmatpush.bf16.msra.mxu0 0
    %1354 = vmatpush.bf16.msra.mxu0 0
    %1355 = vmatpush.bf16.msra.mxu0 0
    %1356 = vmatpush.bf16.msra.mxu0 0
    %1357 = vmatpush.bf16.msra.mxu0 0
    %1358 = vmatpush.bf16.msra.mxu0 %v1266
    %1359 = vmatpush.bf16.msra.mxu0 %v1258
    %1360 = vmatmul.bf16.gmra.mxu0 %v1290
    %v1361 = vpop.f32.mrf.mxu0
    %v1362 = vadd.f32 0.0, %v1361
    %v1363 = vpop.f32.mrf.mxu0
    %v1364 = vadd.f32 0.0, %v1363
    %1365 = vmatmul.bf16.gmra.mxu0 %v1293
    %v1366 = vpop.f32.mrf.mxu0
    %v1367 = vadd.f32 0.0, %v1366
    %v1368 = vpop.f32.mrf.mxu0
    %v1369 = vadd.f32 0.0, %v1368
    %1370 = vdwg.mxu0
    %1371 = vmatpush.bf16.msra.mxu0 0
    %1372 = vmatpush.bf16.msra.mxu0 0
    %1373 = vmatpush.bf16.msra.mxu0 0
    %1374 = vmatpush.bf16.msra.mxu0 0
    %1375 = vmatpush.bf16.msra.mxu0 0
    %1376 = vmatpush.bf16.msra.mxu0 0
    %1377 = vmatpush.bf16.msra.mxu0 %v1267
    %1378 = vmatpush.bf16.msra.mxu0 %v1259
    %1379 = vmatmul.bf16.gmra.mxu0 %v1290
    %v1380 = vpop.f32.mrf.mxu0
    %v1381 = vadd.f32 0.0, %v1380
    %v1382 = vpop.f32.mrf.mxu0
    %v1383 = vadd.f32 0.0, %v1382
    %1384 = vmatmul.bf16.gmra.mxu0 %v1293
    %v1385 = vpop.f32.mrf.mxu0
    %v1386 = vadd.f32 0.0, %v1385
    %v1387 = vpop.f32.mrf.mxu0
    %v1388 = vadd.f32 0.0, %v1387
    %1389 = vdwg.mxu0
    %1390 = vmatpush.bf16.msra.mxu0 0
    %1391 = vmatpush.bf16.msra.mxu0 0
    %1392 = vmatpush.bf16.msra.mxu0 0
    %1393 = vmatpush.bf16.msra.mxu0 0
    %1394 = vmatpush.bf16.msra.mxu0 0
    %1395 = vmatpush.bf16.msra.mxu0 0
    %1396 = vmatpush.bf16.msra.mxu0 %v1268
    %1397 = vmatpush.bf16.msra.mxu0 %v1260
    %1398 = vmatmul.bf16.gmra.mxu0 %v1290
    %v1399 = vpop.f32.mrf.mxu0
    %v1400 = vadd.f32 0.0, %v1399
    %v1401 = vpop.f32.mrf.mxu0
    %v1402 = vadd.f32 0.0, %v1401
    %1403 = vmatmul.bf16.gmra.mxu0 %v1293
    %v1404 = vpop.f32.mrf.mxu0
    %v1405 = vadd.f32 0.0, %v1404
    %v1406 = vpop.f32.mrf.mxu0
    %v1407 = vadd.f32 0.0, %v1406
    %1408 = vdwg.mxu0
    %1409 = vmatpush.bf16.msra.mxu0 0
    %1410 = vmatpush.bf16.msra.mxu0 0
    %1411 = vmatpush.bf16.msra.mxu0 0
    %1412 = vmatpush.bf16.msra.mxu0 0
    %1413 = vmatpush.bf16.msra.mxu0 0
    %1414 = vmatpush.bf16.msra.mxu0 0
    %1415 = vmatpush.bf16.msra.mxu0 %v1269
    %1416 = vmatpush.bf16.msra.mxu0 %v1261
    %1417 = vmatmul.bf16.gmra.mxu0 %v1290
    %v1418 = vpop.f32.mrf.mxu0
    %v1419 = vadd.f32 0.0, %v1418
    %v1420 = vpop.f32.mrf.mxu0
    %v1421 = vadd.f32 0.0, %v1420
    %1422 = vmatmul.bf16.gmra.mxu0 %v1293
    %v1423 = vpop.f32.mrf.mxu0
    %v1424 = vadd.f32 0.0, %v1423
    %v1425 = vpop.f32.mrf.mxu0
    %v1426 = vadd.f32 0.0, %v1425
    %1427 = vdwg.mxu0
    %1428 = vmatpush.bf16.msra.mxu0 0
    %1429 = vmatpush.bf16.msra.mxu0 0
    %1430 = vmatpush.bf16.msra.mxu0 0
    %1431 = vmatpush.bf16.msra.mxu0 0
    %1432 = vmatpush.bf16.msra.mxu0 0
    %1433 = vmatpush.bf16.msra.mxu0 0
    %1434 = vmatpush.bf16.msra.mxu0 %v1270
    %1435 = vmatpush.bf16.msra.mxu0 %v1262
    %1436 = vmatmul.bf16.gmra.mxu0 %v1290
    %v1437 = vpop.f32.mrf.mxu0
    %v1438 = vadd.f32 0.0, %v1437
    %v1439 = vpop.f32.mrf.mxu0
    %v1440 = vadd.f32 0.0, %v1439
    %1441 = vmatmul.bf16.gmra.mxu0 %v1293
    %v1442 = vpop.f32.mrf.mxu0
    %v1443 = vadd.f32 0.0, %v1442
    %v1444 = vpop.f32.mrf.mxu0
    %v1445 = vadd.f32 0.0, %v1444
    %1446 = vdwg.mxu0
    %1447 = vmatpush.bf16.msra.mxu0 0
    %1448 = vmatpush.bf16.msra.mxu0 0
    %1449 = vmatpush.bf16.msra.mxu0 0
    %1450 = vmatpush.bf16.msra.mxu0 0
    %1451 = vmatpush.bf16.msra.mxu0 0
    %1452 = vmatpush.bf16.msra.mxu0 0
    %1453 = vmatpush.bf16.msra.mxu0 %v1253
    %1454 = vmatpush.bf16.msra.mxu0 %v1235
    %1455 = vmatmul.bf16.gmra.mxu0 %v1290
    %v1456 = vpop.f32.mrf.mxu0
    %v1457 = vadd.f32 0.0, %v1456
    %v1458 = vpop.f32.mrf.mxu0
    %v1459 = vadd.f32 0.0, %v1458
    %1460 = vmatmul.bf16.gmra.mxu0 %v1293
    %v1461 = vpop.f32.mrf.mxu0
    %v1462 = vadd.f32 0.0, %v1461
    %v1463 = vpop.f32.mrf.mxu0
    %v1464 = vadd.f32 0.0, %v1463
    %1465 = vdwg.mxu0
    %v1466 = vadd.f32 %v1167, %v1305
    %v1467 = vadd.f32 %v1168, %v1324
    %v1468 = vadd.f32 %v1169, %v1343
    %v1469 = vadd.f32 %v1170, %v1362
    %v1470 = vadd.f32 %v1171, %v1381
    %v1471 = vadd.f32 %v1172, %v1400
    %v1472 = vadd.f32 %v1173, %v1419
    %v1473 = vadd.f32 %v1174, %v1438
    %v1474 = vadd.f32 %v1175, %v1457
    %v1475 = vadd.f32 %v1176, %v1307
    %v1476 = vadd.f32 %v1177, %v1326
    %v1477 = vadd.f32 %v1178, %v1345
    %v1478 = vadd.f32 %v1179, %v1364
    %v1479 = vadd.f32 %v1180, %v1383
    %v1480 = vadd.f32 %v1181, %v1402
    %v1481 = vadd.f32 %v1182, %v1421
    %v1482 = vadd.f32 %v1183, %v1440
    %v1483 = vadd.f32 %v1184, %v1459
    %v1484 = vadd.f32 %v1185, %v1310
    %v1485 = vadd.f32 %v1186, %v1329
    %v1486 = vadd.f32 %v1187, %v1348
    %v1487 = vadd.f32 %v1188, %v1367
    %v1488 = vadd.f32 %v1189, %v1386
    %v1489 = vadd.f32 %v1190, %v1405
    %v1490 = vadd.f32 %v1191, %v1424
    %v1491 = vadd.f32 %v1192, %v1443
    %v1492 = vadd.f32 %v1193, %v1462
    %v1493 = vadd.f32 %v1194, %v1312
    %v1494 = vadd.f32 %v1195, %v1331
    %v1495 = vadd.f32 %v1196, %v1350
    %v1496 = vadd.f32 %v1197, %v1369
    %v1497 = vadd.f32 %v1198, %v1388
    %v1498 = vadd.f32 %v1199, %v1407
    %v1499 = vadd.f32 %v1200, %v1426
    %v1500 = vadd.f32 %v1201, %v1445
    %v1501 = vadd.f32 %v1202, %v1464
    %s1502 = scalar_lea.vmem [#allocation6], 64
    %v1503 = vld [vmem:[%s1502] sm:$0xf]
    %v1504 = vld [vmem:[%s1502 + $0x4] sm:$0xf]
    %v1505 = vld [vmem:[%s1502 + $0x8] sm:$0xf]
    %v1506 = vld [vmem:[%s1502 + $0xc] sm:$0xf]
    %v1511 = vunpack.c.l.b16 %v1503
    %v1512 = vunpack.c.l.b16 %v1504
    %v1513 = vunpack.c.l.b16 %v1505
    %v1514 = vunpack.c.l.b16 %v1506
    %v1515 = vpack.c.b16 %v1512, %v1511
    %v1516 = vpack.c.b16 %v1514, %v1513
    %1517 = vrot.lane.b32.xlu0 %v432, 124
    %v1518 = vpop.permute.xlu0 %1517
    %1519 = vrot.lane.b32.xlu0 %v433, 124
    %v1520 = vpop.permute.xlu0 %1519
    %1521 = vrot.lane.b32.xlu0 %v434, 124
    %v1522 = vpop.permute.xlu0 %1521
    %1523 = vrot.lane.b32.xlu0 %v435, 124
    %v1524 = vpop.permute.xlu0 %1523
    %1525 = vrot.lane.b32.xlu0 %v436, 124
    %v1526 = vpop.permute.xlu0 %1525
    %1527 = vrot.lane.b32.xlu0 %v437, 124
    %v1528 = vpop.permute.xlu0 %1527
    %1529 = vrot.lane.b32.xlu0 %v438, 124
    %v1530 = vpop.permute.xlu0 %1529
    %1531 = vrot.lane.b32.xlu0 %v439, 124
    %v1532 = vpop.permute.xlu0 %1531
    %1533 = vrot.lane.b32.xlu0 %v440, 124
    %v1534 = vpop.permute.xlu0 %1533
    %1535 = vrot.lane.b32.xlu0 %v441, 124
    %v1536 = vpop.permute.xlu0 %1535
    %1537 = vrot.lane.b32.xlu0 %v442, 124
    %v1538 = vpop.permute.xlu0 %1537
    %1539 = vrot.lane.b32.xlu0 %v443, 124
    %v1540 = vpop.permute.xlu0 %1539
    %1541 = vrot.lane.b32.xlu0 %v444, 124
    %v1542 = vpop.permute.xlu0 %1541
    %1543 = vrot.lane.b32.xlu0 %v445, 124
    %v1544 = vpop.permute.xlu0 %1543
    %1545 = vrot.lane.b32.xlu0 %v446, 124
    %v1546 = vpop.permute.xlu0 %1545
    %1547 = vrot.lane.b32.xlu0 %v447, 124
    %v1548 = vpop.permute.xlu0 %1547
    %1549 = vrot.lane.b32.xlu0 %v448, 124
    %v1550 = vpop.permute.xlu0 %1549
    %1551 = vrot.lane.b32.xlu0 %v449, 124
    %v1552 = vpop.permute.xlu0 %1551
    %vm1553 = vcmask 1014784
    %v1554 = vsel %vm1553, %v1518, %v1520
    %v1555 = vsel %vm1553, %v1520, %v1522
    %v1556 = vsel %vm1553, %v1522, %v1524
    %v1557 = vsel %vm1553, %v1524, %v1526
    %v1558 = vsel %vm1553, %v1526, %v1528
    %v1559 = vsel %vm1553, %v1528, %v1530
    %v1560 = vsel %vm1553, %v1530, %v1532
    %v1561 = vsel %vm1553, %v1532, %v1534
    %v1562 = vsel %vm1553, %v1536, %v1538
    %v1563 = vsel %vm1553, %v1538, %v1540
    %v1564 = vsel %vm1553, %v1540, %v1542
    %v1565 = vsel %vm1553, %v1542, %v1544
    %v1566 = vsel %vm1553, %v1544, %v1546
    %v1567 = vsel %vm1553, %v1546, %v1548
    %v1568 = vsel %vm1553, %v1548, %v1550
    %v1569 = vsel %vm1553, %v1550, %v1552
    %v1589 = vsel %vm521, %v1515, 0
    %v1592 = vsel %vm521, %v1516, 0
    %1594 = vmatpush.bf16.msra.mxu0 0
    %1595 = vmatpush.bf16.msra.mxu0 0
    %1596 = vmatpush.bf16.msra.mxu0 0
    %1597 = vmatpush.bf16.msra.mxu0 0
    %1598 = vmatpush.bf16.msra.mxu0 0
    %1599 = vmatpush.bf16.msra.mxu0 0
    %1600 = vmatpush.bf16.msra.mxu0 %v1562
    %1601 = vmatpush.bf16.msra.mxu0 %v1554
    %1602 = vmatmul.bf16.gmra.mxu0 %v1589
    %v1603 = vpop.f32.mrf.mxu0
    %v1604 = vadd.f32 0.0, %v1603
    %v1605 = vpop.f32.mrf.mxu0
    %v1606 = vadd.f32 0.0, %v1605
    %1607 = vmatmul.bf16.gmra.mxu0 %v1592
    %v1608 = vpop.f32.mrf.mxu0
    %v1609 = vadd.f32 0.0, %v1608
    %v1610 = vpop.f32.mrf.mxu0
    %v1611 = vadd.f32 0.0, %v1610
    %1612 = vdwg.mxu0
    %1613 = vmatpush.bf16.msra.mxu0 0
    %1614 = vmatpush.bf16.msra.mxu0 0
    %1615 = vmatpush.bf16.msra.mxu0 0
    %1616 = vmatpush.bf16.msra.mxu0 0
    %1617 = vmatpush.bf16.msra.mxu0 0
    %1618 = vmatpush.bf16.msra.mxu0 0
    %1619 = vmatpush.bf16.msra.mxu0 %v1563
    %1620 = vmatpush.bf16.msra.mxu0 %v1555
    %1621 = vmatmul.bf16.gmra.mxu0 %v1589
    %v1622 = vpop.f32.mrf.mxu0
    %v1623 = vadd.f32 0.0, %v1622
    %v1624 = vpop.f32.mrf.mxu0
    %v1625 = vadd.f32 0.0, %v1624
    %1626 = vmatmul.bf16.gmra.mxu0 %v1592
    %v1627 = vpop.f32.mrf.mxu0
    %v1628 = vadd.f32 0.0, %v1627
    %v1629 = vpop.f32.mrf.mxu0
    %v1630 = vadd.f32 0.0, %v1629
    %1631 = vdwg.mxu0
    %1632 = vmatpush.bf16.msra.mxu0 0
    %1633 = vmatpush.bf16.msra.mxu0 0
    %1634 = vmatpush.bf16.msra.mxu0 0
    %1635 = vmatpush.bf16.msra.mxu0 0
    %1636 = vmatpush.bf16.msra.mxu0 0
    %1637 = vmatpush.bf16.msra.mxu0 0
    %1638 = vmatpush.bf16.msra.mxu0 %v1564
    %1639 = vmatpush.bf16.msra.mxu0 %v1556
    %1640 = vmatmul.bf16.gmra.mxu0 %v1589
    %v1641 = vpop.f32.mrf.mxu0
    %v1642 = vadd.f32 0.0, %v1641
    %v1643 = vpop.f32.mrf.mxu0
    %v1644 = vadd.f32 0.0, %v1643
    %1645 = vmatmul.bf16.gmra.mxu0 %v1592
    %v1646 = vpop.f32.mrf.mxu0
    %v1647 = vadd.f32 0.0, %v1646
    %v1648 = vpop.f32.mrf.mxu0
    %v1649 = vadd.f32 0.0, %v1648
    %1650 = vdwg.mxu0
    %1651 = vmatpush.bf16.msra.mxu0 0
    %1652 = vmatpush.bf16.msra.mxu0 0
    %1653 = vmatpush.bf16.msra.mxu0 0
    %1654 = vmatpush.bf16.msra.mxu0 0
    %1655 = vmatpush.bf16.msra.mxu0 0
    %1656 = vmatpush.bf16.msra.mxu0 0
    %1657 = vmatpush.bf16.msra.mxu0 %v1565
    %1658 = vmatpush.bf16.msra.mxu0 %v1557
    %1659 = vmatmul.bf16.gmra.mxu0 %v1589
    %v1660 = vpop.f32.mrf.mxu0
    %v1661 = vadd.f32 0.0, %v1660
    %v1662 = vpop.f32.mrf.mxu0
    %v1663 = vadd.f32 0.0, %v1662
    %1664 = vmatmul.bf16.gmra.mxu0 %v1592
    %v1665 = vpop.f32.mrf.mxu0
    %v1666 = vadd.f32 0.0, %v1665
    %v1667 = vpop.f32.mrf.mxu0
    %v1668 = vadd.f32 0.0, %v1667
    %1669 = vdwg.mxu0
    %1670 = vmatpush.bf16.msra.mxu0 0
    %1671 = vmatpush.bf16.msra.mxu0 0
    %1672 = vmatpush.bf16.msra.mxu0 0
    %1673 = vmatpush.bf16.msra.mxu0 0
    %1674 = vmatpush.bf16.msra.mxu0 0
    %1675 = vmatpush.bf16.msra.mxu0 0
    %1676 = vmatpush.bf16.msra.mxu0 %v1566
    %1677 = vmatpush.bf16.msra.mxu0 %v1558
    %1678 = vmatmul.bf16.gmra.mxu0 %v1589
    %v1679 = vpop.f32.mrf.mxu0
    %v1680 = vadd.f32 0.0, %v1679
    %v1681 = vpop.f32.mrf.mxu0
    %v1682 = vadd.f32 0.0, %v1681
    %1683 = vmatmul.bf16.gmra.mxu0 %v1592
    %v1684 = vpop.f32.mrf.mxu0
    %v1685 = vadd.f32 0.0, %v1684
    %v1686 = vpop.f32.mrf.mxu0
    %v1687 = vadd.f32 0.0, %v1686
    %1688 = vdwg.mxu0
    %1689 = vmatpush.bf16.msra.mxu0 0
    %1690 = vmatpush.bf16.msra.mxu0 0
    %1691 = vmatpush.bf16.msra.mxu0 0
    %1692 = vmatpush.bf16.msra.mxu0 0
    %1693 = vmatpush.bf16.msra.mxu0 0
    %1694 = vmatpush.bf16.msra.mxu0 0
    %1695 = vmatpush.bf16.msra.mxu0 %v1567
    %1696 = vmatpush.bf16.msra.mxu0 %v1559
    %1697 = vmatmul.bf16.gmra.mxu0 %v1589
    %v1698 = vpop.f32.mrf.mxu0
    %v1699 = vadd.f32 0.0, %v1698
    %v1700 = vpop.f32.mrf.mxu0
    %v1701 = vadd.f32 0.0, %v1700
    %1702 = vmatmul.bf16.gmra.mxu0 %v1592
    %v1703 = vpop.f32.mrf.mxu0
    %v1704 = vadd.f32 0.0, %v1703
    %v1705 = vpop.f32.mrf.mxu0
    %v1706 = vadd.f32 0.0, %v1705
    %1707 = vdwg.mxu0
    %1708 = vmatpush.bf16.msra.mxu0 0
    %1709 = vmatpush.bf16.msra.mxu0 0
    %1710 = vmatpush.bf16.msra.mxu0 0
    %1711 = vmatpush.bf16.msra.mxu0 0
    %1712 = vmatpush.bf16.msra.mxu0 0
    %1713 = vmatpush.bf16.msra.mxu0 0
    %1714 = vmatpush.bf16.msra.mxu0 %v1568
    %1715 = vmatpush.bf16.msra.mxu0 %v1560
    %1716 = vmatmul.bf16.gmra.mxu0 %v1589
    %v1717 = vpop.f32.mrf.mxu0
    %v1718 = vadd.f32 0.0, %v1717
    %v1719 = vpop.f32.mrf.mxu0
    %v1720 = vadd.f32 0.0, %v1719
    %1721 = vmatmul.bf16.gmra.mxu0 %v1592
    %v1722 = vpop.f32.mrf.mxu0
    %v1723 = vadd.f32 0.0, %v1722
    %v1724 = vpop.f32.mrf.mxu0
    %v1725 = vadd.f32 0.0, %v1724
    %1726 = vdwg.mxu0
    %1727 = vmatpush.bf16.msra.mxu0 0
    %1728 = vmatpush.bf16.msra.mxu0 0
    %1729 = vmatpush.bf16.msra.mxu0 0
    %1730 = vmatpush.bf16.msra.mxu0 0
    %1731 = vmatpush.bf16.msra.mxu0 0
    %1732 = vmatpush.bf16.msra.mxu0 0
    %1733 = vmatpush.bf16.msra.mxu0 %v1569
    %1734 = vmatpush.bf16.msra.mxu0 %v1561
    %1735 = vmatmul.bf16.gmra.mxu0 %v1589
    %v1736 = vpop.f32.mrf.mxu0
    %v1737 = vadd.f32 0.0, %v1736
    %v1738 = vpop.f32.mrf.mxu0
    %v1739 = vadd.f32 0.0, %v1738
    %1740 = vmatmul.bf16.gmra.mxu0 %v1592
    %v1741 = vpop.f32.mrf.mxu0
    %v1742 = vadd.f32 0.0, %v1741
    %v1743 = vpop.f32.mrf.mxu0
    %v1744 = vadd.f32 0.0, %v1743
    %1745 = vdwg.mxu0
    %1746 = vmatpush.bf16.msra.mxu0 0
    %1747 = vmatpush.bf16.msra.mxu0 0
    %1748 = vmatpush.bf16.msra.mxu0 0
    %1749 = vmatpush.bf16.msra.mxu0 0
    %1750 = vmatpush.bf16.msra.mxu0 0
    %1751 = vmatpush.bf16.msra.mxu0 0
    %1752 = vmatpush.bf16.msra.mxu0 %v1552
    %1753 = vmatpush.bf16.msra.mxu0 %v1534
    %1754 = vmatmul.bf16.gmra.mxu0 %v1589
    %v1755 = vpop.f32.mrf.mxu0
    %v1756 = vadd.f32 0.0, %v1755
    %v1757 = vpop.f32.mrf.mxu0
    %v1758 = vadd.f32 0.0, %v1757
    %1759 = vmatmul.bf16.gmra.mxu0 %v1592
    %v1760 = vpop.f32.mrf.mxu0
    %v1761 = vadd.f32 0.0, %v1760
    %v1762 = vpop.f32.mrf.mxu0
    %v1763 = vadd.f32 0.0, %v1762
    %1764 = vdwg.mxu0
    %v1765 = vadd.f32 %v1466, %v1604
    %v1766 = vadd.f32 %v1467, %v1623
    %v1767 = vadd.f32 %v1468, %v1642
    %v1768 = vadd.f32 %v1469, %v1661
    %v1769 = vadd.f32 %v1470, %v1680
    %v1770 = vadd.f32 %v1471, %v1699
    %v1771 = vadd.f32 %v1472, %v1718
    %v1772 = vadd.f32 %v1473, %v1737
    %v1773 = vadd.f32 %v1474, %v1756
    %v1774 = vadd.f32 %v1475, %v1606
    %v1775 = vadd.f32 %v1476, %v1625
    %v1776 = vadd.f32 %v1477, %v1644
    %v1777 = vadd.f32 %v1478, %v1663
    %v1778 = vadd.f32 %v1479, %v1682
    %v1779 = vadd.f32 %v1480, %v1701
    %v1780 = vadd.f32 %v1481, %v1720
    %v1781 = vadd.f32 %v1482, %v1739
    %v1782 = vadd.f32 %v1483, %v1758
    %v1783 = vadd.f32 %v1484, %v1609
    %v1784 = vadd.f32 %v1485, %v1628
    %v1785 = vadd.f32 %v1486, %v1647
    %v1786 = vadd.f32 %v1487, %v1666
    %v1787 = vadd.f32 %v1488, %v1685
    %v1788 = vadd.f32 %v1489, %v1704
    %v1789 = vadd.f32 %v1490, %v1723
    %v1790 = vadd.f32 %v1491, %v1742
    %v1791 = vadd.f32 %v1492, %v1761
    %v1792 = vadd.f32 %v1493, %v1611
    %v1793 = vadd.f32 %v1494, %v1630
    %v1794 = vadd.f32 %v1495, %v1649
    %v1795 = vadd.f32 %v1496, %v1668
    %v1796 = vadd.f32 %v1497, %v1687
    %v1797 = vadd.f32 %v1498, %v1706
    %v1798 = vadd.f32 %v1499, %v1725
    %v1799 = vadd.f32 %v1500, %v1744
    %v1800 = vadd.f32 %v1501, %v1763
    %v1801 = vld [vmem:[%s2] sm:$0xff]
    %v1802 = vld [vmem:[%s2 + $0x8] sm:$0xff]
    %v1803 = vld [vmem:[%s2 + $0x10] sm:$0xff]
    %v1804 = vld [vmem:[%s2 + $0x18] sm:$0xff]
    %1806 = vset.pattern.permute.xlu0 0
    %1807 = vperm.xlu0 %1806, %v1801
    %v1808 = vpop.permute.xlu0 %1807
    %1811 = vset.pattern.permute.xlu0 0
    %1812 = vperm.xlu0 %1811, %v1802
    %v1813 = vpop.permute.xlu0 %1812
    %1816 = vset.pattern.permute.xlu0 0
    %1817 = vperm.xlu0 %1816, %v1803
    %v1818 = vpop.permute.xlu0 %1817
    %1821 = vset.pattern.permute.xlu0 0
    %1822 = vperm.xlu0 %1821, %v1804
    %v1823 = vpop.permute.xlu0 %1822
    %v1825 = vadd.f32 %v1765, %v1808
    %v1826 = vadd.f32 %v1766, %v1808
    %v1827 = vadd.f32 %v1767, %v1808
    %v1828 = vadd.f32 %v1768, %v1808
    %v1829 = vadd.f32 %v1769, %v1808
    %v1830 = vadd.f32 %v1770, %v1808
    %v1831 = vadd.f32 %v1771, %v1808
    %v1832 = vadd.f32 %v1772, %v1808
    %v1833 = vadd.f32 %v1773, %v1808
    %v1834 = vadd.f32 %v1774, %v1813
    %v1835 = vadd.f32 %v1775, %v1813
    %v1836 = vadd.f32 %v1776, %v1813
    %v1837 = vadd.f32 %v1777, %v1813
    %v1838 = vadd.f32 %v1778, %v1813
    %v1839 = vadd.f32 %v1779, %v1813
    %v1840 = vadd.f32 %v1780, %v1813
    %v1841 = vadd.f32 %v1781, %v1813
    %v1842 = vadd.f32 %v1782, %v1813
    %v1843 = vadd.f32 %v1783, %v1818
    %v1844 = vadd.f32 %v1784, %v1818
    %v1845 = vadd.f32 %v1785, %v1818
    %v1846 = vadd.f32 %v1786, %v1818
    %v1847 = vadd.f32 %v1787, %v1818
    %v1848 = vadd.f32 %v1788, %v1818
    %v1849 = vadd.f32 %v1789, %v1818
    %v1850 = vadd.f32 %v1790, %v1818
    %v1851 = vadd.f32 %v1791, %v1818
    %v1852 = vadd.f32 %v1792, %v1823
    %v1853 = vadd.f32 %v1793, %v1823
    %v1854 = vadd.f32 %v1794, %v1823
    %v1855 = vadd.f32 %v1795, %v1823
    %v1856 = vadd.f32 %v1796, %v1823
    %v1857 = vadd.f32 %v1797, %v1823
    %v1858 = vadd.f32 %v1798, %v1823
    %v1859 = vadd.f32 %v1799, %v1823
    %v1860 = vadd.f32 %v1800, %v1823
    %v1861 = vmax.f32 %v1825, 0.0
    %v1862 = vmax.f32 %v1826, 0.0
    %v1863 = vmax.f32 %v1834, 0.0
    %v1864 = vmax.f32 %v1835, 0.0
    %v1865 = vmax.f32 %v1843, 0.0
    %v1866 = vmax.f32 %v1844, 0.0
    %v1867 = vmax.f32 %v1852, 0.0
    %v1868 = vmax.f32 %v1853, 0.0
    %v1869 = vpack.c.bf16 %v1862, %v1861
    %v1870 = vpack.c.bf16 %v1864, %v1863
    %v1871 = vpack.c.bf16 %v1866, %v1865
    %v1872 = vpack.c.bf16 %v1868, %v1867
    %1877 = vrot.lane.b32.xlu0 %v1869, 2
    %v1878 = vpop.permute.xlu0 %1877
    %1879 = vrot.lane.b32.xlu0 %v1870, 2
    %v1880 = vpop.permute.xlu0 %1879
    %1881 = vrot.lane.b32.xlu0 %v1871, 2
    %v1882 = vpop.permute.xlu0 %1881
    %1883 = vrot.lane.b32.xlu0 %v1872, 2
    %v1884 = vpop.permute.xlu0 %1883
    %v1885 = vrot.slane %v1878, 4
    %v1886 = vrot.slane %v1880, 4
    %v1887 = vrot.slane %v1882, 4
    %v1888 = vrot.slane %v1884, 4
    %v1889 = vsel %vm130, %v1885, %v1878
    %v1890 = vsel %vm130, %v1886, %v1880
    %v1891 = vsel %vm130, %v1887, %v1882
    %v1892 = vsel %vm130, %v1888, %v1884
    %1901 = vst.msk [vmem:[#allocation2] sm:$0xff] %vm145, %v1889
    %1902 = vst.msk [vmem:[#allocation2 + $0x8] sm:$0xf] %vm69, %v1885
    %1903 = vst.msk [vmem:[#allocation2 + $0x24] sm:$0xff] %vm145, %v1890
    %1904 = vst.msk [vmem:[#allocation2 + $0x2c] sm:$0xf] %vm69, %v1886
    %1905 = vst.msk [vmem:[#allocation2 + $0x48] sm:$0xff] %vm145, %v1891
    %1906 = vst.msk [vmem:[#allocation2 + $0x50] sm:$0xf] %vm69, %v1887
    %1907 = vst.msk [vmem:[#allocation2 + $0x6c] sm:$0xff] %vm145, %v1892
    %1908 = vst.msk [vmem:[#allocation2 + $0x74] sm:$0xf] %vm69, %v1888
    %v1909 = vmax.f32 %v1827, 0.0
    %v1910 = vmax.f32 %v1828, 0.0
    %v1911 = vmax.f32 %v1829, 0.0
    %v1912 = vmax.f32 %v1836, 0.0
    %v1913 = vmax.f32 %v1837, 0.0
    %v1914 = vmax.f32 %v1838, 0.0
    %v1915 = vmax.f32 %v1845, 0.0
    %v1916 = vmax.f32 %v1846, 0.0
    %v1917 = vmax.f32 %v1847, 0.0
    %v1918 = vmax.f32 %v1854, 0.0
    %v1919 = vmax.f32 %v1855, 0.0
    %v1920 = vmax.f32 %v1856, 0.0
    %v1921 = vpack.c.bf16 %v1910, %v1909
    %v1922 = vpack.c.bf16 %v1911, %v1911
    %v1923 = vpack.c.bf16 %v1913, %v1912
    %v1924 = vpack.c.bf16 %v1914, %v1914
    %v1925 = vpack.c.bf16 %v1916, %v1915
    %v1926 = vpack.c.bf16 %v1917, %v1917
    %v1927 = vpack.c.bf16 %v1919, %v1918
    %v1928 = vpack.c.bf16 %v1920, %v1920
    %1937 = vrot.lane.b32.xlu0 %v1921, 2
    %v1938 = vpop.permute.xlu0 %1937
    %1939 = vrot.lane.b32.xlu0 %v1922, 2
    %v1940 = vpop.permute.xlu0 %1939
    %1941 = vrot.lane.b32.xlu0 %v1923, 2
    %v1942 = vpop.permute.xlu0 %1941
    %1943 = vrot.lane.b32.xlu0 %v1924, 2
    %v1944 = vpop.permute.xlu0 %1943
    %1945 = vrot.lane.b32.xlu0 %v1925, 2
    %v1946 = vpop.permute.xlu0 %1945
    %1947 = vrot.lane.b32.xlu0 %v1926, 2
    %v1948 = vpop.permute.xlu0 %1947
    %1949 = vrot.lane.b32.xlu0 %v1927, 2
    %v1950 = vpop.permute.xlu0 %1949
    %1951 = vrot.lane.b32.xlu0 %v1928, 2
    %v1952 = vpop.permute.xlu0 %1951
    %v1953 = vrot.slane %v1938, 4
    %v1954 = vrot.slane %v1942, 4
    %v1955 = vrot.slane %v1946, 4
    %v1956 = vrot.slane %v1950, 4
    %v1957 = vsel %vm130, %v1953, %v1938
    %v1958 = vsel %vm130, %v1953, %v1940
    %v1959 = vsel %vm130, %v1954, %v1942
    %v1960 = vsel %vm130, %v1954, %v1944
    %v1961 = vsel %vm130, %v1955, %v1946
    %v1962 = vsel %vm130, %v1955, %v1948
    %v1963 = vsel %vm130, %v1956, %v1950
    %v1964 = vsel %vm130, %v1956, %v1952
    %1973 = vst.msk [vmem:[#allocation2 + $0x8] sm:$0xff] %vm205, %v1957
    %1974 = vst.msk [vmem:[#allocation2 + $0x10] sm:$0xf] %vm207, %v1958
    %1975 = vst.msk [vmem:[#allocation2 + $0x2c] sm:$0xff] %vm205, %v1959
    %1976 = vst.msk [vmem:[#allocation2 + $0x34] sm:$0xf] %vm207, %v1960
    %1977 = vst.msk [vmem:[#allocation2 + $0x50] sm:$0xff] %vm205, %v1961
    %1978 = vst.msk [vmem:[#allocation2 + $0x58] sm:$0xf] %vm207, %v1962
    %1979 = vst.msk [vmem:[#allocation2 + $0x74] sm:$0xff] %vm205, %v1963
    %1980 = vst.msk [vmem:[#allocation2 + $0x7c] sm:$0xf] %vm207, %v1964
    %v1981 = vmax.f32 %v1830, 0.0
    %v1982 = vmax.f32 %v1831, 0.0
    %v1983 = vmax.f32 %v1839, 0.0
    %v1984 = vmax.f32 %v1840, 0.0
    %v1985 = vmax.f32 %v1848, 0.0
    %v1986 = vmax.f32 %v1849, 0.0
    %v1987 = vmax.f32 %v1857, 0.0
    %v1988 = vmax.f32 %v1858, 0.0
    %v1989 = vpack.c.bf16 %v1981, %v1911
    %v1990 = vpack.c.bf16 %v1982, %v1982
    %v1991 = vpack.c.bf16 %v1983, %v1914
    %v1992 = vpack.c.bf16 %v1984, %v1984
    %v1993 = vpack.c.bf16 %v1985, %v1917
    %v1994 = vpack.c.bf16 %v1986, %v1986
    %v1995 = vpack.c.bf16 %v1987, %v1920
    %v1996 = vpack.c.bf16 %v1988, %v1988
    %2005 = vrot.lane.b32.xlu0 %v1989, 2
    %v2006 = vpop.permute.xlu0 %2005
    %2007 = vrot.lane.b32.xlu0 %v1990, 2
    %v2008 = vpop.permute.xlu0 %2007
    %2009 = vrot.lane.b32.xlu0 %v1991, 2
    %v2010 = vpop.permute.xlu0 %2009
    %2011 = vrot.lane.b32.xlu0 %v1992, 2
    %v2012 = vpop.permute.xlu0 %2011
    %2013 = vrot.lane.b32.xlu0 %v1993, 2
    %v2014 = vpop.permute.xlu0 %2013
    %2015 = vrot.lane.b32.xlu0 %v1994, 2
    %v2016 = vpop.permute.xlu0 %2015
    %2017 = vrot.lane.b32.xlu0 %v1995, 2
    %v2018 = vpop.permute.xlu0 %2017
    %2019 = vrot.lane.b32.xlu0 %v1996, 2
    %v2020 = vpop.permute.xlu0 %2019
    %v2021 = vrot.slane %v2006, 4
    %v2022 = vrot.slane %v2010, 4
    %v2023 = vrot.slane %v2014, 4
    %v2024 = vrot.slane %v2018, 4
    %v2025 = vsel %vm130, %v2021, %v2006
    %v2026 = vsel %vm130, %v2021, %v2008
    %v2027 = vsel %vm130, %v2022, %v2010
    %v2028 = vsel %vm130, %v2022, %v2012
    %v2029 = vsel %vm130, %v2023, %v2014
    %v2030 = vsel %vm130, %v2023, %v2016
    %v2031 = vsel %vm130, %v2024, %v2018
    %v2032 = vsel %vm130, %v2024, %v2020
    %2041 = vst.msk [vmem:[#allocation2 + $0x10] sm:$0xff] %vm266, %v2025
    %2042 = vst.msk [vmem:[#allocation2 + $0x18] sm:$0xf] %vm268, %v2026
    %2043 = vst.msk [vmem:[#allocation2 + $0x34] sm:$0xff] %vm266, %v2027
    %2044 = vst.msk [vmem:[#allocation2 + $0x3c] sm:$0xf] %vm268, %v2028
    %2045 = vst.msk [vmem:[#allocation2 + $0x58] sm:$0xff] %vm266, %v2029
    %2046 = vst.msk [vmem:[#allocation2 + $0x60] sm:$0xf] %vm268, %v2030
    %2047 = vst.msk [vmem:[#allocation2 + $0x7c] sm:$0xff] %vm266, %v2031
    %2048 = vst.msk [vmem:[#allocation2 + $0x84] sm:$0xf] %vm268, %v2032
    %v2049 = vmax.f32 %v1832, 0.0
    %v2050 = vmax.f32 %v1833, 0.0
    %v2051 = vmax.f32 %v1841, 0.0
    %v2052 = vmax.f32 %v1842, 0.0
    %v2053 = vmax.f32 %v1850, 0.0
    %v2054 = vmax.f32 %v1851, 0.0
    %v2055 = vmax.f32 %v1859, 0.0
    %v2056 = vmax.f32 %v1860, 0.0
    %v2057 = vpack.c.bf16 %v2049, %v1982
    %v2058 = vpack.c.bf16 %v2050, %v2050
    %v2059 = vpack.c.bf16 %v2051, %v1984
    %v2060 = vpack.c.bf16 %v2052, %v2052
    %v2061 = vpack.c.bf16 %v2053, %v1986
    %v2062 = vpack.c.bf16 %v2054, %v2054
    %v2063 = vpack.c.bf16 %v2055, %v1988
    %v2064 = vpack.c.bf16 %v2056, %v2056
    %2073 = vrot.lane.b32.xlu0 %v2057, 2
    %v2074 = vpop.permute.xlu0 %2073
    %2075 = vrot.lane.b32.xlu0 %v2058, 2
    %v2076 = vpop.permute.xlu0 %2075
    %2077 = vrot.lane.b32.xlu0 %v2059, 2
    %v2078 = vpop.permute.xlu0 %2077
    %2079 = vrot.lane.b32.xlu0 %v2060, 2
    %v2080 = vpop.permute.xlu0 %2079
    %2081 = vrot.lane.b32.xlu0 %v2061, 2
    %v2082 = vpop.permute.xlu0 %2081
    %2083 = vrot.lane.b32.xlu0 %v2062, 2
    %v2084 = vpop.permute.xlu0 %2083
    %2085 = vrot.lane.b32.xlu0 %v2063, 2
    %v2086 = vpop.permute.xlu0 %2085
    %2087 = vrot.lane.b32.xlu0 %v2064, 2
    %v2088 = vpop.permute.xlu0 %2087
    %v2089 = vrot.slane %v2074, 4
    %v2090 = vrot.slane %v2078, 4
    %v2091 = vrot.slane %v2082, 4
    %v2092 = vrot.slane %v2086, 4
    %v2093 = vsel %vm130, %v2089, %v2074
    %v2094 = vsel %vm130, %v2089, %v2076
    %v2095 = vsel %vm130, %v2090, %v2078
    %v2096 = vsel %vm130, %v2090, %v2080
    %v2097 = vsel %vm130, %v2091, %v2082
    %v2098 = vsel %vm130, %v2091, %v2084
    %v2099 = vsel %vm130, %v2092, %v2086
    %v2100 = vsel %vm130, %v2092, %v2088
    %2109 = vst.msk [vmem:[#allocation2 + $0x18] sm:$0xff] %vm327, %v2093
    %2110 = vst.msk [vmem:[#allocation2 + $0x20] sm:$0xf] %vm329, %v2094
    %2111 = vst.msk [vmem:[#allocation2 + $0x3c] sm:$0xff] %vm327, %v2095
    %2112 = vst.msk [vmem:[#allocation2 + $0x44] sm:$0xf] %vm329, %v2096
    %2113 = vst.msk [vmem:[#allocation2 + $0x60] sm:$0xff] %vm327, %v2097
    %2114 = vst.msk [vmem:[#allocation2 + $0x68] sm:$0xf] %vm329, %v2098
    %2115 = vst.msk [vmem:[#allocation2 + $0x84] sm:$0xff] %vm327, %v2099
    %2116 = vst.msk [vmem:[#allocation2 + $0x8c] sm:$0xf] %vm329, %v2100
    %v2117 = vld [vmem:[#allocation8] sm:$0xf]
    %v2118 = vld [vmem:[#allocation8 + $0x4] sm:$0xf]
    %v2119 = vld [vmem:[#allocation8 + $0x8] sm:$0xf]
    %v2120 = vld [vmem:[#allocation8 + $0xc] sm:$0xf]
    %v2121 = vld [vmem:[#allocation2] sm:$0xff]
    %v2122 = vld [vmem:[#allocation2 + $0x8] sm:$0xff]
    %v2123 = vld [vmem:[#allocation2 + $0x10] sm:$0xff]
    %v2124 = vld [vmem:[#allocation2 + $0x18] sm:$0xff]
    %v2125 = vld [vmem:[#allocation2 + $0x20] sm:$0xf]
    %v2126 = vld [vmem:[#allocation2 + $0x24] sm:$0xff]
    %v2127 = vld [vmem:[#allocation2 + $0x2c] sm:$0xff]
    %v2128 = vld [vmem:[#allocation2 + $0x34] sm:$0xff]
    %v2129 = vld [vmem:[#allocation2 + $0x3c] sm:$0xff]
    %v2130 = vld [vmem:[#allocation2 + $0x44] sm:$0xf]
    %v2131 = vld [vmem:[#allocation2 + $0x48] sm:$0xff]
    %v2132 = vld [vmem:[#allocation2 + $0x50] sm:$0xff]
    %v2133 = vld [vmem:[#allocation2 + $0x58] sm:$0xff]
    %v2134 = vld [vmem:[#allocation2 + $0x60] sm:$0xff]
    %v2135 = vld [vmem:[#allocation2 + $0x68] sm:$0xf]
    %v2136 = vld [vmem:[#allocation2 + $0x6c] sm:$0xff]
    %v2137 = vld [vmem:[#allocation2 + $0x74] sm:$0xff]
    %v2138 = vld [vmem:[#allocation2 + $0x7c] sm:$0xff]
    %v2139 = vld [vmem:[#allocation2 + $0x84] sm:$0xff]
    %v2140 = vld [vmem:[#allocation2 + $0x8c] sm:$0xf]
    %s2141 = scalar_lea.vmem [#allocation8], 16
    %v2142 = vld [vmem:[%s2141] sm:$0xf]
    %v2143 = vld [vmem:[%s2141 + $0x4] sm:$0xf]
    %v2144 = vld [vmem:[%s2141 + $0x8] sm:$0xf]
    %v2145 = vld [vmem:[%s2141 + $0xc] sm:$0xf]
    %v2150 = vunpack.c.l.b16 %v2142
    %v2151 = vunpack.c.l.b16 %v2143
    %v2152 = vunpack.c.l.b16 %v2144
    %v2153 = vunpack.c.l.b16 %v2145
    %v2154 = vpack.c.b16 %v2151, %v2150
    %v2155 = vpack.c.b16 %v2153, %v2152
    %v2176 = vunpack.c.l.b16 %v2121
    %v2177 = vunpack.c.h.b16 %v2121
    %v2178 = vunpack.c.l.b16 %v2122
    %v2179 = vunpack.c.h.b16 %v2122
    %v2180 = vunpack.c.l.b16 %v2123
    %v2181 = vunpack.c.h.b16 %v2123
    %v2182 = vunpack.c.l.b16 %v2124
    %v2183 = vunpack.c.h.b16 %v2124
    %v2184 = vunpack.c.l.b16 %v2125
    %v2185 = vunpack.c.l.b16 %v2126
    %v2186 = vunpack.c.h.b16 %v2126
    %v2187 = vunpack.c.l.b16 %v2127
    %v2188 = vunpack.c.h.b16 %v2127
    %v2189 = vunpack.c.l.b16 %v2128
    %v2190 = vunpack.c.h.b16 %v2128
    %v2191 = vunpack.c.l.b16 %v2129
    %v2192 = vunpack.c.h.b16 %v2129
    %v2193 = vunpack.c.l.b16 %v2130
    %v2194 = vunpack.c.l.b16 %v2131
    %v2195 = vunpack.c.h.b16 %v2131
    %v2196 = vunpack.c.l.b16 %v2132
    %v2197 = vunpack.c.h.b16 %v2132
    %v2198 = vunpack.c.l.b16 %v2133
    %v2199 = vunpack.c.h.b16 %v2133
    %v2200 = vunpack.c.l.b16 %v2134
    %v2201 = vunpack.c.h.b16 %v2134
    %v2202 = vunpack.c.l.b16 %v2135
    %v2203 = vunpack.c.l.b16 %v2136
    %v2204 = vunpack.c.h.b16 %v2136
    %v2205 = vunpack.c.l.b16 %v2137
    %v2206 = vunpack.c.h.b16 %v2137
    %v2207 = vunpack.c.l.b16 %v2138
    %v2208 = vunpack.c.h.b16 %v2138
    %v2209 = vunpack.c.l.b16 %v2139
    %v2210 = vunpack.c.h.b16 %v2139
    %v2211 = vunpack.c.l.b16 %v2140
    %v2212 = vpack.c.b16 %v2185, %v2176
    %v2213 = vpack.c.b16 %v2186, %v2177
    %v2214 = vpack.c.b16 %v2187, %v2178
    %v2215 = vpack.c.b16 %v2188, %v2179
    %v2216 = vpack.c.b16 %v2189, %v2180
    %v2217 = vpack.c.b16 %v2190, %v2181
    %v2218 = vpack.c.b16 %v2191, %v2182
    %v2219 = vpack.c.b16 %v2192, %v2183
    %v2220 = vpack.c.b16 %v2193, %v2184
    %v2221 = vpack.c.b16 %v2203, %v2194
    %v2222 = vpack.c.b16 %v2204, %v2195
    %v2223 = vpack.c.b16 %v2205, %v2196
    %v2224 = vpack.c.b16 %v2206, %v2197
    %v2225 = vpack.c.b16 %v2207, %v2198
    %v2226 = vpack.c.b16 %v2208, %v2199
    %v2227 = vpack.c.b16 %v2209, %v2200
    %v2228 = vpack.c.b16 %v2210, %v2201
    %v2229 = vpack.c.b16 %v2211, %v2202
    %2230 = vrot.lane.b32.xlu0 %v2212, 127
    %v2231 = vpop.permute.xlu0 %2230
    %2232 = vrot.lane.b32.xlu0 %v2213, 127
    %v2233 = vpop.permute.xlu0 %2232
    %2234 = vrot.lane.b32.xlu0 %v2214, 127
    %v2235 = vpop.permute.xlu0 %2234
    %2236 = vrot.lane.b32.xlu0 %v2215, 127
    %v2237 = vpop.permute.xlu0 %2236
    %2238 = vrot.lane.b32.xlu0 %v2216, 127
    %v2239 = vpop.permute.xlu0 %2238
    %2240 = vrot.lane.b32.xlu0 %v2217, 127
    %v2241 = vpop.permute.xlu0 %2240
    %2242 = vrot.lane.b32.xlu0 %v2218, 127
    %v2243 = vpop.permute.xlu0 %2242
    %2244 = vrot.lane.b32.xlu0 %v2219, 127
    %v2245 = vpop.permute.xlu0 %2244
    %2246 = vrot.lane.b32.xlu0 %v2220, 127
    %v2247 = vpop.permute.xlu0 %2246
    %2248 = vrot.lane.b32.xlu0 %v2221, 127
    %v2249 = vpop.permute.xlu0 %2248
    %2250 = vrot.lane.b32.xlu0 %v2222, 127
    %v2251 = vpop.permute.xlu0 %2250
    %2252 = vrot.lane.b32.xlu0 %v2223, 127
    %v2253 = vpop.permute.xlu0 %2252
    %2254 = vrot.lane.b32.xlu0 %v2224, 127
    %v2255 = vpop.permute.xlu0 %2254
    %2256 = vrot.lane.b32.xlu0 %v2225, 127
    %v2257 = vpop.permute.xlu0 %2256
    %2258 = vrot.lane.b32.xlu0 %v2226, 127
    %v2259 = vpop.permute.xlu0 %2258
    %2260 = vrot.lane.b32.xlu0 %v2227, 127
    %v2261 = vpop.permute.xlu0 %2260
    %2262 = vrot.lane.b32.xlu0 %v2228, 127
    %v2263 = vpop.permute.xlu0 %2262
    %2264 = vrot.lane.b32.xlu0 %v2229, 127
    %v2265 = vpop.permute.xlu0 %2264
    %v2266 = vsel %vm486, %v2231, %v2233
    %v2267 = vsel %vm486, %v2233, %v2235
    %v2268 = vsel %vm486, %v2235, %v2237
    %v2269 = vsel %vm486, %v2237, %v2239
    %v2270 = vsel %vm486, %v2239, %v2241
    %v2271 = vsel %vm486, %v2241, %v2243
    %v2272 = vsel %vm486, %v2243, %v2245
    %v2273 = vsel %vm486, %v2245, %v2247
    %v2274 = vsel %vm486, %v2249, %v2251
    %v2275 = vsel %vm486, %v2251, %v2253
    %v2276 = vsel %vm486, %v2253, %v2255
    %v2277 = vsel %vm486, %v2255, %v2257
    %v2278 = vsel %vm486, %v2257, %v2259
    %v2279 = vsel %vm486, %v2259, %v2261
    %v2280 = vsel %vm486, %v2261, %v2263
    %v2281 = vsel %vm486, %v2263, %v2265
    %v2301 = vsel %vm521, %v2154, 0
    %v2304 = vsel %vm521, %v2155, 0
    %2306 = vmatpush.bf16.msra.mxu0 0
    %2307 = vmatpush.bf16.msra.mxu0 0
    %2308 = vmatpush.bf16.msra.mxu0 0
    %2309 = vmatpush.bf16.msra.mxu0 0
    %2310 = vmatpush.bf16.msra.mxu0 0
    %2311 = vmatpush.bf16.msra.mxu0 0
    %2312 = vmatpush.bf16.msra.mxu0 %v2274
    %2313 = vmatpush.bf16.msra.mxu0 %v2266
    %2314 = vmatmul.bf16.gmra.mxu0 %v2301
    %v2315 = vpop.f32.mrf.mxu0
    %v2316 = vadd.f32 0.0, %v2315
    %v2317 = vpop.f32.mrf.mxu0
    %v2318 = vadd.f32 0.0, %v2317
    %2319 = vmatmul.bf16.gmra.mxu0 %v2304
    %v2320 = vpop.f32.mrf.mxu0
    %v2321 = vadd.f32 0.0, %v2320
    %v2322 = vpop.f32.mrf.mxu0
    %v2323 = vadd.f32 0.0, %v2322
    %2324 = vdwg.mxu0
    %2325 = vmatpush.bf16.msra.mxu0 0
    %2326 = vmatpush.bf16.msra.mxu0 0
    %2327 = vmatpush.bf16.msra.mxu0 0
    %2328 = vmatpush.bf16.msra.mxu0 0
    %2329 = vmatpush.bf16.msra.mxu0 0
    %2330 = vmatpush.bf16.msra.mxu0 0
    %2331 = vmatpush.bf16.msra.mxu0 %v2275
    %2332 = vmatpush.bf16.msra.mxu0 %v2267
    %2333 = vmatmul.bf16.gmra.mxu0 %v2301
    %v2334 = vpop.f32.mrf.mxu0
    %v2335 = vadd.f32 0.0, %v2334
    %v2336 = vpop.f32.mrf.mxu0
    %v2337 = vadd.f32 0.0, %v2336
    %2338 = vmatmul.bf16.gmra.mxu0 %v2304
    %v2339 = vpop.f32.mrf.mxu0
    %v2340 = vadd.f32 0.0, %v2339
    %v2341 = vpop.f32.mrf.mxu0
    %v2342 = vadd.f32 0.0, %v2341
    %2343 = vdwg.mxu0
    %2344 = vmatpush.bf16.msra.mxu0 0
    %2345 = vmatpush.bf16.msra.mxu0 0
    %2346 = vmatpush.bf16.msra.mxu0 0
    %2347 = vmatpush.bf16.msra.mxu0 0
    %2348 = vmatpush.bf16.msra.mxu0 0
    %2349 = vmatpush.bf16.msra.mxu0 0
    %2350 = vmatpush.bf16.msra.mxu0 %v2276
    %2351 = vmatpush.bf16.msra.mxu0 %v2268
    %2352 = vmatmul.bf16.gmra.mxu0 %v2301
    %v2353 = vpop.f32.mrf.mxu0
    %v2354 = vadd.f32 0.0, %v2353
    %v2355 = vpop.f32.mrf.mxu0
    %v2356 = vadd.f32 0.0, %v2355
    %2357 = vmatmul.bf16.gmra.mxu0 %v2304
    %v2358 = vpop.f32.mrf.mxu0
    %v2359 = vadd.f32 0.0, %v2358
    %v2360 = vpop.f32.mrf.mxu0
    %v2361 = vadd.f32 0.0, %v2360
    %2362 = vdwg.mxu0
    %2363 = vmatpush.bf16.msra.mxu0 0
    %2364 = vmatpush.bf16.msra.mxu0 0
    %2365 = vmatpush.bf16.msra.mxu0 0
    %2366 = vmatpush.bf16.msra.mxu0 0
    %2367 = vmatpush.bf16.msra.mxu0 0
    %2368 = vmatpush.bf16.msra.mxu0 0
    %2369 = vmatpush.bf16.msra.mxu0 %v2277
    %2370 = vmatpush.bf16.msra.mxu0 %v2269
    %2371 = vmatmul.bf16.gmra.mxu0 %v2301
    %v2372 = vpop.f32.mrf.mxu0
    %v2373 = vadd.f32 0.0, %v2372
    %v2374 = vpop.f32.mrf.mxu0
    %v2375 = vadd.f32 0.0, %v2374
    %2376 = vmatmul.bf16.gmra.mxu0 %v2304
    %v2377 = vpop.f32.mrf.mxu0
    %v2378 = vadd.f32 0.0, %v2377
    %v2379 = vpop.f32.mrf.mxu0
    %v2380 = vadd.f32 0.0, %v2379
    %2381 = vdwg.mxu0
    %2382 = vmatpush.bf16.msra.mxu0 0
    %2383 = vmatpush.bf16.msra.mxu0 0
    %2384 = vmatpush.bf16.msra.mxu0 0
    %2385 = vmatpush.bf16.msra.mxu0 0
    %2386 = vmatpush.bf16.msra.mxu0 0
    %2387 = vmatpush.bf16.msra.mxu0 0
    %2388 = vmatpush.bf16.msra.mxu0 %v2278
    %2389 = vmatpush.bf16.msra.mxu0 %v2270
    %2390 = vmatmul.bf16.gmra.mxu0 %v2301
    %v2391 = vpop.f32.mrf.mxu0
    %v2392 = vadd.f32 0.0, %v2391
    %v2393 = vpop.f32.mrf.mxu0
    %v2394 = vadd.f32 0.0, %v2393
    %2395 = vmatmul.bf16.gmra.mxu0 %v2304
    %v2396 = vpop.f32.mrf.mxu0
    %v2397 = vadd.f32 0.0, %v2396
    %v2398 = vpop.f32.mrf.mxu0
    %v2399 = vadd.f32 0.0, %v2398
    %2400 = vdwg.mxu0
    %2401 = vmatpush.bf16.msra.mxu0 0
    %2402 = vmatpush.bf16.msra.mxu0 0
    %2403 = vmatpush.bf16.msra.mxu0 0
    %2404 = vmatpush.bf16.msra.mxu0 0
    %2405 = vmatpush.bf16.msra.mxu0 0
    %2406 = vmatpush.bf16.msra.mxu0 0
    %2407 = vmatpush.bf16.msra.mxu0 %v2279
    %2408 = vmatpush.bf16.msra.mxu0 %v2271
    %2409 = vmatmul.bf16.gmra.mxu0 %v2301
    %v2410 = vpop.f32.mrf.mxu0
    %v2411 = vadd.f32 0.0, %v2410
    %v2412 = vpop.f32.mrf.mxu0
    %v2413 = vadd.f32 0.0, %v2412
    %2414 = vmatmul.bf16.gmra.mxu0 %v2304
    %v2415 = vpop.f32.mrf.mxu0
    %v2416 = vadd.f32 0.0, %v2415
    %v2417 = vpop.f32.mrf.mxu0
    %v2418 = vadd.f32 0.0, %v2417
    %2419 = vdwg.mxu0
    %2420 = vmatpush.bf16.msra.mxu0 0
    %2421 = vmatpush.bf16.msra.mxu0 0
    %2422 = vmatpush.bf16.msra.mxu0 0
    %2423 = vmatpush.bf16.msra.mxu0 0
    %2424 = vmatpush.bf16.msra.mxu0 0
    %2425 = vmatpush.bf16.msra.mxu0 0
    %2426 = vmatpush.bf16.msra.mxu0 %v2280
    %2427 = vmatpush.bf16.msra.mxu0 %v2272
    %2428 = vmatmul.bf16.gmra.mxu0 %v2301
    %v2429 = vpop.f32.mrf.mxu0
    %v2430 = vadd.f32 0.0, %v2429
    %v2431 = vpop.f32.mrf.mxu0
    %v2432 = vadd.f32 0.0, %v2431
    %2433 = vmatmul.bf16.gmra.mxu0 %v2304
    %v2434 = vpop.f32.mrf.mxu0
    %v2435 = vadd.f32 0.0, %v2434
    %v2436 = vpop.f32.mrf.mxu0
    %v2437 = vadd.f32 0.0, %v2436
    %2438 = vdwg.mxu0
    %2439 = vmatpush.bf16.msra.mxu0 0
    %2440 = vmatpush.bf16.msra.mxu0 0
    %2441 = vmatpush.bf16.msra.mxu0 0
    %2442 = vmatpush.bf16.msra.mxu0 0
    %2443 = vmatpush.bf16.msra.mxu0 0
    %2444 = vmatpush.bf16.msra.mxu0 0
    %2445 = vmatpush.bf16.msra.mxu0 %v2281
    %2446 = vmatpush.bf16.msra.mxu0 %v2273
    %2447 = vmatmul.bf16.gmra.mxu0 %v2301
    %v2448 = vpop.f32.mrf.mxu0
    %v2449 = vadd.f32 0.0, %v2448
    %v2450 = vpop.f32.mrf.mxu0
    %v2451 = vadd.f32 0.0, %v2450
    %2452 = vmatmul.bf16.gmra.mxu0 %v2304
    %v2453 = vpop.f32.mrf.mxu0
    %v2454 = vadd.f32 0.0, %v2453
    %v2455 = vpop.f32.mrf.mxu0
    %v2456 = vadd.f32 0.0, %v2455
    %2457 = vdwg.mxu0
    %2458 = vmatpush.bf16.msra.mxu0 0
    %2459 = vmatpush.bf16.msra.mxu0 0
    %2460 = vmatpush.bf16.msra.mxu0 0
    %2461 = vmatpush.bf16.msra.mxu0 0
    %2462 = vmatpush.bf16.msra.mxu0 0
    %2463 = vmatpush.bf16.msra.mxu0 0
    %2464 = vmatpush.bf16.msra.mxu0 %v2265
    %2465 = vmatpush.bf16.msra.mxu0 %v2247
    %2466 = vmatmul.bf16.gmra.mxu0 %v2301
    %v2467 = vpop.f32.mrf.mxu0
    %v2468 = vadd.f32 0.0, %v2467
    %v2469 = vpop.f32.mrf.mxu0
    %v2470 = vadd.f32 0.0, %v2469
    %2471 = vmatmul.bf16.gmra.mxu0 %v2304
    %v2472 = vpop.f32.mrf.mxu0
    %v2473 = vadd.f32 0.0, %v2472
    %v2474 = vpop.f32.mrf.mxu0
    %v2475 = vadd.f32 0.0, %v2474
    %2476 = vdwg.mxu0
    %v2481 = vunpack.c.l.b16 %v2117
    %v2482 = vunpack.c.l.b16 %v2118
    %v2483 = vunpack.c.l.b16 %v2119
    %v2484 = vunpack.c.l.b16 %v2120
    %v2485 = vpack.c.b16 %v2482, %v2481
    %v2486 = vpack.c.b16 %v2484, %v2483
    %v2506 = vsel %vm521, %v2485, 0
    %v2509 = vsel %vm521, %v2486, 0
    %2511 = vmatpush.bf16.msra.mxu0 0
    %2512 = vmatpush.bf16.msra.mxu0 0
    %2513 = vmatpush.bf16.msra.mxu0 0
    %2514 = vmatpush.bf16.msra.mxu0 0
    %2515 = vmatpush.bf16.msra.mxu0 0
    %2516 = vmatpush.bf16.msra.mxu0 0
    %2517 = vmatpush.bf16.msra.mxu0 %v2221
    %2518 = vmatpush.bf16.msra.mxu0 %v2212
    %2519 = vmatmul.bf16.gmra.mxu0 %v2506
    %v2520 = vpop.f32.mrf.mxu0
    %v2521 = vadd.f32 %v2316, %v2520
    %v2522 = vpop.f32.mrf.mxu0
    %v2523 = vadd.f32 %v2318, %v2522
    %2524 = vmatmul.bf16.gmra.mxu0 %v2509
    %v2525 = vpop.f32.mrf.mxu0
    %v2526 = vadd.f32 %v2321, %v2525
    %v2527 = vpop.f32.mrf.mxu0
    %v2528 = vadd.f32 %v2323, %v2527
    %2529 = vdwg.mxu0
    %2530 = vmatpush.bf16.msra.mxu0 0
    %2531 = vmatpush.bf16.msra.mxu0 0
    %2532 = vmatpush.bf16.msra.mxu0 0
    %2533 = vmatpush.bf16.msra.mxu0 0
    %2534 = vmatpush.bf16.msra.mxu0 0
    %2535 = vmatpush.bf16.msra.mxu0 0
    %2536 = vmatpush.bf16.msra.mxu0 %v2222
    %2537 = vmatpush.bf16.msra.mxu0 %v2213
    %2538 = vmatmul.bf16.gmra.mxu0 %v2506
    %v2539 = vpop.f32.mrf.mxu0
    %v2540 = vadd.f32 %v2335, %v2539
    %v2541 = vpop.f32.mrf.mxu0
    %v2542 = vadd.f32 %v2337, %v2541
    %2543 = vmatmul.bf16.gmra.mxu0 %v2509
    %v2544 = vpop.f32.mrf.mxu0
    %v2545 = vadd.f32 %v2340, %v2544
    %v2546 = vpop.f32.mrf.mxu0
    %v2547 = vadd.f32 %v2342, %v2546
    %2548 = vdwg.mxu0
    %2549 = vmatpush.bf16.msra.mxu0 0
    %2550 = vmatpush.bf16.msra.mxu0 0
    %2551 = vmatpush.bf16.msra.mxu0 0
    %2552 = vmatpush.bf16.msra.mxu0 0
    %2553 = vmatpush.bf16.msra.mxu0 0
    %2554 = vmatpush.bf16.msra.mxu0 0
    %2555 = vmatpush.bf16.msra.mxu0 %v2223
    %2556 = vmatpush.bf16.msra.mxu0 %v2214
    %2557 = vmatmul.bf16.gmra.mxu0 %v2506
    %v2558 = vpop.f32.mrf.mxu0
    %v2559 = vadd.f32 %v2354, %v2558
    %v2560 = vpop.f32.mrf.mxu0
    %v2561 = vadd.f32 %v2356, %v2560
    %2562 = vmatmul.bf16.gmra.mxu0 %v2509
    %v2563 = vpop.f32.mrf.mxu0
    %v2564 = vadd.f32 %v2359, %v2563
    %v2565 = vpop.f32.mrf.mxu0
    %v2566 = vadd.f32 %v2361, %v2565
    %2567 = vdwg.mxu0
    %2568 = vmatpush.bf16.msra.mxu0 0
    %2569 = vmatpush.bf16.msra.mxu0 0
    %2570 = vmatpush.bf16.msra.mxu0 0
    %2571 = vmatpush.bf16.msra.mxu0 0
    %2572 = vmatpush.bf16.msra.mxu0 0
    %2573 = vmatpush.bf16.msra.mxu0 0
    %2574 = vmatpush.bf16.msra.mxu0 %v2224
    %2575 = vmatpush.bf16.msra.mxu0 %v2215
    %2576 = vmatmul.bf16.gmra.mxu0 %v2506
    %v2577 = vpop.f32.mrf.mxu0
    %v2578 = vadd.f32 %v2373, %v2577
    %v2579 = vpop.f32.mrf.mxu0
    %v2580 = vadd.f32 %v2375, %v2579
    %2581 = vmatmul.bf16.gmra.mxu0 %v2509
    %v2582 = vpop.f32.mrf.mxu0
    %v2583 = vadd.f32 %v2378, %v2582
    %v2584 = vpop.f32.mrf.mxu0
    %v2585 = vadd.f32 %v2380, %v2584
    %2586 = vdwg.mxu0
    %2587 = vmatpush.bf16.msra.mxu0 0
    %2588 = vmatpush.bf16.msra.mxu0 0
    %2589 = vmatpush.bf16.msra.mxu0 0
    %2590 = vmatpush.bf16.msra.mxu0 0
    %2591 = vmatpush.bf16.msra.mxu0 0
    %2592 = vmatpush.bf16.msra.mxu0 0
    %2593 = vmatpush.bf16.msra.mxu0 %v2225
    %2594 = vmatpush.bf16.msra.mxu0 %v2216
    %2595 = vmatmul.bf16.gmra.mxu0 %v2506
    %v2596 = vpop.f32.mrf.mxu0
    %v2597 = vadd.f32 %v2392, %v2596
    %v2598 = vpop.f32.mrf.mxu0
    %v2599 = vadd.f32 %v2394, %v2598
    %2600 = vmatmul.bf16.gmra.mxu0 %v2509
    %v2601 = vpop.f32.mrf.mxu0
    %v2602 = vadd.f32 %v2397, %v2601
    %v2603 = vpop.f32.mrf.mxu0
    %v2604 = vadd.f32 %v2399, %v2603
    %2605 = vdwg.mxu0
    %2606 = vmatpush.bf16.msra.mxu0 0
    %2607 = vmatpush.bf16.msra.mxu0 0
    %2608 = vmatpush.bf16.msra.mxu0 0
    %2609 = vmatpush.bf16.msra.mxu0 0
    %2610 = vmatpush.bf16.msra.mxu0 0
    %2611 = vmatpush.bf16.msra.mxu0 0
    %2612 = vmatpush.bf16.msra.mxu0 %v2226
    %2613 = vmatpush.bf16.msra.mxu0 %v2217
    %2614 = vmatmul.bf16.gmra.mxu0 %v2506
    %v2615 = vpop.f32.mrf.mxu0
    %v2616 = vadd.f32 %v2411, %v2615
    %v2617 = vpop.f32.mrf.mxu0
    %v2618 = vadd.f32 %v2413, %v2617
    %2619 = vmatmul.bf16.gmra.mxu0 %v2509
    %v2620 = vpop.f32.mrf.mxu0
    %v2621 = vadd.f32 %v2416, %v2620
    %v2622 = vpop.f32.mrf.mxu0
    %v2623 = vadd.f32 %v2418, %v2622
    %2624 = vdwg.mxu0
    %2625 = vmatpush.bf16.msra.mxu0 0
    %2626 = vmatpush.bf16.msra.mxu0 0
    %2627 = vmatpush.bf16.msra.mxu0 0
    %2628 = vmatpush.bf16.msra.mxu0 0
    %2629 = vmatpush.bf16.msra.mxu0 0
    %2630 = vmatpush.bf16.msra.mxu0 0
    %2631 = vmatpush.bf16.msra.mxu0 %v2227
    %2632 = vmatpush.bf16.msra.mxu0 %v2218
    %2633 = vmatmul.bf16.gmra.mxu0 %v2506
    %v2634 = vpop.f32.mrf.mxu0
    %v2635 = vadd.f32 %v2430, %v2634
    %v2636 = vpop.f32.mrf.mxu0
    %v2637 = vadd.f32 %v2432, %v2636
    %2638 = vmatmul.bf16.gmra.mxu0 %v2509
    %v2639 = vpop.f32.mrf.mxu0
    %v2640 = vadd.f32 %v2435, %v2639
    %v2641 = vpop.f32.mrf.mxu0
    %v2642 = vadd.f32 %v2437, %v2641
    %2643 = vdwg.mxu0
    %2644 = vmatpush.bf16.msra.mxu0 0
    %2645 = vmatpush.bf16.msra.mxu0 0
    %2646 = vmatpush.bf16.msra.mxu0 0
    %2647 = vmatpush.bf16.msra.mxu0 0
    %2648 = vmatpush.bf16.msra.mxu0 0
    %2649 = vmatpush.bf16.msra.mxu0 0
    %2650 = vmatpush.bf16.msra.mxu0 %v2228
    %2651 = vmatpush.bf16.msra.mxu0 %v2219
    %2652 = vmatmul.bf16.gmra.mxu0 %v2506
    %v2653 = vpop.f32.mrf.mxu0
    %v2654 = vadd.f32 %v2449, %v2653
    %v2655 = vpop.f32.mrf.mxu0
    %v2656 = vadd.f32 %v2451, %v2655
    %2657 = vmatmul.bf16.gmra.mxu0 %v2509
    %v2658 = vpop.f32.mrf.mxu0
    %v2659 = vadd.f32 %v2454, %v2658
    %v2660 = vpop.f32.mrf.mxu0
    %v2661 = vadd.f32 %v2456, %v2660
    %2662 = vdwg.mxu0
    %2663 = vmatpush.bf16.msra.mxu0 0
    %2664 = vmatpush.bf16.msra.mxu0 0
    %2665 = vmatpush.bf16.msra.mxu0 0
    %2666 = vmatpush.bf16.msra.mxu0 0
    %2667 = vmatpush.bf16.msra.mxu0 0
    %2668 = vmatpush.bf16.msra.mxu0 0
    %2669 = vmatpush.bf16.msra.mxu0 %v2229
    %2670 = vmatpush.bf16.msra.mxu0 %v2220
    %2671 = vmatmul.bf16.gmra.mxu0 %v2506
    %v2672 = vpop.f32.mrf.mxu0
    %v2673 = vadd.f32 %v2468, %v2672
    %v2674 = vpop.f32.mrf.mxu0
    %v2675 = vadd.f32 %v2470, %v2674
    %2676 = vmatmul.bf16.gmra.mxu0 %v2509
    %v2677 = vpop.f32.mrf.mxu0
    %v2678 = vadd.f32 %v2473, %v2677
    %v2679 = vpop.f32.mrf.mxu0
    %v2680 = vadd.f32 %v2475, %v2679
    %2681 = vdwg.mxu0
    %s2682 = scalar_lea.vmem [#allocation8], 32
    %v2683 = vld [vmem:[%s2682] sm:$0xf]
    %v2684 = vld [vmem:[%s2682 + $0x4] sm:$0xf]
    %v2685 = vld [vmem:[%s2682 + $0x8] sm:$0xf]
    %v2686 = vld [vmem:[%s2682 + $0xc] sm:$0xf]
    %v2691 = vunpack.c.l.b16 %v2683
    %v2692 = vunpack.c.l.b16 %v2684
    %v2693 = vunpack.c.l.b16 %v2685
    %v2694 = vunpack.c.l.b16 %v2686
    %v2695 = vpack.c.b16 %v2692, %v2691
    %v2696 = vpack.c.b16 %v2694, %v2693
    %2697 = vrot.lane.b32.xlu0 %v2212, 126
    %v2698 = vpop.permute.xlu0 %2697
    %2699 = vrot.lane.b32.xlu0 %v2213, 126
    %v2700 = vpop.permute.xlu0 %2699
    %2701 = vrot.lane.b32.xlu0 %v2214, 126
    %v2702 = vpop.permute.xlu0 %2701
    %2703 = vrot.lane.b32.xlu0 %v2215, 126
    %v2704 = vpop.permute.xlu0 %2703
    %2705 = vrot.lane.b32.xlu0 %v2216, 126
    %v2706 = vpop.permute.xlu0 %2705
    %2707 = vrot.lane.b32.xlu0 %v2217, 126
    %v2708 = vpop.permute.xlu0 %2707
    %2709 = vrot.lane.b32.xlu0 %v2218, 126
    %v2710 = vpop.permute.xlu0 %2709
    %2711 = vrot.lane.b32.xlu0 %v2219, 126
    %v2712 = vpop.permute.xlu0 %2711
    %2713 = vrot.lane.b32.xlu0 %v2220, 126
    %v2714 = vpop.permute.xlu0 %2713
    %2715 = vrot.lane.b32.xlu0 %v2221, 126
    %v2716 = vpop.permute.xlu0 %2715
    %2717 = vrot.lane.b32.xlu0 %v2222, 126
    %v2718 = vpop.permute.xlu0 %2717
    %2719 = vrot.lane.b32.xlu0 %v2223, 126
    %v2720 = vpop.permute.xlu0 %2719
    %2721 = vrot.lane.b32.xlu0 %v2224, 126
    %v2722 = vpop.permute.xlu0 %2721
    %2723 = vrot.lane.b32.xlu0 %v2225, 126
    %v2724 = vpop.permute.xlu0 %2723
    %2725 = vrot.lane.b32.xlu0 %v2226, 126
    %v2726 = vpop.permute.xlu0 %2725
    %2727 = vrot.lane.b32.xlu0 %v2227, 126
    %v2728 = vpop.permute.xlu0 %2727
    %2729 = vrot.lane.b32.xlu0 %v2228, 126
    %v2730 = vpop.permute.xlu0 %2729
    %2731 = vrot.lane.b32.xlu0 %v2229, 126
    %v2732 = vpop.permute.xlu0 %2731
    %v2733 = vsel %vm955, %v2698, %v2700
    %v2734 = vsel %vm955, %v2700, %v2702
    %v2735 = vsel %vm955, %v2702, %v2704
    %v2736 = vsel %vm955, %v2704, %v2706
    %v2737 = vsel %vm955, %v2706, %v2708
    %v2738 = vsel %vm955, %v2708, %v2710
    %v2739 = vsel %vm955, %v2710, %v2712
    %v2740 = vsel %vm955, %v2712, %v2714
    %v2741 = vsel %vm955, %v2716, %v2718
    %v2742 = vsel %vm955, %v2718, %v2720
    %v2743 = vsel %vm955, %v2720, %v2722
    %v2744 = vsel %vm955, %v2722, %v2724
    %v2745 = vsel %vm955, %v2724, %v2726
    %v2746 = vsel %vm955, %v2726, %v2728
    %v2747 = vsel %vm955, %v2728, %v2730
    %v2748 = vsel %vm955, %v2730, %v2732
    %v2768 = vsel %vm521, %v2695, 0
    %v2771 = vsel %vm521, %v2696, 0
    %2773 = vmatpush.bf16.msra.mxu0 0
    %2774 = vmatpush.bf16.msra.mxu0 0
    %2775 = vmatpush.bf16.msra.mxu0 0
    %2776 = vmatpush.bf16.msra.mxu0 0
    %2777 = vmatpush.bf16.msra.mxu0 0
    %2778 = vmatpush.bf16.msra.mxu0 0
    %2779 = vmatpush.bf16.msra.mxu0 %v2741
    %2780 = vmatpush.bf16.msra.mxu0 %v2733
    %2781 = vmatmul.bf16.gmra.mxu0 %v2768
    %v2782 = vpop.f32.mrf.mxu0
    %v2783 = vadd.f32 0.0, %v2782
    %v2784 = vpop.f32.mrf.mxu0
    %v2785 = vadd.f32 0.0, %v2784
    %2786 = vmatmul.bf16.gmra.mxu0 %v2771
    %v2787 = vpop.f32.mrf.mxu0
    %v2788 = vadd.f32 0.0, %v2787
    %v2789 = vpop.f32.mrf.mxu0
    %v2790 = vadd.f32 0.0, %v2789
    %2791 = vdwg.mxu0
    %2792 = vmatpush.bf16.msra.mxu0 0
    %2793 = vmatpush.bf16.msra.mxu0 0
    %2794 = vmatpush.bf16.msra.mxu0 0
    %2795 = vmatpush.bf16.msra.mxu0 0
    %2796 = vmatpush.bf16.msra.mxu0 0
    %2797 = vmatpush.bf16.msra.mxu0 0
    %2798 = vmatpush.bf16.msra.mxu0 %v2742
    %2799 = vmatpush.bf16.msra.mxu0 %v2734
    %2800 = vmatmul.bf16.gmra.mxu0 %v2768
    %v2801 = vpop.f32.mrf.mxu0
    %v2802 = vadd.f32 0.0, %v2801
    %v2803 = vpop.f32.mrf.mxu0
    %v2804 = vadd.f32 0.0, %v2803
    %2805 = vmatmul.bf16.gmra.mxu0 %v2771
    %v2806 = vpop.f32.mrf.mxu0
    %v2807 = vadd.f32 0.0, %v2806
    %v2808 = vpop.f32.mrf.mxu0
    %v2809 = vadd.f32 0.0, %v2808
    %2810 = vdwg.mxu0
    %2811 = vmatpush.bf16.msra.mxu0 0
    %2812 = vmatpush.bf16.msra.mxu0 0
    %2813 = vmatpush.bf16.msra.mxu0 0
    %2814 = vmatpush.bf16.msra.mxu0 0
    %2815 = vmatpush.bf16.msra.mxu0 0
    %2816 = vmatpush.bf16.msra.mxu0 0
    %2817 = vmatpush.bf16.msra.mxu0 %v2743
    %2818 = vmatpush.bf16.msra.mxu0 %v2735
    %2819 = vmatmul.bf16.gmra.mxu0 %v2768
    %v2820 = vpop.f32.mrf.mxu0
    %v2821 = vadd.f32 0.0, %v2820
    %v2822 = vpop.f32.mrf.mxu0
    %v2823 = vadd.f32 0.0, %v2822
    %2824 = vmatmul.bf16.gmra.mxu0 %v2771
    %v2825 = vpop.f32.mrf.mxu0
    %v2826 = vadd.f32 0.0, %v2825
    %v2827 = vpop.f32.mrf.mxu0
    %v2828 = vadd.f32 0.0, %v2827
    %2829 = vdwg.mxu0
    %2830 = vmatpush.bf16.msra.mxu0 0
    %2831 = vmatpush.bf16.msra.mxu0 0
    %2832 = vmatpush.bf16.msra.mxu0 0
    %2833 = vmatpush.bf16.msra.mxu0 0
    %2834 = vmatpush.bf16.msra.mxu0 0
    %2835 = vmatpush.bf16.msra.mxu0 0
    %2836 = vmatpush.bf16.msra.mxu0 %v2744
    %2837 = vmatpush.bf16.msra.mxu0 %v2736
    %2838 = vmatmul.bf16.gmra.mxu0 %v2768
    %v2839 = vpop.f32.mrf.mxu0
    %v2840 = vadd.f32 0.0, %v2839
    %v2841 = vpop.f32.mrf.mxu0
    %v2842 = vadd.f32 0.0, %v2841
    %2843 = vmatmul.bf16.gmra.mxu0 %v2771
    %v2844 = vpop.f32.mrf.mxu0
    %v2845 = vadd.f32 0.0, %v2844
    %v2846 = vpop.f32.mrf.mxu0
    %v2847 = vadd.f32 0.0, %v2846
    %2848 = vdwg.mxu0
    %2849 = vmatpush.bf16.msra.mxu0 0
    %2850 = vmatpush.bf16.msra.mxu0 0
    %2851 = vmatpush.bf16.msra.mxu0 0
    %2852 = vmatpush.bf16.msra.mxu0 0
    %2853 = vmatpush.bf16.msra.mxu0 0
    %2854 = vmatpush.bf16.msra.mxu0 0
    %2855 = vmatpush.bf16.msra.mxu0 %v2745
    %2856 = vmatpush.bf16.msra.mxu0 %v2737
    %2857 = vmatmul.bf16.gmra.mxu0 %v2768
    %v2858 = vpop.f32.mrf.mxu0
    %v2859 = vadd.f32 0.0, %v2858
    %v2860 = vpop.f32.mrf.mxu0
    %v2861 = vadd.f32 0.0, %v2860
    %2862 = vmatmul.bf16.gmra.mxu0 %v2771
    %v2863 = vpop.f32.mrf.mxu0
    %v2864 = vadd.f32 0.0, %v2863
    %v2865 = vpop.f32.mrf.mxu0
    %v2866 = vadd.f32 0.0, %v2865
    %2867 = vdwg.mxu0
    %2868 = vmatpush.bf16.msra.mxu0 0
    %2869 = vmatpush.bf16.msra.mxu0 0
    %2870 = vmatpush.bf16.msra.mxu0 0
    %2871 = vmatpush.bf16.msra.mxu0 0
    %2872 = vmatpush.bf16.msra.mxu0 0
    %2873 = vmatpush.bf16.msra.mxu0 0
    %2874 = vmatpush.bf16.msra.mxu0 %v2746
    %2875 = vmatpush.bf16.msra.mxu0 %v2738
    %2876 = vmatmul.bf16.gmra.mxu0 %v2768
    %v2877 = vpop.f32.mrf.mxu0
    %v2878 = vadd.f32 0.0, %v2877
    %v2879 = vpop.f32.mrf.mxu0
    %v2880 = vadd.f32 0.0, %v2879
    %2881 = vmatmul.bf16.gmra.mxu0 %v2771
    %v2882 = vpop.f32.mrf.mxu0
    %v2883 = vadd.f32 0.0, %v2882
    %v2884 = vpop.f32.mrf.mxu0
    %v2885 = vadd.f32 0.0, %v2884
    %2886 = vdwg.mxu0
    %2887 = vmatpush.bf16.msra.mxu0 0
    %2888 = vmatpush.bf16.msra.mxu0 0
    %2889 = vmatpush.bf16.msra.mxu0 0
    %2890 = vmatpush.bf16.msra.mxu0 0
    %2891 = vmatpush.bf16.msra.mxu0 0
    %2892 = vmatpush.bf16.msra.mxu0 0
    %2893 = vmatpush.bf16.msra.mxu0 %v2747
    %2894 = vmatpush.bf16.msra.mxu0 %v2739
    %2895 = vmatmul.bf16.gmra.mxu0 %v2768
    %v2896 = vpop.f32.mrf.mxu0
    %v2897 = vadd.f32 0.0, %v2896
    %v2898 = vpop.f32.mrf.mxu0
    %v2899 = vadd.f32 0.0, %v2898
    %2900 = vmatmul.bf16.gmra.mxu0 %v2771
    %v2901 = vpop.f32.mrf.mxu0
    %v2902 = vadd.f32 0.0, %v2901
    %v2903 = vpop.f32.mrf.mxu0
    %v2904 = vadd.f32 0.0, %v2903
    %2905 = vdwg.mxu0
    %2906 = vmatpush.bf16.msra.mxu0 0
    %2907 = vmatpush.bf16.msra.mxu0 0
    %2908 = vmatpush.bf16.msra.mxu0 0
    %2909 = vmatpush.bf16.msra.mxu0 0
    %2910 = vmatpush.bf16.msra.mxu0 0
    %2911 = vmatpush.bf16.msra.mxu0 0
    %2912 = vmatpush.bf16.msra.mxu0 %v2748
    %2913 = vmatpush.bf16.msra.mxu0 %v2740
    %2914 = vmatmul.bf16.gmra.mxu0 %v2768
    %v2915 = vpop.f32.mrf.mxu0
    %v2916 = vadd.f32 0.0, %v2915
    %v2917 = vpop.f32.mrf.mxu0
    %v2918 = vadd.f32 0.0, %v2917
    %2919 = vmatmul.bf16.gmra.mxu0 %v2771
    %v2920 = vpop.f32.mrf.mxu0
    %v2921 = vadd.f32 0.0, %v2920
    %v2922 = vpop.f32.mrf.mxu0
    %v2923 = vadd.f32 0.0, %v2922
    %2924 = vdwg.mxu0
    %2925 = vmatpush.bf16.msra.mxu0 0
    %2926 = vmatpush.bf16.msra.mxu0 0
    %2927 = vmatpush.bf16.msra.mxu0 0
    %2928 = vmatpush.bf16.msra.mxu0 0
    %2929 = vmatpush.bf16.msra.mxu0 0
    %2930 = vmatpush.bf16.msra.mxu0 0
    %2931 = vmatpush.bf16.msra.mxu0 %v2732
    %2932 = vmatpush.bf16.msra.mxu0 %v2714
    %2933 = vmatmul.bf16.gmra.mxu0 %v2768
    %v2934 = vpop.f32.mrf.mxu0
    %v2935 = vadd.f32 0.0, %v2934
    %v2936 = vpop.f32.mrf.mxu0
    %v2937 = vadd.f32 0.0, %v2936
    %2938 = vmatmul.bf16.gmra.mxu0 %v2771
    %v2939 = vpop.f32.mrf.mxu0
    %v2940 = vadd.f32 0.0, %v2939
    %v2941 = vpop.f32.mrf.mxu0
    %v2942 = vadd.f32 0.0, %v2941
    %2943 = vdwg.mxu0
    %v2944 = vadd.f32 %v2521, %v2783
    %v2945 = vadd.f32 %v2540, %v2802
    %v2946 = vadd.f32 %v2559, %v2821
    %v2947 = vadd.f32 %v2578, %v2840
    %v2948 = vadd.f32 %v2597, %v2859
    %v2949 = vadd.f32 %v2616, %v2878
    %v2950 = vadd.f32 %v2635, %v2897
    %v2951 = vadd.f32 %v2654, %v2916
    %v2952 = vadd.f32 %v2673, %v2935
    %v2953 = vadd.f32 %v2523, %v2785
    %v2954 = vadd.f32 %v2542, %v2804
    %v2955 = vadd.f32 %v2561, %v2823
    %v2956 = vadd.f32 %v2580, %v2842
    %v2957 = vadd.f32 %v2599, %v2861
    %v2958 = vadd.f32 %v2618, %v2880
    %v2959 = vadd.f32 %v2637, %v2899
    %v2960 = vadd.f32 %v2656, %v2918
    %v2961 = vadd.f32 %v2675, %v2937
    %v2962 = vadd.f32 %v2526, %v2788
    %v2963 = vadd.f32 %v2545, %v2807
    %v2964 = vadd.f32 %v2564, %v2826
    %v2965 = vadd.f32 %v2583, %v2845
    %v2966 = vadd.f32 %v2602, %v2864
    %v2967 = vadd.f32 %v2621, %v2883
    %v2968 = vadd.f32 %v2640, %v2902
    %v2969 = vadd.f32 %v2659, %v2921
    %v2970 = vadd.f32 %v2678, %v2940
    %v2971 = vadd.f32 %v2528, %v2790
    %v2972 = vadd.f32 %v2547, %v2809
    %v2973 = vadd.f32 %v2566, %v2828
    %v2974 = vadd.f32 %v2585, %v2847
    %v2975 = vadd.f32 %v2604, %v2866
    %v2976 = vadd.f32 %v2623, %v2885
    %v2977 = vadd.f32 %v2642, %v2904
    %v2978 = vadd.f32 %v2661, %v2923
    %v2979 = vadd.f32 %v2680, %v2942
    %s2980 = scalar_lea.vmem [#allocation8], 48
    %v2981 = vld [vmem:[%s2980] sm:$0xf]
    %v2982 = vld [vmem:[%s2980 + $0x4] sm:$0xf]
    %v2983 = vld [vmem:[%s2980 + $0x8] sm:$0xf]
    %v2984 = vld [vmem:[%s2980 + $0xc] sm:$0xf]
    %v2989 = vunpack.c.l.b16 %v2981
    %v2990 = vunpack.c.l.b16 %v2982
    %v2991 = vunpack.c.l.b16 %v2983
    %v2992 = vunpack.c.l.b16 %v2984
    %v2993 = vpack.c.b16 %v2990, %v2989
    %v2994 = vpack.c.b16 %v2992, %v2991
    %2995 = vrot.lane.b32.xlu0 %v2212, 125
    %v2996 = vpop.permute.xlu0 %2995
    %2997 = vrot.lane.b32.xlu0 %v2213, 125
    %v2998 = vpop.permute.xlu0 %2997
    %2999 = vrot.lane.b32.xlu0 %v2214, 125
    %v3000 = vpop.permute.xlu0 %2999
    %3001 = vrot.lane.b32.xlu0 %v2215, 125
    %v3002 = vpop.permute.xlu0 %3001
    %3003 = vrot.lane.b32.xlu0 %v2216, 125
    %v3004 = vpop.permute.xlu0 %3003
    %3005 = vrot.lane.b32.xlu0 %v2217, 125
    %v3006 = vpop.permute.xlu0 %3005
    %3007 = vrot.lane.b32.xlu0 %v2218, 125
    %v3008 = vpop.permute.xlu0 %3007
    %3009 = vrot.lane.b32.xlu0 %v2219, 125
    %v3010 = vpop.permute.xlu0 %3009
    %3011 = vrot.lane.b32.xlu0 %v2220, 125
    %v3012 = vpop.permute.xlu0 %3011
    %3013 = vrot.lane.b32.xlu0 %v2221, 125
    %v3014 = vpop.permute.xlu0 %3013
    %3015 = vrot.lane.b32.xlu0 %v2222, 125
    %v3016 = vpop.permute.xlu0 %3015
    %3017 = vrot.lane.b32.xlu0 %v2223, 125
    %v3018 = vpop.permute.xlu0 %3017
    %3019 = vrot.lane.b32.xlu0 %v2224, 125
    %v3020 = vpop.permute.xlu0 %3019
    %3021 = vrot.lane.b32.xlu0 %v2225, 125
    %v3022 = vpop.permute.xlu0 %3021
    %3023 = vrot.lane.b32.xlu0 %v2226, 125
    %v3024 = vpop.permute.xlu0 %3023
    %3025 = vrot.lane.b32.xlu0 %v2227, 125
    %v3026 = vpop.permute.xlu0 %3025
    %3027 = vrot.lane.b32.xlu0 %v2228, 125
    %v3028 = vpop.permute.xlu0 %3027
    %3029 = vrot.lane.b32.xlu0 %v2229, 125
    %v3030 = vpop.permute.xlu0 %3029
    %v3031 = vsel %vm1254, %v2996, %v2998
    %v3032 = vsel %vm1254, %v2998, %v3000
    %v3033 = vsel %vm1254, %v3000, %v3002
    %v3034 = vsel %vm1254, %v3002, %v3004
    %v3035 = vsel %vm1254, %v3004, %v3006
    %v3036 = vsel %vm1254, %v3006, %v3008
    %v3037 = vsel %vm1254, %v3008, %v3010
    %v3038 = vsel %vm1254, %v3010, %v3012
    %v3039 = vsel %vm1254, %v3014, %v3016
    %v3040 = vsel %vm1254, %v3016, %v3018
    %v3041 = vsel %vm1254, %v3018, %v3020
    %v3042 = vsel %vm1254, %v3020, %v3022
    %v3043 = vsel %vm1254, %v3022, %v3024
    %v3044 = vsel %vm1254, %v3024, %v3026
    %v3045 = vsel %vm1254, %v3026, %v3028
    %v3046 = vsel %vm1254, %v3028, %v3030
    %v3066 = vsel %vm521, %v2993, 0
    %v3069 = vsel %vm521, %v2994, 0
    %3071 = vmatpush.bf16.msra.mxu0 0
    %3072 = vmatpush.bf16.msra.mxu0 0
    %3073 = vmatpush.bf16.msra.mxu0 0
    %3074 = vmatpush.bf16.msra.mxu0 0
    %3075 = vmatpush.bf16.msra.mxu0 0
    %3076 = vmatpush.bf16.msra.mxu0 0
    %3077 = vmatpush.bf16.msra.mxu0 %v3039
    %3078 = vmatpush.bf16.msra.mxu0 %v3031
    %3079 = vmatmul.bf16.gmra.mxu0 %v3066
    %v3080 = vpop.f32.mrf.mxu0
    %v3081 = vadd.f32 0.0, %v3080
    %v3082 = vpop.f32.mrf.mxu0
    %v3083 = vadd.f32 0.0, %v3082
    %3084 = vmatmul.bf16.gmra.mxu0 %v3069
    %v3085 = vpop.f32.mrf.mxu0
    %v3086 = vadd.f32 0.0, %v3085
    %v3087 = vpop.f32.mrf.mxu0
    %v3088 = vadd.f32 0.0, %v3087
    %3089 = vdwg.mxu0
    %3090 = vmatpush.bf16.msra.mxu0 0
    %3091 = vmatpush.bf16.msra.mxu0 0
    %3092 = vmatpush.bf16.msra.mxu0 0
    %3093 = vmatpush.bf16.msra.mxu0 0
    %3094 = vmatpush.bf16.msra.mxu0 0
    %3095 = vmatpush.bf16.msra.mxu0 0
    %3096 = vmatpush.bf16.msra.mxu0 %v3040
    %3097 = vmatpush.bf16.msra.mxu0 %v3032
    %3098 = vmatmul.bf16.gmra.mxu0 %v3066
    %v3099 = vpop.f32.mrf.mxu0
    %v3100 = vadd.f32 0.0, %v3099
    %v3101 = vpop.f32.mrf.mxu0
    %v3102 = vadd.f32 0.0, %v3101
    %3103 = vmatmul.bf16.gmra.mxu0 %v3069
    %v3104 = vpop.f32.mrf.mxu0
    %v3105 = vadd.f32 0.0, %v3104
    %v3106 = vpop.f32.mrf.mxu0
    %v3107 = vadd.f32 0.0, %v3106
    %3108 = vdwg.mxu0
    %3109 = vmatpush.bf16.msra.mxu0 0
    %3110 = vmatpush.bf16.msra.mxu0 0
    %3111 = vmatpush.bf16.msra.mxu0 0
    %3112 = vmatpush.bf16.msra.mxu0 0
    %3113 = vmatpush.bf16.msra.mxu0 0
    %3114 = vmatpush.bf16.msra.mxu0 0
    %3115 = vmatpush.bf16.msra.mxu0 %v3041
    %3116 = vmatpush.bf16.msra.mxu0 %v3033
    %3117 = vmatmul.bf16.gmra.mxu0 %v3066
    %v3118 = vpop.f32.mrf.mxu0
    %v3119 = vadd.f32 0.0, %v3118
    %v3120 = vpop.f32.mrf.mxu0
    %v3121 = vadd.f32 0.0, %v3120
    %3122 = vmatmul.bf16.gmra.mxu0 %v3069
    %v3123 = vpop.f32.mrf.mxu0
    %v3124 = vadd.f32 0.0, %v3123
    %v3125 = vpop.f32.mrf.mxu0
    %v3126 = vadd.f32 0.0, %v3125
    %3127 = vdwg.mxu0
    %3128 = vmatpush.bf16.msra.mxu0 0
    %3129 = vmatpush.bf16.msra.mxu0 0
    %3130 = vmatpush.bf16.msra.mxu0 0
    %3131 = vmatpush.bf16.msra.mxu0 0
    %3132 = vmatpush.bf16.msra.mxu0 0
    %3133 = vmatpush.bf16.msra.mxu0 0
    %3134 = vmatpush.bf16.msra.mxu0 %v3042
    %3135 = vmatpush.bf16.msra.mxu0 %v3034
    %3136 = vmatmul.bf16.gmra.mxu0 %v3066
    %v3137 = vpop.f32.mrf.mxu0
    %v3138 = vadd.f32 0.0, %v3137
    %v3139 = vpop.f32.mrf.mxu0
    %v3140 = vadd.f32 0.0, %v3139
    %3141 = vmatmul.bf16.gmra.mxu0 %v3069
    %v3142 = vpop.f32.mrf.mxu0
    %v3143 = vadd.f32 0.0, %v3142
    %v3144 = vpop.f32.mrf.mxu0
    %v3145 = vadd.f32 0.0, %v3144
    %3146 = vdwg.mxu0
    %3147 = vmatpush.bf16.msra.mxu0 0
    %3148 = vmatpush.bf16.msra.mxu0 0
    %3149 = vmatpush.bf16.msra.mxu0 0
    %3150 = vmatpush.bf16.msra.mxu0 0
    %3151 = vmatpush.bf16.msra.mxu0 0
    %3152 = vmatpush.bf16.msra.mxu0 0
    %3153 = vmatpush.bf16.msra.mxu0 %v3043
    %3154 = vmatpush.bf16.msra.mxu0 %v3035
    %3155 = vmatmul.bf16.gmra.mxu0 %v3066
    %v3156 = vpop.f32.mrf.mxu0
    %v3157 = vadd.f32 0.0, %v3156
    %v3158 = vpop.f32.mrf.mxu0
    %v3159 = vadd.f32 0.0, %v3158
    %3160 = vmatmul.bf16.gmra.mxu0 %v3069
    %v3161 = vpop.f32.mrf.mxu0
    %v3162 = vadd.f32 0.0, %v3161
    %v3163 = vpop.f32.mrf.mxu0
    %v3164 = vadd.f32 0.0, %v3163
    %3165 = vdwg.mxu0
    %3166 = vmatpush.bf16.msra.mxu0 0
    %3167 = vmatpush.bf16.msra.mxu0 0
    %3168 = vmatpush.bf16.msra.mxu0 0
    %3169 = vmatpush.bf16.msra.mxu0 0
    %3170 = vmatpush.bf16.msra.mxu0 0
    %3171 = vmatpush.bf16.msra.mxu0 0
    %3172 = vmatpush.bf16.msra.mxu0 %v3044
    %3173 = vmatpush.bf16.msra.mxu0 %v3036
    %3174 = vmatmul.bf16.gmra.mxu0 %v3066
    %v3175 = vpop.f32.mrf.mxu0
    %v3176 = vadd.f32 0.0, %v3175
    %v3177 = vpop.f32.mrf.mxu0
    %v3178 = vadd.f32 0.0, %v3177
    %3179 = vmatmul.bf16.gmra.mxu0 %v3069
    %v3180 = vpop.f32.mrf.mxu0
    %v3181 = vadd.f32 0.0, %v3180
    %v3182 = vpop.f32.mrf.mxu0
    %v3183 = vadd.f32 0.0, %v3182
    %3184 = vdwg.mxu0
    %3185 = vmatpush.bf16.msra.mxu0 0
    %3186 = vmatpush.bf16.msra.mxu0 0
    %3187 = vmatpush.bf16.msra.mxu0 0
    %3188 = vmatpush.bf16.msra.mxu0 0
    %3189 = vmatpush.bf16.msra.mxu0 0
    %3190 = vmatpush.bf16.msra.mxu0 0
    %3191 = vmatpush.bf16.msra.mxu0 %v3045
    %3192 = vmatpush.bf16.msra.mxu0 %v3037
    %3193 = vmatmul.bf16.gmra.mxu0 %v3066
    %v3194 = vpop.f32.mrf.mxu0
    %v3195 = vadd.f32 0.0, %v3194
    %v3196 = vpop.f32.mrf.mxu0
    %v3197 = vadd.f32 0.0, %v3196
    %3198 = vmatmul.bf16.gmra.mxu0 %v3069
    %v3199 = vpop.f32.mrf.mxu0
    %v3200 = vadd.f32 0.0, %v3199
    %v3201 = vpop.f32.mrf.mxu0
    %v3202 = vadd.f32 0.0, %v3201
    %3203 = vdwg.mxu0
    %3204 = vmatpush.bf16.msra.mxu0 0
    %3205 = vmatpush.bf16.msra.mxu0 0
    %3206 = vmatpush.bf16.msra.mxu0 0
    %3207 = vmatpush.bf16.msra.mxu0 0
    %3208 = vmatpush.bf16.msra.mxu0 0
    %3209 = vmatpush.bf16.msra.mxu0 0
    %3210 = vmatpush.bf16.msra.mxu0 %v3046
    %3211 = vmatpush.bf16.msra.mxu0 %v3038
    %3212 = vmatmul.bf16.gmra.mxu0 %v3066
    %v3213 = vpop.f32.mrf.mxu0
    %v3214 = vadd.f32 0.0, %v3213
    %v3215 = vpop.f32.mrf.mxu0
    %v3216 = vadd.f32 0.0, %v3215
    %3217 = vmatmul.bf16.gmra.mxu0 %v3069
    %v3218 = vpop.f32.mrf.mxu0
    %v3219 = vadd.f32 0.0, %v3218
    %v3220 = vpop.f32.mrf.mxu0
    %v3221 = vadd.f32 0.0, %v3220
    %3222 = vdwg.mxu0
    %3223 = vmatpush.bf16.msra.mxu0 0
    %3224 = vmatpush.bf16.msra.mxu0 0
    %3225 = vmatpush.bf16.msra.mxu0 0
    %3226 = vmatpush.bf16.msra.mxu0 0
    %3227 = vmatpush.bf16.msra.mxu0 0
    %3228 = vmatpush.bf16.msra.mxu0 0
    %3229 = vmatpush.bf16.msra.mxu0 %v3030
    %3230 = vmatpush.bf16.msra.mxu0 %v3012
    %3231 = vmatmul.bf16.gmra.mxu0 %v3066
    %v3232 = vpop.f32.mrf.mxu0
    %v3233 = vadd.f32 0.0, %v3232
    %v3234 = vpop.f32.mrf.mxu0
    %v3235 = vadd.f32 0.0, %v3234
    %3236 = vmatmul.bf16.gmra.mxu0 %v3069
    %v3237 = vpop.f32.mrf.mxu0
    %v3238 = vadd.f32 0.0, %v3237
    %v3239 = vpop.f32.mrf.mxu0
    %v3240 = vadd.f32 0.0, %v3239
    %3241 = vdwg.mxu0
    %v3242 = vadd.f32 %v2944, %v3081
    %v3243 = vadd.f32 %v2945, %v3100
    %v3244 = vadd.f32 %v2946, %v3119
    %v3245 = vadd.f32 %v2947, %v3138
    %v3246 = vadd.f32 %v2948, %v3157
    %v3247 = vadd.f32 %v2949, %v3176
    %v3248 = vadd.f32 %v2950, %v3195
    %v3249 = vadd.f32 %v2951, %v3214
    %v3250 = vadd.f32 %v2952, %v3233
    %v3251 = vadd.f32 %v2953, %v3083
    %v3252 = vadd.f32 %v2954, %v3102
    %v3253 = vadd.f32 %v2955, %v3121
    %v3254 = vadd.f32 %v2956, %v3140
    %v3255 = vadd.f32 %v2957, %v3159
    %v3256 = vadd.f32 %v2958, %v3178
    %v3257 = vadd.f32 %v2959, %v3197
    %v3258 = vadd.f32 %v2960, %v3216
    %v3259 = vadd.f32 %v2961, %v3235
    %v3260 = vadd.f32 %v2962, %v3086
    %v3261 = vadd.f32 %v2963, %v3105
    %v3262 = vadd.f32 %v2964, %v3124
    %v3263 = vadd.f32 %v2965, %v3143
    %v3264 = vadd.f32 %v2966, %v3162
    %v3265 = vadd.f32 %v2967, %v3181
    %v3266 = vadd.f32 %v2968, %v3200
    %v3267 = vadd.f32 %v2969, %v3219
    %v3268 = vadd.f32 %v2970, %v3238
    %v3269 = vadd.f32 %v2971, %v3088
    %v3270 = vadd.f32 %v2972, %v3107
    %v3271 = vadd.f32 %v2973, %v3126
    %v3272 = vadd.f32 %v2974, %v3145
    %v3273 = vadd.f32 %v2975, %v3164
    %v3274 = vadd.f32 %v2976, %v3183
    %v3275 = vadd.f32 %v2977, %v3202
    %v3276 = vadd.f32 %v2978, %v3221
    %v3277 = vadd.f32 %v2979, %v3240
    %s3278 = scalar_lea.vmem [#allocation8], 64
    %v3279 = vld [vmem:[%s3278] sm:$0xf]
    %v3280 = vld [vmem:[%s3278 + $0x4] sm:$0xf]
    %v3281 = vld [vmem:[%s3278 + $0x8] sm:$0xf]
    %v3282 = vld [vmem:[%s3278 + $0xc] sm:$0xf]
    %v3287 = vunpack.c.l.b16 %v3279
    %v3288 = vunpack.c.l.b16 %v3280
    %v3289 = vunpack.c.l.b16 %v3281
    %v3290 = vunpack.c.l.b16 %v3282
    %v3291 = vpack.c.b16 %v3288, %v3287
    %v3292 = vpack.c.b16 %v3290, %v3289
    %3293 = vrot.lane.b32.xlu0 %v2212, 124
    %v3294 = vpop.permute.xlu0 %3293
    %3295 = vrot.lane.b32.xlu0 %v2213, 124
    %v3296 = vpop.permute.xlu0 %3295
    %3297 = vrot.lane.b32.xlu0 %v2214, 124
    %v3298 = vpop.permute.xlu0 %3297
    %3299 = vrot.lane.b32.xlu0 %v2215, 124
    %v3300 = vpop.permute.xlu0 %3299
    %3301 = vrot.lane.b32.xlu0 %v2216, 124
    %v3302 = vpop.permute.xlu0 %3301
    %3303 = vrot.lane.b32.xlu0 %v2217, 124
    %v3304 = vpop.permute.xlu0 %3303
    %3305 = vrot.lane.b32.xlu0 %v2218, 124
    %v3306 = vpop.permute.xlu0 %3305
    %3307 = vrot.lane.b32.xlu0 %v2219, 124
    %v3308 = vpop.permute.xlu0 %3307
    %3309 = vrot.lane.b32.xlu0 %v2220, 124
    %v3310 = vpop.permute.xlu0 %3309
    %3311 = vrot.lane.b32.xlu0 %v2221, 124
    %v3312 = vpop.permute.xlu0 %3311
    %3313 = vrot.lane.b32.xlu0 %v2222, 124
    %v3314 = vpop.permute.xlu0 %3313
    %3315 = vrot.lane.b32.xlu0 %v2223, 124
    %v3316 = vpop.permute.xlu0 %3315
    %3317 = vrot.lane.b32.xlu0 %v2224, 124
    %v3318 = vpop.permute.xlu0 %3317
    %3319 = vrot.lane.b32.xlu0 %v2225, 124
    %v3320 = vpop.permute.xlu0 %3319
    %3321 = vrot.lane.b32.xlu0 %v2226, 124
    %v3322 = vpop.permute.xlu0 %3321
    %3323 = vrot.lane.b32.xlu0 %v2227, 124
    %v3324 = vpop.permute.xlu0 %3323
    %3325 = vrot.lane.b32.xlu0 %v2228, 124
    %v3326 = vpop.permute.xlu0 %3325
    %3327 = vrot.lane.b32.xlu0 %v2229, 124
    %v3328 = vpop.permute.xlu0 %3327
    %v3329 = vsel %vm1553, %v3294, %v3296
    %v3330 = vsel %vm1553, %v3296, %v3298
    %v3331 = vsel %vm1553, %v3298, %v3300
    %v3332 = vsel %vm1553, %v3300, %v3302
    %v3333 = vsel %vm1553, %v3302, %v3304
    %v3334 = vsel %vm1553, %v3304, %v3306
    %v3335 = vsel %vm1553, %v3306, %v3308
    %v3336 = vsel %vm1553, %v3308, %v3310
    %v3337 = vsel %vm1553, %v3312, %v3314
    %v3338 = vsel %vm1553, %v3314, %v3316
    %v3339 = vsel %vm1553, %v3316, %v3318
    %v3340 = vsel %vm1553, %v3318, %v3320
    %v3341 = vsel %vm1553, %v3320, %v3322
    %v3342 = vsel %vm1553, %v3322, %v3324
    %v3343 = vsel %vm1553, %v3324, %v3326
    %v3344 = vsel %vm1553, %v3326, %v3328
    %v3364 = vsel %vm521, %v3291, 0
    %v3367 = vsel %vm521, %v3292, 0
    %3369 = vmatpush.bf16.msra.mxu0 0
    %3370 = vmatpush.bf16.msra.mxu0 0
    %3371 = vmatpush.bf16.msra.mxu0 0
    %3372 = vmatpush.bf16.msra.mxu0 0
    %3373 = vmatpush.bf16.msra.mxu0 0
    %3374 = vmatpush.bf16.msra.mxu0 0
    %3375 = vmatpush.bf16.msra.mxu0 %v3337
    %3376 = vmatpush.bf16.msra.mxu0 %v3329
    %3377 = vmatmul.bf16.gmra.mxu0 %v3364
    %v3378 = vpop.f32.mrf.mxu0
    %v3379 = vadd.f32 0.0, %v3378
    %v3380 = vpop.f32.mrf.mxu0
    %v3381 = vadd.f32 0.0, %v3380
    %3382 = vmatmul.bf16.gmra.mxu0 %v3367
    %v3383 = vpop.f32.mrf.mxu0
    %v3384 = vadd.f32 0.0, %v3383
    %v3385 = vpop.f32.mrf.mxu0
    %v3386 = vadd.f32 0.0, %v3385
    %3387 = vdwg.mxu0
    %3388 = vmatpush.bf16.msra.mxu0 0
    %3389 = vmatpush.bf16.msra.mxu0 0
    %3390 = vmatpush.bf16.msra.mxu0 0
    %3391 = vmatpush.bf16.msra.mxu0 0
    %3392 = vmatpush.bf16.msra.mxu0 0
    %3393 = vmatpush.bf16.msra.mxu0 0
    %3394 = vmatpush.bf16.msra.mxu0 %v3338
    %3395 = vmatpush.bf16.msra.mxu0 %v3330
    %3396 = vmatmul.bf16.gmra.mxu0 %v3364
    %v3397 = vpop.f32.mrf.mxu0
    %v3398 = vadd.f32 0.0, %v3397
    %v3399 = vpop.f32.mrf.mxu0
    %v3400 = vadd.f32 0.0, %v3399
    %3401 = vmatmul.bf16.gmra.mxu0 %v3367
    %v3402 = vpop.f32.mrf.mxu0
    %v3403 = vadd.f32 0.0, %v3402
    %v3404 = vpop.f32.mrf.mxu0
    %v3405 = vadd.f32 0.0, %v3404
    %3406 = vdwg.mxu0
    %3407 = vmatpush.bf16.msra.mxu0 0
    %3408 = vmatpush.bf16.msra.mxu0 0
    %3409 = vmatpush.bf16.msra.mxu0 0
    %3410 = vmatpush.bf16.msra.mxu0 0
    %3411 = vmatpush.bf16.msra.mxu0 0
    %3412 = vmatpush.bf16.msra.mxu0 0
    %3413 = vmatpush.bf16.msra.mxu0 %v3339
    %3414 = vmatpush.bf16.msra.mxu0 %v3331
    %3415 = vmatmul.bf16.gmra.mxu0 %v3364
    %v3416 = vpop.f32.mrf.mxu0
    %v3417 = vadd.f32 0.0, %v3416
    %v3418 = vpop.f32.mrf.mxu0
    %v3419 = vadd.f32 0.0, %v3418
    %3420 = vmatmul.bf16.gmra.mxu0 %v3367
    %v3421 = vpop.f32.mrf.mxu0
    %v3422 = vadd.f32 0.0, %v3421
    %v3423 = vpop.f32.mrf.mxu0
    %v3424 = vadd.f32 0.0, %v3423
    %3425 = vdwg.mxu0
    %3426 = vmatpush.bf16.msra.mxu0 0
    %3427 = vmatpush.bf16.msra.mxu0 0
    %3428 = vmatpush.bf16.msra.mxu0 0
    %3429 = vmatpush.bf16.msra.mxu0 0
    %3430 = vmatpush.bf16.msra.mxu0 0
    %3431 = vmatpush.bf16.msra.mxu0 0
    %3432 = vmatpush.bf16.msra.mxu0 %v3340
    %3433 = vmatpush.bf16.msra.mxu0 %v3332
    %3434 = vmatmul.bf16.gmra.mxu0 %v3364
    %v3435 = vpop.f32.mrf.mxu0
    %v3436 = vadd.f32 0.0, %v3435
    %v3437 = vpop.f32.mrf.mxu0
    %v3438 = vadd.f32 0.0, %v3437
    %3439 = vmatmul.bf16.gmra.mxu0 %v3367
    %v3440 = vpop.f32.mrf.mxu0
    %v3441 = vadd.f32 0.0, %v3440
    %v3442 = vpop.f32.mrf.mxu0
    %v3443 = vadd.f32 0.0, %v3442
    %3444 = vdwg.mxu0
    %3445 = vmatpush.bf16.msra.mxu0 0
    %3446 = vmatpush.bf16.msra.mxu0 0
    %3447 = vmatpush.bf16.msra.mxu0 0
    %3448 = vmatpush.bf16.msra.mxu0 0
    %3449 = vmatpush.bf16.msra.mxu0 0
    %3450 = vmatpush.bf16.msra.mxu0 0
    %3451 = vmatpush.bf16.msra.mxu0 %v3341
    %3452 = vmatpush.bf16.msra.mxu0 %v3333
    %3453 = vmatmul.bf16.gmra.mxu0 %v3364
    %v3454 = vpop.f32.mrf.mxu0
    %v3455 = vadd.f32 0.0, %v3454
    %v3456 = vpop.f32.mrf.mxu0
    %v3457 = vadd.f32 0.0, %v3456
    %3458 = vmatmul.bf16.gmra.mxu0 %v3367
    %v3459 = vpop.f32.mrf.mxu0
    %v3460 = vadd.f32 0.0, %v3459
    %v3461 = vpop.f32.mrf.mxu0
    %v3462 = vadd.f32 0.0, %v3461
    %3463 = vdwg.mxu0
    %3464 = vmatpush.bf16.msra.mxu0 0
    %3465 = vmatpush.bf16.msra.mxu0 0
    %3466 = vmatpush.bf16.msra.mxu0 0
    %3467 = vmatpush.bf16.msra.mxu0 0
    %3468 = vmatpush.bf16.msra.mxu0 0
    %3469 = vmatpush.bf16.msra.mxu0 0
    %3470 = vmatpush.bf16.msra.mxu0 %v3342
    %3471 = vmatpush.bf16.msra.mxu0 %v3334
    %3472 = vmatmul.bf16.gmra.mxu0 %v3364
    %v3473 = vpop.f32.mrf.mxu0
    %v3474 = vadd.f32 0.0, %v3473
    %v3475 = vpop.f32.mrf.mxu0
    %v3476 = vadd.f32 0.0, %v3475
    %3477 = vmatmul.bf16.gmra.mxu0 %v3367
    %v3478 = vpop.f32.mrf.mxu0
    %v3479 = vadd.f32 0.0, %v3478
    %v3480 = vpop.f32.mrf.mxu0
    %v3481 = vadd.f32 0.0, %v3480
    %3482 = vdwg.mxu0
    %3483 = vmatpush.bf16.msra.mxu0 0
    %3484 = vmatpush.bf16.msra.mxu0 0
    %3485 = vmatpush.bf16.msra.mxu0 0
    %3486 = vmatpush.bf16.msra.mxu0 0
    %3487 = vmatpush.bf16.msra.mxu0 0
    %3488 = vmatpush.bf16.msra.mxu0 0
    %3489 = vmatpush.bf16.msra.mxu0 %v3343
    %3490 = vmatpush.bf16.msra.mxu0 %v3335
    %3491 = vmatmul.bf16.gmra.mxu0 %v3364
    %v3492 = vpop.f32.mrf.mxu0
    %v3493 = vadd.f32 0.0, %v3492
    %v3494 = vpop.f32.mrf.mxu0
    %v3495 = vadd.f32 0.0, %v3494
    %3496 = vmatmul.bf16.gmra.mxu0 %v3367
    %v3497 = vpop.f32.mrf.mxu0
    %v3498 = vadd.f32 0.0, %v3497
    %v3499 = vpop.f32.mrf.mxu0
    %v3500 = vadd.f32 0.0, %v3499
    %3501 = vdwg.mxu0
    %3502 = vmatpush.bf16.msra.mxu0 0
    %3503 = vmatpush.bf16.msra.mxu0 0
    %3504 = vmatpush.bf16.msra.mxu0 0
    %3505 = vmatpush.bf16.msra.mxu0 0
    %3506 = vmatpush.bf16.msra.mxu0 0
    %3507 = vmatpush.bf16.msra.mxu0 0
    %3508 = vmatpush.bf16.msra.mxu0 %v3344
    %3509 = vmatpush.bf16.msra.mxu0 %v3336
    %3510 = vmatmul.bf16.gmra.mxu0 %v3364
    %v3511 = vpop.f32.mrf.mxu0
    %v3512 = vadd.f32 0.0, %v3511
    %v3513 = vpop.f32.mrf.mxu0
    %v3514 = vadd.f32 0.0, %v3513
    %3515 = vmatmul.bf16.gmra.mxu0 %v3367
    %v3516 = vpop.f32.mrf.mxu0
    %v3517 = vadd.f32 0.0, %v3516
    %v3518 = vpop.f32.mrf.mxu0
    %v3519 = vadd.f32 0.0, %v3518
    %3520 = vdwg.mxu0
    %3521 = vmatpush.bf16.msra.mxu0 0
    %3522 = vmatpush.bf16.msra.mxu0 0
    %3523 = vmatpush.bf16.msra.mxu0 0
    %3524 = vmatpush.bf16.msra.mxu0 0
    %3525 = vmatpush.bf16.msra.mxu0 0
    %3526 = vmatpush.bf16.msra.mxu0 0
    %3527 = vmatpush.bf16.msra.mxu0 %v3328
    %3528 = vmatpush.bf16.msra.mxu0 %v3310
    %3529 = vmatmul.bf16.gmra.mxu0 %v3364
    %v3530 = vpop.f32.mrf.mxu0
    %v3531 = vadd.f32 0.0, %v3530
    %v3532 = vpop.f32.mrf.mxu0
    %v3533 = vadd.f32 0.0, %v3532
    %3534 = vmatmul.bf16.gmra.mxu0 %v3367
    %v3535 = vpop.f32.mrf.mxu0
    %v3536 = vadd.f32 0.0, %v3535
    %v3537 = vpop.f32.mrf.mxu0
    %v3538 = vadd.f32 0.0, %v3537
    %3539 = vdwg.mxu0
    %v3540 = vadd.f32 %v3242, %v3379
    %v3541 = vadd.f32 %v3243, %v3398
    %v3542 = vadd.f32 %v3244, %v3417
    %v3543 = vadd.f32 %v3245, %v3436
    %v3544 = vadd.f32 %v3246, %v3455
    %v3545 = vadd.f32 %v3247, %v3474
    %v3546 = vadd.f32 %v3248, %v3493
    %v3547 = vadd.f32 %v3249, %v3512
    %v3548 = vadd.f32 %v3250, %v3531
    %v3549 = vadd.f32 %v3251, %v3381
    %v3550 = vadd.f32 %v3252, %v3400
    %v3551 = vadd.f32 %v3253, %v3419
    %v3552 = vadd.f32 %v3254, %v3438
    %v3553 = vadd.f32 %v3255, %v3457
    %v3554 = vadd.f32 %v3256, %v3476
    %v3555 = vadd.f32 %v3257, %v3495
    %v3556 = vadd.f32 %v3258, %v3514
    %v3557 = vadd.f32 %v3259, %v3533
    %v3558 = vadd.f32 %v3260, %v3384
    %v3559 = vadd.f32 %v3261, %v3403
    %v3560 = vadd.f32 %v3262, %v3422
    %v3561 = vadd.f32 %v3263, %v3441
    %v3562 = vadd.f32 %v3264, %v3460
    %v3563 = vadd.f32 %v3265, %v3479
    %v3564 = vadd.f32 %v3266, %v3498
    %v3565 = vadd.f32 %v3267, %v3517
    %v3566 = vadd.f32 %v3268, %v3536
    %v3567 = vadd.f32 %v3269, %v3386
    %v3568 = vadd.f32 %v3270, %v3405
    %v3569 = vadd.f32 %v3271, %v3424
    %v3570 = vadd.f32 %v3272, %v3443
    %v3571 = vadd.f32 %v3273, %v3462
    %v3572 = vadd.f32 %v3274, %v3481
    %v3573 = vadd.f32 %v3275, %v3500
    %v3574 = vadd.f32 %v3276, %v3519
    %v3575 = vadd.f32 %v3277, %v3538
    %v3576 = vld [vmem:[%s4] sm:$0xff]
    %v3577 = vld [vmem:[%s4 + $0x8] sm:$0xff]
    %v3578 = vld [vmem:[%s4 + $0x10] sm:$0xff]
    %v3579 = vld [vmem:[%s4 + $0x18] sm:$0xff]
    %3581 = vset.pattern.permute.xlu0 0
    %3582 = vperm.xlu0 %3581, %v3576
    %v3583 = vpop.permute.xlu0 %3582
    %3586 = vset.pattern.permute.xlu0 0
    %3587 = vperm.xlu0 %3586, %v3577
    %v3588 = vpop.permute.xlu0 %3587
    %3591 = vset.pattern.permute.xlu0 0
    %3592 = vperm.xlu0 %3591, %v3578
    %v3593 = vpop.permute.xlu0 %3592
    %3596 = vset.pattern.permute.xlu0 0
    %3597 = vperm.xlu0 %3596, %v3579
    %v3598 = vpop.permute.xlu0 %3597
    %v3600 = vadd.f32 %v3540, %v3583
    %v3601 = vadd.f32 %v3541, %v3583
    %v3602 = vadd.f32 %v3542, %v3583
    %v3603 = vadd.f32 %v3543, %v3583
    %v3604 = vadd.f32 %v3544, %v3583
    %v3605 = vadd.f32 %v3545, %v3583
    %v3606 = vadd.f32 %v3546, %v3583
    %v3607 = vadd.f32 %v3547, %v3583
    %v3608 = vadd.f32 %v3548, %v3583
    %v3609 = vadd.f32 %v3549, %v3588
    %v3610 = vadd.f32 %v3550, %v3588
    %v3611 = vadd.f32 %v3551, %v3588
    %v3612 = vadd.f32 %v3552, %v3588
    %v3613 = vadd.f32 %v3553, %v3588
    %v3614 = vadd.f32 %v3554, %v3588
    %v3615 = vadd.f32 %v3555, %v3588
    %v3616 = vadd.f32 %v3556, %v3588
    %v3617 = vadd.f32 %v3557, %v3588
    %v3618 = vadd.f32 %v3558, %v3593
    %v3619 = vadd.f32 %v3559, %v3593
    %v3620 = vadd.f32 %v3560, %v3593
    %v3621 = vadd.f32 %v3561, %v3593
    %v3622 = vadd.f32 %v3562, %v3593
    %v3623 = vadd.f32 %v3563, %v3593
    %v3624 = vadd.f32 %v3564, %v3593
    %v3625 = vadd.f32 %v3565, %v3593
    %v3626 = vadd.f32 %v3566, %v3593
    %v3627 = vadd.f32 %v3567, %v3598
    %v3628 = vadd.f32 %v3568, %v3598
    %v3629 = vadd.f32 %v3569, %v3598
    %v3630 = vadd.f32 %v3570, %v3598
    %v3631 = vadd.f32 %v3571, %v3598
    %v3632 = vadd.f32 %v3572, %v3598
    %v3633 = vadd.f32 %v3573, %v3598
    %v3634 = vadd.f32 %v3574, %v3598
    %v3635 = vadd.f32 %v3575, %v3598
    %v3636 = vld [vmem:[#allocation3] sm:$0xff]
    %v3637 = vld [vmem:[#allocation3 + $0x8] sm:$0xff]
    %v3638 = vld [vmem:[#allocation3 + $0x10] sm:$0xff]
    %v3639 = vld [vmem:[#allocation3 + $0x18] sm:$0xff]
    %v3640 = vld [vmem:[#allocation3 + $0x20] sm:$0xff]
    %v3641 = vld [vmem:[#allocation3 + $0x28] sm:$0xff]
    %v3642 = vld [vmem:[#allocation3 + $0x30] sm:$0xff]
    %v3643 = vld [vmem:[#allocation3 + $0x38] sm:$0xff]
    %v3644 = vmax.f32 %v3636, 0.0
    %v3645 = vmax.f32 %v3637, 0.0
    %v3646 = vmax.f32 %v3638, 0.0
    %v3647 = vmax.f32 %v3639, 0.0
    %v3648 = vmax.f32 %v3640, 0.0
    %v3649 = vmax.f32 %v3641, 0.0
    %v3650 = vmax.f32 %v3642, 0.0
    %v3651 = vmax.f32 %v3643, 0.0
    %v3652 = vmul.f32 %v3600, 0.3
    %v3653 = vmul.f32 %v3601, 0.3
    %v3654 = vmul.f32 %v3609, 0.3
    %v3655 = vmul.f32 %v3610, 0.3
    %v3656 = vmul.f32 %v3618, 0.3
    %v3657 = vmul.f32 %v3619, 0.3
    %v3658 = vmul.f32 %v3627, 0.3
    %v3659 = vmul.f32 %v3628, 0.3
    %v3660 = vadd.f32 %v3644, %v3652
    %v3661 = vadd.f32 %v3645, %v3653
    %v3662 = vadd.f32 %v3646, %v3654
    %v3663 = vadd.f32 %v3647, %v3655
    %v3664 = vadd.f32 %v3648, %v3656
    %v3665 = vadd.f32 %v3649, %v3657
    %v3666 = vadd.f32 %v3650, %v3658
    %v3667 = vadd.f32 %v3651, %v3659
    %3668 = vst [vmem:[#allocation9] sm:$0xff] %v3660
    %3669 = vst [vmem:[#allocation9 + $0x8] sm:$0xff] %v3661
    %3670 = vst [vmem:[#allocation9 + $0x10] sm:$0xff] %v3662
    %3671 = vst [vmem:[#allocation9 + $0x18] sm:$0xff] %v3663
    %3672 = vst [vmem:[#allocation9 + $0x20] sm:$0xff] %v3664
    %3673 = vst [vmem:[#allocation9 + $0x28] sm:$0xff] %v3665
    %3674 = vst [vmem:[#allocation9 + $0x30] sm:$0xff] %v3666
    %3675 = vst [vmem:[#allocation9 + $0x38] sm:$0xff] %v3667
    %v3676 = vld [vmem:[%s154] sm:$0xff]
    %v3677 = vld [vmem:[%s154 + $0x8] sm:$0xff]
    %v3678 = vld [vmem:[%s154 + $0x10] sm:$0xff]
    %v3679 = vld [vmem:[%s154 + $0x18] sm:$0xff]
    %v3680 = vld [vmem:[%s154 + $0x20] sm:$0xff]
    %v3681 = vld [vmem:[%s154 + $0x28] sm:$0xff]
    %v3682 = vld [vmem:[%s154 + $0x30] sm:$0xff]
    %v3683 = vld [vmem:[%s154 + $0x38] sm:$0xff]
    %v3684 = vmax.f32 %v3676, 0.0
    %v3685 = vmax.f32 %v3677, 0.0
    %v3686 = vmax.f32 %v3678, 0.0
    %v3687 = vmax.f32 %v3679, 0.0
    %v3688 = vmax.f32 %v3680, 0.0
    %v3689 = vmax.f32 %v3681, 0.0
    %v3690 = vmax.f32 %v3682, 0.0
    %v3691 = vmax.f32 %v3683, 0.0
    %v3692 = vmul.f32 %v3602, 0.3
    %v3693 = vmul.f32 %v3603, 0.3
    %v3694 = vmul.f32 %v3604, 0.3
    %v3695 = vmul.f32 %v3611, 0.3
    %v3696 = vmul.f32 %v3612, 0.3
    %v3697 = vmul.f32 %v3613, 0.3
    %v3698 = vmul.f32 %v3620, 0.3
    %v3699 = vmul.f32 %v3621, 0.3
    %v3700 = vmul.f32 %v3622, 0.3
    %v3701 = vmul.f32 %v3629, 0.3
    %v3702 = vmul.f32 %v3630, 0.3
    %v3703 = vmul.f32 %v3631, 0.3
    %3716 = vrot.lane.b32.xlu0 %v3692, 124
    %v3717 = vpop.permute.xlu0 %3716
    %3718 = vrot.lane.b32.xlu0 %v3693, 124
    %v3719 = vpop.permute.xlu0 %3718
    %3720 = vrot.lane.b32.xlu0 %v3694, 124
    %v3721 = vpop.permute.xlu0 %3720
    %3722 = vrot.lane.b32.xlu0 %v3695, 124
    %v3723 = vpop.permute.xlu0 %3722
    %3724 = vrot.lane.b32.xlu0 %v3696, 124
    %v3725 = vpop.permute.xlu0 %3724
    %3726 = vrot.lane.b32.xlu0 %v3697, 124
    %v3727 = vpop.permute.xlu0 %3726
    %3728 = vrot.lane.b32.xlu0 %v3698, 124
    %v3729 = vpop.permute.xlu0 %3728
    %3730 = vrot.lane.b32.xlu0 %v3699, 124
    %v3731 = vpop.permute.xlu0 %3730
    %3732 = vrot.lane.b32.xlu0 %v3700, 124
    %v3733 = vpop.permute.xlu0 %3732
    %3734 = vrot.lane.b32.xlu0 %v3701, 124
    %v3735 = vpop.permute.xlu0 %3734
    %3736 = vrot.lane.b32.xlu0 %v3702, 124
    %v3737 = vpop.permute.xlu0 %3736
    %3738 = vrot.lane.b32.xlu0 %v3703, 124
    %v3739 = vpop.permute.xlu0 %3738
    %vm3740 = vcmask 1014784
    %v3741 = vsel %vm3740, %v3717, %v3719
    %v3742 = vsel %vm3740, %v3719, %v3721
    %v3743 = vsel %vm3740, %v3723, %v3725
    %v3744 = vsel %vm3740, %v3725, %v3727
    %v3745 = vsel %vm3740, %v3729, %v3731
    %v3746 = vsel %vm3740, %v3731, %v3733
    %v3747 = vsel %vm3740, %v3735, %v3737
    %v3748 = vsel %vm3740, %v3737, %v3739
    %v3757 = vadd.f32 %v3684, %v3741
    %v3758 = vadd.f32 %v3685, %v3742
    %v3759 = vadd.f32 %v3686, %v3743
    %v3760 = vadd.f32 %v3687, %v3744
    %v3761 = vadd.f32 %v3688, %v3745
    %v3762 = vadd.f32 %v3689, %v3746
    %v3763 = vadd.f32 %v3690, %v3747
    %v3764 = vadd.f32 %v3691, %v3748
    %s3765 = scalar_lea.vmem [#allocation9], 64
    %3766 = vst [vmem:[%s3765] sm:$0xff] %v3757
    %3767 = vst [vmem:[%s3765 + $0x8] sm:$0xff] %v3758
    %3768 = vst [vmem:[%s3765 + $0x10] sm:$0xff] %v3759
    %3769 = vst [vmem:[%s3765 + $0x18] sm:$0xff] %v3760
    %3770 = vst [vmem:[%s3765 + $0x20] sm:$0xff] %v3761
    %3771 = vst [vmem:[%s3765 + $0x28] sm:$0xff] %v3762
    %3772 = vst [vmem:[%s3765 + $0x30] sm:$0xff] %v3763
    %3773 = vst [vmem:[%s3765 + $0x38] sm:$0xff] %v3764
    %v3774 = vld [vmem:[%s215] sm:$0xff]
    %v3775 = vld [vmem:[%s215 + $0x8] sm:$0xff]
    %v3776 = vld [vmem:[%s215 + $0x10] sm:$0xff]
    %v3777 = vld [vmem:[%s215 + $0x18] sm:$0xff]
    %v3778 = vld [vmem:[%s215 + $0x20] sm:$0xff]
    %v3779 = vld [vmem:[%s215 + $0x28] sm:$0xff]
    %v3780 = vld [vmem:[%s215 + $0x30] sm:$0xff]
    %v3781 = vld [vmem:[%s215 + $0x38] sm:$0xff]
    %v3782 = vmax.f32 %v3774, 0.0
    %v3783 = vmax.f32 %v3775, 0.0
    %v3784 = vmax.f32 %v3776, 0.0
    %v3785 = vmax.f32 %v3777, 0.0
    %v3786 = vmax.f32 %v3778, 0.0
    %v3787 = vmax.f32 %v3779, 0.0
    %v3788 = vmax.f32 %v3780, 0.0
    %v3789 = vmax.f32 %v3781, 0.0
    %v3790 = vmul.f32 %v3605, 0.3
    %v3791 = vmul.f32 %v3606, 0.3
    %v3792 = vmul.f32 %v3614, 0.3
    %v3793 = vmul.f32 %v3615, 0.3
    %v3794 = vmul.f32 %v3623, 0.3
    %v3795 = vmul.f32 %v3624, 0.3
    %v3796 = vmul.f32 %v3632, 0.3
    %v3797 = vmul.f32 %v3633, 0.3
    %3806 = vrot.lane.b32.xlu0 %v3694, 120
    %v3807 = vpop.permute.xlu0 %3806
    %3808 = vrot.lane.b32.xlu0 %v3790, 120
    %v3809 = vpop.permute.xlu0 %3808
    %3810 = vrot.lane.b32.xlu0 %v3791, 120
    %v3811 = vpop.permute.xlu0 %3810
    %3812 = vrot.lane.b32.xlu0 %v3697, 120
    %v3813 = vpop.permute.xlu0 %3812
    %3814 = vrot.lane.b32.xlu0 %v3792, 120
    %v3815 = vpop.permute.xlu0 %3814
    %3816 = vrot.lane.b32.xlu0 %v3793, 120
    %v3817 = vpop.permute.xlu0 %3816
    %3818 = vrot.lane.b32.xlu0 %v3700, 120
    %v3819 = vpop.permute.xlu0 %3818
    %3820 = vrot.lane.b32.xlu0 %v3794, 120
    %v3821 = vpop.permute.xlu0 %3820
    %3822 = vrot.lane.b32.xlu0 %v3795, 120
    %v3823 = vpop.permute.xlu0 %3822
    %3824 = vrot.lane.b32.xlu0 %v3703, 120
    %v3825 = vpop.permute.xlu0 %3824
    %3826 = vrot.lane.b32.xlu0 %v3796, 120
    %v3827 = vpop.permute.xlu0 %3826
    %3828 = vrot.lane.b32.xlu0 %v3797, 120
    %v3829 = vpop.permute.xlu0 %3828
    %vm3830 = vcmask 982016
    %v3831 = vsel %vm3830, %v3807, %v3809
    %v3832 = vsel %vm3830, %v3809, %v3811
    %v3833 = vsel %vm3830, %v3813, %v3815
    %v3834 = vsel %vm3830, %v3815, %v3817
    %v3835 = vsel %vm3830, %v3819, %v3821
    %v3836 = vsel %vm3830, %v3821, %v3823
    %v3837 = vsel %vm3830, %v3825, %v3827
    %v3838 = vsel %vm3830, %v3827, %v3829
    %v3847 = vadd.f32 %v3782, %v3831
    %v3848 = vadd.f32 %v3783, %v3832
    %v3849 = vadd.f32 %v3784, %v3833
    %v3850 = vadd.f32 %v3785, %v3834
    %v3851 = vadd.f32 %v3786, %v3835
    %v3852 = vadd.f32 %v3787, %v3836
    %v3853 = vadd.f32 %v3788, %v3837
    %v3854 = vadd.f32 %v3789, %v3838
    %s3855 = scalar_lea.vmem [#allocation9], 128
    %3856 = vst [vmem:[%s3855] sm:$0xff] %v3847
    %3857 = vst [vmem:[%s3855 + $0x8] sm:$0xff] %v3848
    %3858 = vst [vmem:[%s3855 + $0x10] sm:$0xff] %v3849
    %3859 = vst [vmem:[%s3855 + $0x18] sm:$0xff] %v3850
    %3860 = vst [vmem:[%s3855 + $0x20] sm:$0xff] %v3851
    %3861 = vst [vmem:[%s3855 + $0x28] sm:$0xff] %v3852
    %3862 = vst [vmem:[%s3855 + $0x30] sm:$0xff] %v3853
    %3863 = vst [vmem:[%s3855 + $0x38] sm:$0xff] %v3854
    %v3864 = vld [vmem:[%s276] sm:$0xff]
    %v3865 = vld [vmem:[%s276 + $0x8] sm:$0xff]
    %v3866 = vld [vmem:[%s276 + $0x10] sm:$0xff]
    %v3867 = vld [vmem:[%s276 + $0x18] sm:$0xff]
    %v3868 = vld [vmem:[%s276 + $0x20] sm:$0xff]
    %v3869 = vld [vmem:[%s276 + $0x28] sm:$0xff]
    %v3870 = vld [vmem:[%s276 + $0x30] sm:$0xff]
    %v3871 = vld [vmem:[%s276 + $0x38] sm:$0xff]
    %v3872 = vmax.f32 %v3864, 0.0
    %v3873 = vmax.f32 %v3865, 0.0
    %v3874 = vmax.f32 %v3866, 0.0
    %v3875 = vmax.f32 %v3867, 0.0
    %v3876 = vmax.f32 %v3868, 0.0
    %v3877 = vmax.f32 %v3869, 0.0
    %v3878 = vmax.f32 %v3870, 0.0
    %v3879 = vmax.f32 %v3871, 0.0
    %v3880 = vmul.f32 %v3607, 0.3
    %v3881 = vmul.f32 %v3608, 0.3
    %v3882 = vmul.f32 %v3616, 0.3
    %v3883 = vmul.f32 %v3617, 0.3
    %v3884 = vmul.f32 %v3625, 0.3
    %v3885 = vmul.f32 %v3626, 0.3
    %v3886 = vmul.f32 %v3634, 0.3
    %v3887 = vmul.f32 %v3635, 0.3
    %3896 = vrot.lane.b32.xlu0 %v3791, 116
    %v3897 = vpop.permute.xlu0 %3896
    %3898 = vrot.lane.b32.xlu0 %v3880, 116
    %v3899 = vpop.permute.xlu0 %3898
    %3900 = vrot.lane.b32.xlu0 %v3881, 116
    %v3901 = vpop.permute.xlu0 %3900
    %3902 = vrot.lane.b32.xlu0 %v3793, 116
    %v3903 = vpop.permute.xlu0 %3902
    %3904 = vrot.lane.b32.xlu0 %v3882, 116
    %v3905 = vpop.permute.xlu0 %3904
    %3906 = vrot.lane.b32.xlu0 %v3883, 116
    %v3907 = vpop.permute.xlu0 %3906
    %3908 = vrot.lane.b32.xlu0 %v3795, 116
    %v3909 = vpop.permute.xlu0 %3908
    %3910 = vrot.lane.b32.xlu0 %v3884, 116
    %v3911 = vpop.permute.xlu0 %3910
    %3912 = vrot.lane.b32.xlu0 %v3885, 116
    %v3913 = vpop.permute.xlu0 %3912
    %3914 = vrot.lane.b32.xlu0 %v3797, 116
    %v3915 = vpop.permute.xlu0 %3914
    %3916 = vrot.lane.b32.xlu0 %v3886, 116
    %v3917 = vpop.permute.xlu0 %3916
    %3918 = vrot.lane.b32.xlu0 %v3887, 116
    %v3919 = vpop.permute.xlu0 %3918
    %vm3920 = vcmask 949248
    %v3921 = vsel %vm3920, %v3897, %v3899
    %v3922 = vsel %vm3920, %v3899, %v3901
    %v3923 = vsel %vm3920, %v3903, %v3905
    %v3924 = vsel %vm3920, %v3905, %v3907
    %v3925 = vsel %vm3920, %v3909, %v3911
    %v3926 = vsel %vm3920, %v3911, %v3913
    %v3927 = vsel %vm3920, %v3915, %v3917
    %v3928 = vsel %vm3920, %v3917, %v3919
    %v3937 = vadd.f32 %v3872, %v3921
    %v3938 = vadd.f32 %v3873, %v3922
    %v3939 = vadd.f32 %v3874, %v3923
    %v3940 = vadd.f32 %v3875, %v3924
    %v3941 = vadd.f32 %v3876, %v3925
    %v3942 = vadd.f32 %v3877, %v3926
    %v3943 = vadd.f32 %v3878, %v3927
    %v3944 = vadd.f32 %v3879, %v3928
    %s3945 = scalar_lea.vmem [#allocation9], 192
    %3946 = vst [vmem:[%s3945] sm:$0xff] %v3937
    %3947 = vst [vmem:[%s3945 + $0x8] sm:$0xff] %v3938
    %3948 = vst [vmem:[%s3945 + $0x10] sm:$0xff] %v3939
    %3949 = vst [vmem:[%s3945 + $0x18] sm:$0xff] %v3940
    %3950 = vst [vmem:[%s3945 + $0x20] sm:$0xff] %v3941
    %3951 = vst [vmem:[%s3945 + $0x28] sm:$0xff] %v3942
    %3952 = vst [vmem:[%s3945 + $0x30] sm:$0xff] %v3943
    %3953 = vst [vmem:[%s3945 + $0x38] sm:$0xff] %v3944
    // Predicated region
    $region34: #{tpu_custom_call.1} parent=1 // pred_check
      _
    $region35: #{tpu_custom_call.1} parent=1 // pred_check_branch
      %3955 = sbr.rel (0) target = $region37
    $region36: #{tpu_custom_call.1} parent=1 // pred_region
      %3957 = vsyncadd [#allocation5], 0
      %s3958 = sshll.u32 [#allocation9], 4
      %s3959 = int_to_ptr.vmem [resolvable:$true] %s3958
      %s3960 = sshll.u32 %s5, 4
      %s3961 = int_to_ptr.hbm [resolvable:$true] %s3960
      %3966 = dma.vmem_to_hbm [thread:$0]  %s3959, 4096, %s3961, [#allocation5], 256, 256, 16
    $region37: #{tpu_custom_call.1} parent=1 // pred_fallthru
      _
    // Predicated region
    $region38: #{tpu_custom_call.1} parent=1 // pred_check
      _
    $region39: #{tpu_custom_call.1} parent=1 // pred_check_branch
      %3968 = sbr.rel (0) target = $region41
    $region40: #{tpu_custom_call.1} parent=1 // pred_region
      %3970 = dma.done [#allocation5], 4096
    $region41: #{tpu_custom_call.1} parent=1 // pred_fallthru
      _
    %3971 = vsyncpa [#allocation4], 1
    %3972 = vsyncpa [#allocation7], 1
    %3973 = vsyncpa [#allocation5], 1

</llo_original>
